<compile_context>
chip_gen: v7x
topology: tpu7x:2x2x1
jax: 0.10.0
libtpu: 0.0.40
codegen_flags: <defaults>
</compile_context>

<pallas_src>
import functools

import jax
import jax.numpy as jnp
from jax import lax
from jax.experimental import pallas as pl
from jax.experimental.pallas import tpu as pltpu

_EPS = 1e-5
_LANE = 128      # channel dims padded to multiples of 128 (lane-dense stores/MXU)
_SUB = 8         # sublane alignment for the depthwise halo scratch
_ROW_TILE = 256  # row tile for the row-tiled kernels (K3 / K4)


def _round_up(x, m):
    return ((x + m - 1) // m) * m


def _pad_last(a, target):
    pad = target - a.shape[-1]
    if pad == 0:
        return a
    return jnp.pad(a, [(0, 0)] * (a.ndim - 1) + [(0, pad)])


# ---------------------------------------------------------------------------
# Pallas kernels
# ---------------------------------------------------------------------------
def _expand_stats_kernel(x_ref, w1_ref, sum_ref, sq_ref):
    """Per-image partial BN statistics of the (bias-free) 1x1 expand conv."""
    y = jnp.dot(x_ref[...], w1_ref[...], preferred_element_type=jnp.float32)
    sum_ref[...] = jnp.sum(y, axis=0).reshape(1, 1, -1)
    sq_ref[...] = jnp.sum(y * y, axis=0).reshape(1, 1, -1)


def _expand_dw_kernel(x_ref, w1_ref, sc1_ref, sh1_ref, dw_ref,
                      d_ref, sum_ref, sq_ref, pad_ref, *, h, w, stride):
    """Fused: 1x1 expand (recomputed, never written to HBM) -> BN1 scale/shift +
    ReLU6 -> 3x3 depthwise at stride-1 resolution (9 shifted slices of a
    zero-padded VMEM plane) -> per-image partial BN2 stats over strided positions."""
    ctp = w1_ref.shape[1]
    y = jnp.dot(x_ref[...], w1_ref[...], preferred_element_type=jnp.float32)
    a = jnp.clip(y * sc1_ref[...] + sh1_ref[...], 0.0, 6.0)          # (h*w, ctp)

    # zero-padded spatial plane; interior stored at a sublane-aligned offset.
    pad_ref[...] = jnp.zeros_like(pad_ref)
    pad_ref[1:h + 1, _SUB:_SUB + w, :] = a.reshape(h, w, ctp)

    dw = dw_ref[...]                                                 # (9, ctp)
    acc = pad_ref[0:h, _SUB - 1:_SUB - 1 + w, :] * dw[0].reshape(1, 1, ctp)
    for kh in range(3):
        for kw in range(3):
            if kh == 0 and kw == 0:
                continue
            tap = pad_ref[kh:kh + h, _SUB - 1 + kw:_SUB - 1 + kw + w, :]
            acc = acc + tap * dw[kh * 3 + kw].reshape(1, 1, ctp)
    d_ref[0] = acc                                                   # full-res out

    if stride == 1:
        sum_ref[...] = jnp.sum(acc, axis=(0, 1)).reshape(1, 1, -1)
        sq_ref[...] = jnp.sum(acc * acc, axis=(0, 1)).reshape(1, 1, -1)
    else:
        # BN2 statistics must only cover the strided output positions.
        hi = lax.broadcasted_iota(jnp.int32, (h, w, 1), 0)
        wi = lax.broadcasted_iota(jnp.int32, (h, w, 1), 1)
        m = jnp.where((hi % stride == 0) & (wi % stride == 0), 1.0, 0.0)
        sum_ref[...] = jnp.sum(acc * m, axis=(0, 1)).reshape(1, 1, -1)
        sq_ref[...] = jnp.sum(acc * acc * m, axis=(0, 1)).reshape(1, 1, -1)


def _project_kernel(d_ref, sc2_ref, sh2_ref, w3_ref, y_ref, sum_ref, sq_ref,
                    *, row_tile, m2, needs_mask):
    """BN2 scale/shift + ReLU6 apply, 1x1 project matmul, partial BN3 stats."""
    a = jnp.clip(d_ref[...] * sc2_ref[...] + sh2_ref[...], 0.0, 6.0)
    if needs_mask:  # zero the rows of a partial (out-of-range) last block
        rows = lax.broadcasted_iota(jnp.int32, (row_tile, 1), 0) \
            + pl.program_id(0) * row_tile
        a = jnp.where(rows < m2, a, 0.0)
    y = jnp.dot(a, w3_ref[...], preferred_element_type=jnp.float32)
    y_ref[...] = y
    sum_ref[...] = jnp.sum(y, axis=0).reshape(1, 1, -1)
    sq_ref[...] = jnp.sum(y * y, axis=0).reshape(1, 1, -1)


def _bn_out_kernel(y_ref, sc_ref, sh_ref, o_ref):
    o_ref[...] = y_ref[...] * sc_ref[...] + sh_ref[...]


def _bn_res_out_kernel(y_ref, sc_ref, sh_ref, r_ref, o_ref):
    o_ref[...] = y_ref[...] * sc_ref[...] + sh_ref[...] + r_ref[...]


# ---------------------------------------------------------------------------
# Glue: fold batch statistics into per-channel scale/shift (O(C) work)
# ---------------------------------------------------------------------------
def _scale_shift(sum_parts, sq_parts, gamma, beta, count):
    s = jnp.sum(sum_parts, axis=(0, 1))
    q = jnp.sum(sq_parts, axis=(0, 1))
    mean = s / count
    var = jnp.maximum(q / count - mean * mean, 0.0)
    scale = gamma * lax.rsqrt(var + _EPS)
    shift = beta - mean * scale
    return scale.reshape(1, -1), shift.reshape(1, -1)


# ---------------------------------------------------------------------------
# Parameter init (deterministic, PyTorch layouts)
# ---------------------------------------------------------------------------
def init_params(key, in_channels, out_channels, t):
    ct = in_channels * t
    ks = jax.random.split(key, 12)
    return dict(
        w1=0.2 * jax.random.normal(ks[0], (ct, in_channels, 1, 1), jnp.float32),
        b1=0.05 * jax.random.normal(ks[1], (ct,), jnp.float32),
        g1=1.0 + 0.1 * jax.random.normal(ks[2], (ct,), jnp.float32),
        be1=0.1 * jax.random.normal(ks[3], (ct,), jnp.float32),
        dw=0.2 * jax.random.normal(ks[4], (ct, 1, 3, 3), jnp.float32),
        b2=0.05 * jax.random.normal(ks[5], (ct,), jnp.float32),
        g2=1.0 + 0.1 * jax.random.normal(ks[6], (ct,), jnp.float32),
        be2=0.1 * jax.random.normal(ks[7], (ct,), jnp.float32),
        w3=0.2 * jax.random.normal(ks[8], (out_channels, ct, 1, 1), jnp.float32),
        b3=0.05 * jax.random.normal(ks[9], (out_channels,), jnp.float32),
        g3=1.0 + 0.1 * jax.random.normal(ks[10], (out_channels,), jnp.float32),
        be3=0.1 * jax.random.normal(ks[11], (out_channels,), jnp.float32),
    )


# ---------------------------------------------------------------------------
# Forward pass (Pallas)
# ---------------------------------------------------------------------------
@functools.partial(jax.jit, static_argnames=("stride", "in_channels", "out_channels"))
def linear_bottleneck_forward(x_nchw, params, stride, in_channels, out_channels):
    x = jnp.transpose(x_nchw, (0, 2, 3, 1)).astype(jnp.float32)      # NHWC
    N, H, W, Cin = x.shape
    Ct = params["w1"].shape[0]
    Cout = out_channels

    Cinp = _round_up(Cin, _LANE)
    Ctp = _round_up(Ct, _LANE)
    Coutp = _round_up(Cout, _LANE)

    HW = H * W
    M = N * HW
    Ho = (H - 1) // stride + 1
    Wo = (W - 1) // stride + 1
    M2 = N * Ho * Wo

    cparams = pltpu.CompilerParams(dimension_semantics=("parallel",),
                                   vmem_limit_bytes=48 * 1024 * 1024)

    # --- lane-dense (x128) operands; padded channels carry exact zeros --------
    x2 = _pad_last(x.reshape(M, Cin), Cinp)                          # (M, Cinp)
    w1 = jnp.pad(params["w1"][:, :, 0, 0].T,
                 ((0, Cinp - Cin), (0, Ctp - Ct)))                   # (Cinp, Ctp)
    dw9 = _pad_last(
        jnp.transpose(params["dw"][:, 0, :, :], (1, 2, 0)).reshape(9, Ct), Ctp)
    w3 = jnp.pad(params["w3"][:, :, 0, 0].T,
                 ((0, Ctp - Ct), (0, Coutp - Cout)))                 # (Ctp, Coutp)
    g1, be1 = _pad_last(params["g1"], Ctp), _pad_last(params["be1"], Ctp)
    g2, be2 = _pad_last(params["g2"], Ctp), _pad_last(params["be2"], Ctp)
    g3, be3 = _pad_last(params["g3"], Coutp), _pad_last(params["be3"], Coutp)
    # NOTE: conv biases b1/b2/b3 cancel exactly under training-mode BN -> unused.

    # --- stage 1: BN1 statistics of the 1x1 expand (per-image partials) -------
    sum1, sq1 = pl.pallas_call(
        _expand_stats_kernel,
        grid=(N,),
        in_specs=[pl.BlockSpec((HW, Cinp), lambda n: (n, 0)),
                  pl.BlockSpec((Cinp, Ctp), lambda n: (0, 0))],
        out_specs=[pl.BlockSpec((1, 1, Ctp), lambda n: (n, 0, 0)),
                   pl.BlockSpec((1, 1, Ctp), lambda n: (n, 0, 0))],
        out_shape=[jax.ShapeDtypeStruct((N, 1, Ctp), jnp.float32),
                   jax.ShapeDtypeStruct((N, 1, Ctp), jnp.float32)],
        compiler_params=cparams,
    )(x2, w1)
    sc1, sh1 = _scale_shift(sum1, sq1, g1, be1, float(M))

    # --- stage 2: fused expand + BN1 + ReLU6 + 3x3 depthwise + BN2 partials ---
    d_full, sum2, sq2 = pl.pallas_call(
        functools.partial(_expand_dw_kernel, h=H, w=W, stride=stride),
        grid=(N,),
        in_specs=[pl.BlockSpec((HW, Cinp), lambda n: (n, 0)),
                  pl.BlockSpec((Cinp, Ctp), lambda n: (0, 0)),
                  pl.BlockSpec((1, Ctp), lambda n: (0, 0)),
                  pl.BlockSpec((1, Ctp), lambda n: (0, 0)),
                  pl.BlockSpec((9, Ctp), lambda n: (0, 0))],
        out_specs=[pl.BlockSpec((1, H, W, Ctp), lambda n: (n, 0, 0, 0)),
                   pl.BlockSpec((1, 1, Ctp), lambda n: (n, 0, 0)),
                   pl.BlockSpec((1, 1, Ctp), lambda n: (n, 0, 0))],
        out_shape=[jax.ShapeDtypeStruct((N, H, W, Ctp), jnp.float32),
                   jax.ShapeDtypeStruct((N, 1, Ctp), jnp.float32),
                   jax.ShapeDtypeStruct((N, 1, Ctp), jnp.float32)],
        scratch_shapes=[pltpu.VMEM((H + 2, W + 2 * _SUB, Ctp), jnp.float32)],
        compiler_params=cparams,
    )(x2, w1, sc1, sh1, dw9)
    sc2, sh2 = _scale_shift(sum2, sq2, g2, be2, float(M2))

    if stride == 1:
        d2 = d_full.reshape(M2, Ctp)
    else:
        # TODO(synk): move this subsample into the kernel (strided pl.ds loads)
        # so stride>1 blocks do not write the full-resolution depthwise output.
        d2 = d_full[:, ::stride, ::stride, :].reshape(M2, Ctp)

    # --- stage 3: BN2 apply + ReLU6 + 1x1 project + BN3 partials --------------
    row_tile = min(_ROW_TILE, _round_up(M2, _SUB))
    gc = pl.cdiv(M2, row_tile)
    needs_mask = (gc * row_tile != M2)
    y3, sum3, sq3 = pl.pallas_call(
        functools.partial(_project_kernel, row_tile=row_tile, m2=M2,
                          needs_mask=needs_mask),
        grid=(gc,),
        in_specs=[pl.BlockSpec((row_tile, Ctp), lambda i: (i, 0)),
                  pl.BlockSpec((1, Ctp), lambda i: (0, 0)),
                  pl.BlockSpec((1, Ctp), lambda i: (0, 0)),
                  pl.BlockSpec((Ctp, Coutp), lambda i: (0, 0))],
        out_specs=[pl.BlockSpec((row_tile, Coutp), lambda i: (i, 0)),
                   pl.BlockSpec((1, 1, Coutp), lambda i: (i, 0, 0)),
                   pl.BlockSpec((1, 1, Coutp), lambda i: (i, 0, 0))],
        out_shape=[jax.ShapeDtypeStruct((M2, Coutp), jnp.float32),
                   jax.ShapeDtypeStruct((gc, 1, Coutp), jnp.float32),
                   jax.ShapeDtypeStruct((gc, 1, Coutp), jnp.float32)],
        compiler_params=cparams,
    )(d2, sc2, sh2, w3)
    sc3, sh3 = _scale_shift(sum3, sq3, g3, be3, float(M2))

    # --- stage 4: BN3 apply (+ residual; no zeros-residual DMA otherwise) -----
    row_spec = pl.BlockSpec((row_tile, Coutp), lambda i: (i, 0))
    ch_spec = pl.BlockSpec((1, Coutp), lambda i: (0, 0))
    if stride == 1 and in_channels == out_channels:
        out2 = pl.pallas_call(
            _bn_res_out_kernel,
            grid=(gc,),
            in_specs=[row_spec, ch_spec, ch_spec, row_spec],
            out_specs=row_spec,
            out_shape=jax.ShapeDtypeStruct((M2, Coutp), jnp.float32),
            compiler_params=cparams,
        )(y3, sc3, sh3, x2)               # Cinp == Coutp and M == M2 here
    else:
        out2 = pl.pallas_call(
            _bn_out_kernel,
            grid=(gc,),
            in_specs=[row_spec, ch_spec, ch_spec],
            out_specs=row_spec,
            out_shape=jax.ShapeDtypeStruct((M2, Coutp), jnp.float32),
            compiler_params=cparams,
        )(y3, sc3, sh3)

    out = out2[:, :Cout].reshape(N, Ho, Wo, Cout)
    return jnp.transpose(out, (0, 3, 1, 2))                          # back to NCHW
    # TODO(synk): optional bf16 activation/weight path for v6e/v7x (halves HBM
    # traffic); kept f32 here to preserve exact training-mode BN numerics.


# ---------------------------------------------------------------------------
# Pure-JAX reference (lax.conv) for correctness check
# ---------------------------------------------------------------------------
def _bn_train(y, gamma, beta):
    mean = jnp.mean(y, axis=(0, 2, 3), keepdims=True)
    var = jnp.mean((y - mean) ** 2, axis=(0, 2, 3), keepdims=True)
    return (y - mean) * lax.rsqrt(var + _EPS) * gamma.reshape(1, -1, 1, 1) \
        + beta.reshape(1, -1, 1, 1)


def reference_forward(x, params, stride, in_channels, out_channels):
    dn = ("NCHW", "OIHW", "NCHW")
    Ct = params["w1"].shape[0]
    y = lax.conv_general_dilated(x, params["w1"], (1, 1), "VALID",
                                 dimension_numbers=dn)
    y = y + params["b1"].reshape(1, -1, 1, 1)
    y = jnp.clip(_bn_train(y, params["g1"], params["be1"]), 0.0, 6.0)

    y = lax.conv_general_dilated(y, params["dw"], (stride, stride),
                                 ((1, 1), (1, 1)), dimension_numbers=dn,
                                 feature_group_count=Ct)
    y = y + params["b2"].reshape(1, -1, 1, 1)
    y = jnp.clip(_bn_train(y, params["g2"], params["be2"]), 0.0, 6.0)

    y = lax.conv_general_dilated(y, params["w3"], (1, 1), "VALID",
                                 dimension_numbers=dn)
    y = y + params["b3"].reshape(1, -1, 1, 1)
    y = _bn_train(y, params["g3"], params["be3"])
    if stride == 1 and in_channels == out_channels:
        y = y + x
    return y


# ---------------------------------------------------------------------------
if __name__ == "__main__":
    key = jax.random.PRNGKey(0)
    N, Cin, H, W = 2, 4, 16, 16
    t = 6

    # case 1: stride=1, in==out -> residual path exercised
    params = init_params(key, Cin, Cin, t)
    x = jax.random.normal(jax.random.fold_in(key, 99), (N, Cin, H, W), jnp.float32)
    y = jax.block_until_ready(linear_bottleneck_forward(x, params, 1, Cin, Cin))
    y_ref = reference_forward(x, params, 1, Cin, Cin)
    assert y.shape == (N, Cin, H, W)
    assert jnp.allclose(y, y_ref, atol=1e-3, rtol=1e-3), "mismatch vs reference (s=1)"

    # case 2: stride=2, out_channels != in_channels -> no residual
    Cout2 = 8
    params2 = init_params(jax.random.fold_in(key, 1), Cin, Cout2, t)
    y2 = jax.block_until_ready(linear_bottleneck_forward(x, params2, 2, Cin, Cout2))
    y2_ref = reference_forward(x, params2, 2, Cin, Cout2)
    assert y2.shape == (N, Cout2, H // 2, W // 2)
    assert jnp.allclose(y2, y2_ref, atol=1e-3, rtol=1e-3), "mismatch vs reference (s=2)"

    print("KERNEL_OK")
</pallas_src>

<mosaic_0001>
module attributes {stable_mosaic.version = 11 : i64} {
  func.func @_expand_stats_kernel(%arg0: i32, %arg1: memref<256x128xf32, #tpu.memory_space<vmem>>, %arg2: memref<128x128xf32, #tpu.memory_space<vmem>>, %arg3: memref<1x1x128xf32, #tpu.memory_space<vmem>>, %arg4: memref<1x1x128xf32, #tpu.memory_space<vmem>>) attributes {dimension_semantics = [#tpu.dimension_semantics<parallel>], iteration_bounds = array<i64: 2>, scalar_prefetch = 0 : i64, scratch_operands = 0 : i64, tpu.core_type = #tpu.core_type<tc>, window_params = [{transform_indices = @transform_0, window_bounds = array<i64: 256, 128>}, {pipeline_mode = #tpu.pipeline_mode<synchronous>, transform_indices = @transform_1, window_bounds = array<i64: 128, 128>}, {transform_indices = @transform_2, window_bounds = array<i64: 1, 1, 128>}, {transform_indices = @transform_3, window_bounds = array<i64: 1, 1, 128>}]} {
    %c0 = arith.constant 0 : index
    %c0_0 = arith.constant 0 : index
    %0 = vector.load %arg1[%c0, %c0_0] : memref<256x128xf32, #tpu.memory_space<vmem>>, vector<256x128xf32>
    %c0_1 = arith.constant 0 : index
    %c0_2 = arith.constant 0 : index
    %1 = vector.load %arg2[%c0_1, %c0_2] : memref<128x128xf32, #tpu.memory_space<vmem>>, vector<128x128xf32>
    %cst = arith.constant dense<0.000000e+00> : vector<256x128xf32>
    %2 = tpu.matmul %0, %1, %cst {dimension_numbers = #tpu.dot_dimension_numbers<[1], [0], [0], [1], [0, 0, 1, 1], [], []>} : vector<256x128xf32>, vector<128x128xf32>, vector<256x128xf32> -> vector<256x128xf32>
    %cst_3 = arith.constant dense<0.000000e+00> : vector<128xf32>
    %3 = vector.multi_reduction <add>, %2, %cst_3 [0] : vector<256x128xf32> to vector<128xf32>
    %4 = vector.shape_cast %3 : vector<128xf32> to vector<1x1x128xf32>
    %c0_4 = arith.constant 0 : index
    %c0_5 = arith.constant 0 : index
    %c0_6 = arith.constant 0 : index
    %5 = vector.load %arg3[%c0_4, %c0_5, %c0_6] : memref<1x1x128xf32, #tpu.memory_space<vmem>>, vector<1x1x128xf32>
    tpu.vector_store %arg3[%c0_4, %c0_5, %c0_6], %4 {strides = array<i32>} : memref<1x1x128xf32, #tpu.memory_space<vmem>>, vector<1x1x128xf32>,
    %6 = arith.mulf %2, %2 : vector<256x128xf32>
    %cst_7 = arith.constant dense<0.000000e+00> : vector<128xf32>
    %7 = vector.multi_reduction <add>, %6, %cst_7 [0] : vector<256x128xf32> to vector<128xf32>
    %8 = vector.shape_cast %7 : vector<128xf32> to vector<1x1x128xf32>
    %c0_8 = arith.constant 0 : index
    %c0_9 = arith.constant 0 : index
    %c0_10 = arith.constant 0 : index
    %9 = vector.load %arg4[%c0_8, %c0_9, %c0_10] : memref<1x1x128xf32, #tpu.memory_space<vmem>>, vector<1x1x128xf32>
    tpu.vector_store %arg4[%c0_8, %c0_9, %c0_10], %8 {strides = array<i32>} : memref<1x1x128xf32, #tpu.memory_space<vmem>>, vector<1x1x128xf32>,
    return
  }
  func.func @transform_0(%arg0: i32) -> (i32, i32) {
    %c0_i32 = arith.constant 0 : i32
    %c0_i32_0 = arith.constant 0 : i32
    return %arg0, %c0_i32 : i32, i32
  }
  func.func @transform_1(%arg0: i32) -> (i32, i32) {
    %c0_i32 = arith.constant 0 : i32
    %c0_i32_0 = arith.constant 0 : i32
    %c0_i32_1 = arith.constant 0 : i32
    return %c0_i32, %c0_i32_0 : i32, i32
  }
  func.func @transform_2(%arg0: i32) -> (i32, i32, i32) {
    %c0_i32 = arith.constant 0 : i32
    %c0_i32_0 = arith.constant 0 : i32
    %c0_i32_1 = arith.constant 0 : i32
    return %arg0, %c0_i32, %c0_i32_0 : i32, i32, i32
  }
  func.func @transform_3(%arg0: i32) -> (i32, i32, i32) {
    %c0_i32 = arith.constant 0 : i32
    %c0_i32_0 = arith.constant 0 : i32
    %c0_i32_1 = arith.constant 0 : i32
    return %arg0, %c0_i32, %c0_i32_0 : i32, i32, i32
  }
}

module attributes {stable_mosaic.version = 11 : i64} {
  func.func @_expand_dw_kernel(%arg0: i32, %arg1: memref<256x128xf32, #tpu.memory_space<vmem>>, %arg2: memref<128x128xf32, #tpu.memory_space<vmem>>, %arg3: memref<1x128xf32, #tpu.memory_space<vmem>>, %arg4: memref<1x128xf32, #tpu.memory_space<vmem>>, %arg5: memref<9x128xf32, #tpu.memory_space<vmem>>, %arg6: memref<1x16x16x128xf32, #tpu.memory_space<vmem>>, %arg7: memref<1x1x128xf32, #tpu.memory_space<vmem>>, %arg8: memref<1x1x128xf32, #tpu.memory_space<vmem>>, %arg9: memref<18x32x128xf32, #tpu.memory_space<vmem>>) attributes {dimension_semantics = [#tpu.dimension_semantics<parallel>], iteration_bounds = array<i64: 2>, scalar_prefetch = 0 : i64, scratch_operands = 1 : i64, tpu.core_type = #tpu.core_type<tc>, window_params = [{transform_indices = @transform_0, window_bounds = array<i64: 256, 128>}, {pipeline_mode = #tpu.pipeline_mode<synchronous>, transform_indices = @transform_1, window_bounds = array<i64: 128, 128>}, {pipeline_mode = #tpu.pipeline_mode<synchronous>, transform_indices = @transform_2, window_bounds = array<i64: 1, 128>}, {pipeline_mode = #tpu.pipeline_mode<synchronous>, transform_indices = @transform_3, window_bounds = array<i64: 1, 128>}, {pipeline_mode = #tpu.pipeline_mode<synchronous>, transform_indices = @transform_4, window_bounds = array<i64: 9, 128>}, {transform_indices = @transform_5, window_bounds = array<i64: 1, 16, 16, 128>}, {transform_indices = @transform_6, window_bounds = array<i64: 1, 1, 128>}, {transform_indices = @transform_7, window_bounds = array<i64: 1, 1, 128>}]} {
    %c0 = arith.constant 0 : index
    %c0_0 = arith.constant 0 : index
    %0 = vector.load %arg1[%c0, %c0_0] : memref<256x128xf32, #tpu.memory_space<vmem>>, vector<256x128xf32>
    %c0_1 = arith.constant 0 : index
    %c0_2 = arith.constant 0 : index
    %1 = vector.load %arg2[%c0_1, %c0_2] : memref<128x128xf32, #tpu.memory_space<vmem>>, vector<128x128xf32>
    %cst = arith.constant dense<0.000000e+00> : vector<256x128xf32>
    %2 = tpu.matmul %0, %1, %cst {dimension_numbers = #tpu.dot_dimension_numbers<[1], [0], [0], [1], [0, 0, 1, 1], [], []>} : vector<256x128xf32>, vector<128x128xf32>, vector<256x128xf32> -> vector<256x128xf32>
    %c0_3 = arith.constant 0 : index
    %c0_4 = arith.constant 0 : index
    %3 = vector.load %arg3[%c0_3, %c0_4] : memref<1x128xf32, #tpu.memory_space<vmem>>, vector<1x128xf32>
    %4 = vector.broadcast %3 : vector<1x128xf32> to vector<256x128xf32>
    %5 = arith.mulf %2, %4 : vector<256x128xf32>
    %c0_5 = arith.constant 0 : index
    %c0_6 = arith.constant 0 : index
    %6 = vector.load %arg4[%c0_5, %c0_6] : memref<1x128xf32, #tpu.memory_space<vmem>>, vector<1x128xf32>
    %7 = vector.broadcast %6 : vector<1x128xf32> to vector<256x128xf32>
    %8 = arith.addf %5, %7 : vector<256x128xf32>
    %cst_7 = arith.constant 0.000000e+00 : f32
    %cst_8 = arith.constant 6.000000e+00 : f32
    %9 = vector.broadcast %cst_7 : f32 to vector<256x128xf32>
    %10 = arith.maximumf %9, %8 : vector<256x128xf32>
    %11 = vector.broadcast %cst_8 : f32 to vector<256x128xf32>
    %12 = arith.minimumf %11, %10 : vector<256x128xf32>
    %cst_9 = arith.constant 0.000000e+00 : f32
    %13 = vector.broadcast %cst_9 : f32 to vector<18x32x128xf32>
    %c0_10 = arith.constant 0 : index
    %c0_11 = arith.constant 0 : index
    %c0_12 = arith.constant 0 : index
    %14 = vector.load %arg9[%c0_10, %c0_11, %c0_12] : memref<18x32x128xf32, #tpu.memory_space<vmem>>, vector<18x32x128xf32>
    tpu.vector_store %arg9[%c0_10, %c0_11, %c0_12], %13 {strides = array<i32>} : memref<18x32x128xf32, #tpu.memory_space<vmem>>, vector<18x32x128xf32>,
    %15 = vector.shape_cast %12 : vector<256x128xf32> to vector<16x16x128xf32>
    %c1 = arith.constant 1 : index
    %c8 = arith.constant 8 : index
    %c0_13 = arith.constant 0 : index
    %16 = vector.load %arg9[%c1, %c8, %c0_13] : memref<18x32x128xf32, #tpu.memory_space<vmem>>, vector<16x16x128xf32>
    tpu.vector_store %arg9[%c1, %c8, %c0_13], %15 {strides = array<i32>} : memref<18x32x128xf32, #tpu.memory_space<vmem>>, vector<16x16x128xf32>,
    %c0_14 = arith.constant 0 : index
    %c0_15 = arith.constant 0 : index
    %17 = vector.load %arg5[%c0_14, %c0_15] : memref<9x128xf32, #tpu.memory_space<vmem>>, vector<9x128xf32>
    %c0_16 = arith.constant 0 : index
    %c7 = arith.constant 7 : index
    %c0_17 = arith.constant 0 : index
    %18 = vector.load %arg9[%c0_16, %c7, %c0_17] : memref<18x32x128xf32, #tpu.memory_space<vmem>>, vector<16x16x128xf32>
    %19 = vector.extract_strided_slice %17 {offsets = [0, 0], sizes = [1, 128], strides = [1, 1]} : vector<9x128xf32> to vector<1x128xf32>
    %20 = vector.shape_cast %19 : vector<1x128xf32> to vector<128xf32>
    %21 = vector.shape_cast %20 : vector<128xf32> to vector<1x1x128xf32>
    %22 = vector.broadcast %21 : vector<1x1x128xf32> to vector<16x16x128xf32>
    %23 = arith.mulf %18, %22 : vector<16x16x128xf32>
    %c0_18 = arith.constant 0 : index
    %c8_19 = arith.constant 8 : index
    %c0_20 = arith.constant 0 : index
    %24 = vector.load %arg9[%c0_18, %c8_19, %c0_20] : memref<18x32x128xf32, #tpu.memory_space<vmem>>, vector<16x16x128xf32>
    %25 = vector.extract_strided_slice %17 {offsets = [1, 0], sizes = [1, 128], strides = [1, 1]} : vector<9x128xf32> to vector<1x128xf32>
    %26 = vector.shape_cast %25 : vector<1x128xf32> to vector<128xf32>
    %27 = vector.shape_cast %26 : vector<128xf32> to vector<1x1x128xf32>
    %28 = vector.broadcast %27 : vector<1x1x128xf32> to vector<16x16x128xf32>
    %29 = arith.mulf %24, %28 : vector<16x16x128xf32>
    %30 = arith.addf %23, %29 : vector<16x16x128xf32>
    %c0_21 = arith.constant 0 : index
    %c9 = arith.constant 9 : index
    %c0_22 = arith.constant 0 : index
    %31 = vector.load %arg9[%c0_21, %c9, %c0_22] : memref<18x32x128xf32, #tpu.memory_space<vmem>>, vector<16x16x128xf32>
    %32 = vector.extract_strided_slice %17 {offsets = [2, 0], sizes = [1, 128], strides = [1, 1]} : vector<9x128xf32> to vector<1x128xf32>
    %33 = vector.shape_cast %32 : vector<1x128xf32> to vector<128xf32>
    %34 = vector.shape_cast %33 : vector<128xf32> to vector<1x1x128xf32>
    %35 = vector.broadcast %34 : vector<1x1x128xf32> to vector<16x16x128xf32>
    %36 = arith.mulf %31, %35 : vector<16x16x128xf32>
    %37 = arith.addf %30, %36 : vector<16x16x128xf32>
    %c1_23 = arith.constant 1 : index
    %c7_24 = arith.constant 7 : index
    %c0_25 = arith.constant 0 : index
    %38 = vector.load %arg9[%c1_23, %c7_24, %c0_25] : memref<18x32x128xf32, #tpu.memory_space<vmem>>, vector<16x16x128xf32>
    %39 = vector.extract_strided_slice %17 {offsets = [3, 0], sizes = [1, 128], strides = [1, 1]} : vector<9x128xf32> to vector<1x128xf32>
    %40 = vector.shape_cast %39 : vector<1x128xf32> to vector<128xf32>
    %41 = vector.shape_cast %40 : vector<128xf32> to vector<1x1x128xf32>
    %42 = vector.broadcast %41 : vector<1x1x128xf32> to vector<16x16x128xf32>
    %43 = arith.mulf %38, %42 : vector<16x16x128xf32>
    %44 = arith.addf %37, %43 : vector<16x16x128xf32>
    %c1_26 = arith.constant 1 : index
    %c8_27 = arith.constant 8 : index
    %c0_28 = arith.constant 0 : index
    %45 = vector.load %arg9[%c1_26, %c8_27, %c0_28] : memref<18x32x128xf32, #tpu.memory_space<vmem>>, vector<16x16x128xf32>
    %46 = vector.extract_strided_slice %17 {offsets = [4, 0], sizes = [1, 128], strides = [1, 1]} : vector<9x128xf32> to vector<1x128xf32>
    %47 = vector.shape_cast %46 : vector<1x128xf32> to vector<128xf32>
    %48 = vector.shape_cast %47 : vector<128xf32> to vector<1x1x128xf32>
    %49 = vector.broadcast %48 : vector<1x1x128xf32> to vector<16x16x128xf32>
    %50 = arith.mulf %45, %49 : vector<16x16x128xf32>
    %51 = arith.addf %44, %50 : vector<16x16x128xf32>
    %c1_29 = arith.constant 1 : index
    %c9_30 = arith.constant 9 : index
    %c0_31 = arith.constant 0 : index
    %52 = vector.load %arg9[%c1_29, %c9_30, %c0_31] : memref<18x32x128xf32, #tpu.memory_space<vmem>>, vector<16x16x128xf32>
    %53 = vector.extract_strided_slice %17 {offsets = [5, 0], sizes = [1, 128], strides = [1, 1]} : vector<9x128xf32> to vector<1x128xf32>
    %54 = vector.shape_cast %53 : vector<1x128xf32> to vector<128xf32>
    %55 = vector.shape_cast %54 : vector<128xf32> to vector<1x1x128xf32>
    %56 = vector.broadcast %55 : vector<1x1x128xf32> to vector<16x16x128xf32>
    %57 = arith.mulf %52, %56 : vector<16x16x128xf32>
    %58 = arith.addf %51, %57 : vector<16x16x128xf32>
    %c2 = arith.constant 2 : index
    %c7_32 = arith.constant 7 : index
    %c0_33 = arith.constant 0 : index
    %59 = vector.load %arg9[%c2, %c7_32, %c0_33] : memref<18x32x128xf32, #tpu.memory_space<vmem>>, vector<16x16x128xf32>
    %60 = vector.extract_strided_slice %17 {offsets = [6, 0], sizes = [1, 128], strides = [1, 1]} : vector<9x128xf32> to vector<1x128xf32>
    %61 = vector.shape_cast %60 : vector<1x128xf32> to vector<128xf32>
    %62 = vector.shape_cast %61 : vector<128xf32> to vector<1x1x128xf32>
    %63 = vector.broadcast %62 : vector<1x1x128xf32> to vector<16x16x128xf32>
    %64 = arith.mulf %59, %63 : vector<16x16x128xf32>
    %65 = arith.addf %58, %64 : vector<16x16x128xf32>
    %c2_34 = arith.constant 2 : index
    %c8_35 = arith.constant 8 : index
    %c0_36 = arith.constant 0 : index
    %66 = vector.load %arg9[%c2_34, %c8_35, %c0_36] : memref<18x32x128xf32, #tpu.memory_space<vmem>>, vector<16x16x128xf32>
    %67 = vector.extract_strided_slice %17 {offsets = [7, 0], sizes = [1, 128], strides = [1, 1]} : vector<9x128xf32> to vector<1x128xf32>
    %68 = vector.shape_cast %67 : vector<1x128xf32> to vector<128xf32>
    %69 = vector.shape_cast %68 : vector<128xf32> to vector<1x1x128xf32>
    %70 = vector.broadcast %69 : vector<1x1x128xf32> to vector<16x16x128xf32>
    %71 = arith.mulf %66, %70 : vector<16x16x128xf32>
    %72 = arith.addf %65, %71 : vector<16x16x128xf32>
    %c2_37 = arith.constant 2 : index
    %c9_38 = arith.constant 9 : index
    %c0_39 = arith.constant 0 : index
    %73 = vector.load %arg9[%c2_37, %c9_38, %c0_39] : memref<18x32x128xf32, #tpu.memory_space<vmem>>, vector<16x16x128xf32>
    %74 = vector.extract_strided_slice %17 {offsets = [8, 0], sizes = [1, 128], strides = [1, 1]} : vector<9x128xf32> to vector<1x128xf32>
    %75 = vector.shape_cast %74 : vector<1x128xf32> to vector<128xf32>
    %76 = vector.shape_cast %75 : vector<128xf32> to vector<1x1x128xf32>
    %77 = vector.broadcast %76 : vector<1x1x128xf32> to vector<16x16x128xf32>
    %78 = arith.mulf %73, %77 : vector<16x16x128xf32>
    %79 = arith.addf %72, %78 : vector<16x16x128xf32>
    %c0_40 = arith.constant 0 : index
    %c0_41 = arith.constant 0 : index
    %c0_42 = arith.constant 0 : index
    %c0_43 = arith.constant 0 : index
    %80 = vector.load %arg6[%c0_40, %c0_41, %c0_42, %c0_43] : memref<1x16x16x128xf32, #tpu.memory_space<vmem>>, vector<1x16x16x128xf32>
    %81 = vector.shape_cast %80 : vector<1x16x16x128xf32> to vector<16x16x128xf32>
    %82 = vector.shape_cast %79 : vector<16x16x128xf32> to vector<1x16x16x128xf32>
    tpu.vector_store %arg6[%c0_40, %c0_41, %c0_42, %c0_43], %82 {strides = array<i32>} : memref<1x16x16x128xf32, #tpu.memory_space<vmem>>, vector<1x16x16x128xf32>,
    %cst_44 = arith.constant dense<0.000000e+00> : vector<128xf32>
    %83 = vector.multi_reduction <add>, %79, %cst_44 [0, 1] : vector<16x16x128xf32> to vector<128xf32>
    %84 = vector.shape_cast %83 : vector<128xf32> to vector<1x1x128xf32>
    %c0_45 = arith.constant 0 : index
    %c0_46 = arith.constant 0 : index
    %c0_47 = arith.constant 0 : index
    %85 = vector.load %arg7[%c0_45, %c0_46, %c0_47] : memref<1x1x128xf32, #tpu.memory_space<vmem>>, vector<1x1x128xf32>
    tpu.vector_store %arg7[%c0_45, %c0_46, %c0_47], %84 {strides = array<i32>} : memref<1x1x128xf32, #tpu.memory_space<vmem>>, vector<1x1x128xf32>,
    %86 = arith.mulf %79, %79 : vector<16x16x128xf32>
    %cst_48 = arith.constant dense<0.000000e+00> : vector<128xf32>
    %87 = vector.multi_reduction <add>, %86, %cst_48 [0, 1] : vector<16x16x128xf32> to vector<128xf32>
    %88 = vector.shape_cast %87 : vector<128xf32> to vector<1x1x128xf32>
    %c0_49 = arith.constant 0 : index
    %c0_50 = arith.constant 0 : index
    %c0_51 = arith.constant 0 : index
    %89 = vector.load %arg8[%c0_49, %c0_50, %c0_51] : memref<1x1x128xf32, #tpu.memory_space<vmem>>, vector<1x1x128xf32>
    tpu.vector_store %arg8[%c0_49, %c0_50, %c0_51], %88 {strides = array<i32>} : memref<1x1x128xf32, #tpu.memory_space<vmem>>, vector<1x1x128xf32>,
    return
  }
  func.func @transform_0(%arg0: i32) -> (i32, i32) {
    %c0_i32 = arith.constant 0 : i32
    %c0_i32_0 = arith.constant 0 : i32
    return %arg0, %c0_i32 : i32, i32
  }
  func.func @transform_1(%arg0: i32) -> (i32, i32) {
    %c0_i32 = arith.constant 0 : i32
    %c0_i32_0 = arith.constant 0 : i32
    %c0_i32_1 = arith.constant 0 : i32
    return %c0_i32, %c0_i32_0 : i32, i32
  }
  func.func @transform_2(%arg0: i32) -> (i32, i32) {
    %c0_i32 = arith.constant 0 : i32
    %c0_i32_0 = arith.constant 0 : i32
    %c0_i32_1 = arith.constant 0 : i32
    return %c0_i32, %c0_i32_0 : i32, i32
  }
  func.func @transform_3(%arg0: i32) -> (i32, i32) {
    %c0_i32 = arith.constant 0 : i32
    %c0_i32_0 = arith.constant 0 : i32
    %c0_i32_1 = arith.constant 0 : i32
    return %c0_i32, %c0_i32_0 : i32, i32
  }
  func.func @transform_4(%arg0: i32) -> (i32, i32) {
    %c0_i32 = arith.constant 0 : i32
    %c0_i32_0 = arith.constant 0 : i32
    %c0_i32_1 = arith.constant 0 : i32
    return %c0_i32, %c0_i32_0 : i32, i32
  }
  func.func @transform_5(%arg0: i32) -> (i32, i32, i32, i32) {
    %c0_i32 = arith.constant 0 : i32
    %c0_i32_0 = arith.constant 0 : i32
    %c0_i32_1 = arith.constant 0 : i32
    %c0_i32_2 = arith.constant 0 : i32
    return %arg0, %c0_i32, %c0_i32_0, %c0_i32_1 : i32, i32, i32, i32
  }
  func.func @transform_6(%arg0: i32) -> (i32, i32, i32) {
    %c0_i32 = arith.constant 0 : i32
    %c0_i32_0 = arith.constant 0 : i32
    %c0_i32_1 = arith.constant 0 : i32
    return %arg0, %c0_i32, %c0_i32_0 : i32, i32, i32
  }
  func.func @transform_7(%arg0: i32) -> (i32, i32, i32) {
    %c0_i32 = arith.constant 0 : i32
    %c0_i32_0 = arith.constant 0 : i32
    %c0_i32_1 = arith.constant 0 : i32
    return %arg0, %c0_i32, %c0_i32_0 : i32, i32, i32
  }
}

module attributes {stable_mosaic.version = 11 : i64} {
  func.func @_project_kernel(%arg0: i32, %arg1: memref<256x128xf32, #tpu.memory_space<vmem>>, %arg2: memref<1x128xf32, #tpu.memory_space<vmem>>, %arg3: memref<1x128xf32, #tpu.memory_space<vmem>>, %arg4: memref<128x128xf32, #tpu.memory_space<vmem>>, %arg5: memref<256x128xf32, #tpu.memory_space<vmem>>, %arg6: memref<1x1x128xf32, #tpu.memory_space<vmem>>, %arg7: memref<1x1x128xf32, #tpu.memory_space<vmem>>) attributes {dimension_semantics = [#tpu.dimension_semantics<parallel>], iteration_bounds = array<i64: 2>, scalar_prefetch = 0 : i64, scratch_operands = 0 : i64, tpu.core_type = #tpu.core_type<tc>, window_params = [{transform_indices = @transform_0, window_bounds = array<i64: 256, 128>}, {pipeline_mode = #tpu.pipeline_mode<synchronous>, transform_indices = @transform_1, window_bounds = array<i64: 1, 128>}, {pipeline_mode = #tpu.pipeline_mode<synchronous>, transform_indices = @transform_2, window_bounds = array<i64: 1, 128>}, {pipeline_mode = #tpu.pipeline_mode<synchronous>, transform_indices = @transform_3, window_bounds = array<i64: 128, 128>}, {transform_indices = @transform_4, window_bounds = array<i64: 256, 128>}, {transform_indices = @transform_5, window_bounds = array<i64: 1, 1, 128>}, {transform_indices = @transform_6, window_bounds = array<i64: 1, 1, 128>}]} {
    %c0 = arith.constant 0 : index
    %c0_0 = arith.constant 0 : index
    %0 = vector.load %arg1[%c0, %c0_0] : memref<256x128xf32, #tpu.memory_space<vmem>>, vector<256x128xf32>
    %c0_1 = arith.constant 0 : index
    %c0_2 = arith.constant 0 : index
    %1 = vector.load %arg2[%c0_1, %c0_2] : memref<1x128xf32, #tpu.memory_space<vmem>>, vector<1x128xf32>
    %2 = vector.broadcast %1 : vector<1x128xf32> to vector<256x128xf32>
    %3 = arith.mulf %0, %2 : vector<256x128xf32>
    %c0_3 = arith.constant 0 : index
    %c0_4 = arith.constant 0 : index
    %4 = vector.load %arg3[%c0_3, %c0_4] : memref<1x128xf32, #tpu.memory_space<vmem>>, vector<1x128xf32>
    %5 = vector.broadcast %4 : vector<1x128xf32> to vector<256x128xf32>
    %6 = arith.addf %3, %5 : vector<256x128xf32>
    %cst = arith.constant 0.000000e+00 : f32
    %cst_5 = arith.constant 6.000000e+00 : f32
    %7 = vector.broadcast %cst : f32 to vector<256x128xf32>
    %8 = arith.maximumf %7, %6 : vector<256x128xf32>
    %9 = vector.broadcast %cst_5 : f32 to vector<256x128xf32>
    %10 = arith.minimumf %9, %8 : vector<256x128xf32>
    %c0_6 = arith.constant 0 : index
    %c0_7 = arith.constant 0 : index
    %11 = vector.load %arg4[%c0_6, %c0_7] : memref<128x128xf32, #tpu.memory_space<vmem>>, vector<128x128xf32>
    %cst_8 = arith.constant dense<0.000000e+00> : vector<256x128xf32>
    %12 = tpu.matmul %10, %11, %cst_8 {dimension_numbers = #tpu.dot_dimension_numbers<[1], [0], [0], [1], [0, 0, 1, 1], [], []>} : vector<256x128xf32>, vector<128x128xf32>, vector<256x128xf32> -> vector<256x128xf32>
    %c0_9 = arith.constant 0 : index
    %c0_10 = arith.constant 0 : index
    %13 = vector.load %arg5[%c0_9, %c0_10] : memref<256x128xf32, #tpu.memory_space<vmem>>, vector<256x128xf32>
    tpu.vector_store %arg5[%c0_9, %c0_10], %12 {strides = array<i32>} : memref<256x128xf32, #tpu.memory_space<vmem>>, vector<256x128xf32>,
    %cst_11 = arith.constant dense<0.000000e+00> : vector<128xf32>
    %14 = vector.multi_reduction <add>, %12, %cst_11 [0] : vector<256x128xf32> to vector<128xf32>
    %15 = vector.shape_cast %14 : vector<128xf32> to vector<1x1x128xf32>
    %c0_12 = arith.constant 0 : index
    %c0_13 = arith.constant 0 : index
    %c0_14 = arith.constant 0 : index
    %16 = vector.load %arg6[%c0_12, %c0_13, %c0_14] : memref<1x1x128xf32, #tpu.memory_space<vmem>>, vector<1x1x128xf32>
    tpu.vector_store %arg6[%c0_12, %c0_13, %c0_14], %15 {strides = array<i32>} : memref<1x1x128xf32, #tpu.memory_space<vmem>>, vector<1x1x128xf32>,
    %17 = arith.mulf %12, %12 : vector<256x128xf32>
    %cst_15 = arith.constant dense<0.000000e+00> : vector<128xf32>
    %18 = vector.multi_reduction <add>, %17, %cst_15 [0] : vector<256x128xf32> to vector<128xf32>
    %19 = vector.shape_cast %18 : vector<128xf32> to vector<1x1x128xf32>
    %c0_16 = arith.constant 0 : index
    %c0_17 = arith.constant 0 : index
    %c0_18 = arith.constant 0 : index
    %20 = vector.load %arg7[%c0_16, %c0_17, %c0_18] : memref<1x1x128xf32, #tpu.memory_space<vmem>>, vector<1x1x128xf32>
    tpu.vector_store %arg7[%c0_16, %c0_17, %c0_18], %19 {strides = array<i32>} : memref<1x1x128xf32, #tpu.memory_space<vmem>>, vector<1x1x128xf32>,
    return
  }
  func.func @transform_0(%arg0: i32) -> (i32, i32) {
    %c0_i32 = arith.constant 0 : i32
    %c0_i32_0 = arith.constant 0 : i32
    return %arg0, %c0_i32 : i32, i32
  }
  func.func @transform_1(%arg0: i32) -> (i32, i32) {
    %c0_i32 = arith.constant 0 : i32
    %c0_i32_0 = arith.constant 0 : i32
    %c0_i32_1 = arith.constant 0 : i32
    return %c0_i32, %c0_i32_0 : i32, i32
  }
  func.func @transform_2(%arg0: i32) -> (i32, i32) {
    %c0_i32 = arith.constant 0 : i32
    %c0_i32_0 = arith.constant 0 : i32
    %c0_i32_1 = arith.constant 0 : i32
    return %c0_i32, %c0_i32_0 : i32, i32
  }
  func.func @transform_3(%arg0: i32) -> (i32, i32) {
    %c0_i32 = arith.constant 0 : i32
    %c0_i32_0 = arith.constant 0 : i32
    %c0_i32_1 = arith.constant 0 : i32
    return %c0_i32, %c0_i32_0 : i32, i32
  }
  func.func @transform_4(%arg0: i32) -> (i32, i32) {
    %c0_i32 = arith.constant 0 : i32
    %c0_i32_0 = arith.constant 0 : i32
    return %arg0, %c0_i32 : i32, i32
  }
  func.func @transform_5(%arg0: i32) -> (i32, i32, i32) {
    %c0_i32 = arith.constant 0 : i32
    %c0_i32_0 = arith.constant 0 : i32
    %c0_i32_1 = arith.constant 0 : i32
    return %arg0, %c0_i32, %c0_i32_0 : i32, i32, i32
  }
  func.func @transform_6(%arg0: i32) -> (i32, i32, i32) {
    %c0_i32 = arith.constant 0 : i32
    %c0_i32_0 = arith.constant 0 : i32
    %c0_i32_1 = arith.constant 0 : i32
    return %arg0, %c0_i32, %c0_i32_0 : i32, i32, i32
  }
}

module attributes {stable_mosaic.version = 11 : i64} {
  func.func @_bn_res_out_kernel(%arg0: i32, %arg1: memref<256x128xf32, #tpu.memory_space<vmem>>, %arg2: memref<1x128xf32, #tpu.memory_space<vmem>>, %arg3: memref<1x128xf32, #tpu.memory_space<vmem>>, %arg4: memref<256x128xf32, #tpu.memory_space<vmem>>, %arg5: memref<256x128xf32, #tpu.memory_space<vmem>>) attributes {dimension_semantics = [#tpu.dimension_semantics<parallel>], iteration_bounds = array<i64: 2>, scalar_prefetch = 0 : i64, scratch_operands = 0 : i64, tpu.core_type = #tpu.core_type<tc>, window_params = [{transform_indices = @transform_0, window_bounds = array<i64: 256, 128>}, {pipeline_mode = #tpu.pipeline_mode<synchronous>, transform_indices = @transform_1, window_bounds = array<i64: 1, 128>}, {pipeline_mode = #tpu.pipeline_mode<synchronous>, transform_indices = @transform_2, window_bounds = array<i64: 1, 128>}, {transform_indices = @transform_3, window_bounds = array<i64: 256, 128>}, {transform_indices = @transform_4, window_bounds = array<i64: 256, 128>}]} {
    %c0 = arith.constant 0 : index
    %c0_0 = arith.constant 0 : index
    %0 = vector.load %arg1[%c0, %c0_0] : memref<256x128xf32, #tpu.memory_space<vmem>>, vector<256x128xf32>
    %c0_1 = arith.constant 0 : index
    %c0_2 = arith.constant 0 : index
    %1 = vector.load %arg2[%c0_1, %c0_2] : memref<1x128xf32, #tpu.memory_space<vmem>>, vector<1x128xf32>
    %2 = vector.broadcast %1 : vector<1x128xf32> to vector<256x128xf32>
    %3 = arith.mulf %0, %2 : vector<256x128xf32>
    %c0_3 = arith.constant 0 : index
    %c0_4 = arith.constant 0 : index
    %4 = vector.load %arg3[%c0_3, %c0_4] : memref<1x128xf32, #tpu.memory_space<vmem>>, vector<1x128xf32>
    %5 = vector.broadcast %4 : vector<1x128xf32> to vector<256x128xf32>
    %6 = arith.addf %3, %5 : vector<256x128xf32>
    %c0_5 = arith.constant 0 : index
    %c0_6 = arith.constant 0 : index
    %7 = vector.load %arg4[%c0_5, %c0_6] : memref<256x128xf32, #tpu.memory_space<vmem>>, vector<256x128xf32>
    %8 = arith.addf %6, %7 : vector<256x128xf32>
    %c0_7 = arith.constant 0 : index
    %c0_8 = arith.constant 0 : index
    %9 = vector.load %arg5[%c0_7, %c0_8] : memref<256x128xf32, #tpu.memory_space<vmem>>, vector<256x128xf32>
    tpu.vector_store %arg5[%c0_7, %c0_8], %8 {strides = array<i32>} : memref<256x128xf32, #tpu.memory_space<vmem>>, vector<256x128xf32>,
    return
  }
  func.func @transform_0(%arg0: i32) -> (i32, i32) {
    %c0_i32 = arith.constant 0 : i32
    %c0_i32_0 = arith.constant 0 : i32
    return %arg0, %c0_i32 : i32, i32
  }
  func.func @transform_1(%arg0: i32) -> (i32, i32) {
    %c0_i32 = arith.constant 0 : i32
    %c0_i32_0 = arith.constant 0 : i32
    %c0_i32_1 = arith.constant 0 : i32
    return %c0_i32, %c0_i32_0 : i32, i32
  }
  func.func @transform_2(%arg0: i32) -> (i32, i32) {
    %c0_i32 = arith.constant 0 : i32
    %c0_i32_0 = arith.constant 0 : i32
    %c0_i32_1 = arith.constant 0 : i32
    return %c0_i32, %c0_i32_0 : i32, i32
  }
  func.func @transform_3(%arg0: i32) -> (i32, i32) {
    %c0_i32 = arith.constant 0 : i32
    %c0_i32_0 = arith.constant 0 : i32
    return %arg0, %c0_i32 : i32, i32
  }
  func.func @transform_4(%arg0: i32) -> (i32, i32) {
    %c0_i32 = arith.constant 0 : i32
    %c0_i32_0 = arith.constant 0 : i32
    return %arg0, %c0_i32 : i32, i32
  }
}

</mosaic_0001>

<llo_original>
// kernel: linear_bottleneck_forward.4
$region0: #{linear_bottleneck_forward.4}
  #allocation0 [shape = 'u32[]', space=smem, size = 0x4, offset = 0x4, fixed_abs, tag = 'smem constant byte address 0x4 - core index']
  #allocation1 [shape = 'u32[144,128]{1,0:T(1,128)}', space=vmem, size = 0x12000, scoped, tag = 'internal scratch']
  %s0 = inlined_call_operand.vmem [shape: f32[512,128], index: 0, kind: input, shape index: {}]
  %s1 = inlined_call_operand.vmem [shape: f32[128,128], index: 1, kind: input, shape index: {}]
  %s2 = inlined_call_operand.vmem [shape: f32[2,1,128], index: 2, kind: output, shape index: {0}]
  %s3 = inlined_call_operand.vmem [shape: f32[2,1,128], index: 3, kind: output, shape index: {1}]
  %4 = xla_tuple %s2, %s3
  %s5 = sld [smem:[#allocation0]]
  $region49: #{linear_bottleneck_forward.4} parent=0
    _
  %s7 = ssub.s32 1, %s5
  %s8 = scalar_select 0, %s7, %s5
  loop: start=0, step=1, limit=4
  $region2: #{linear_bottleneck_forward.4} parent=0 // loop_pre_header
    _
  $region3: #{linear_bottleneck_forward.4} parent=0 // loop_header
    %s10 = sphi 0, %s14
    %p11 = scmp.ge.s32.totalorder %s10, 4
    %s20 = sphi 0, %s22
    %s23 = sphi 0, %s20
    %s24 = sphi 0, %s23
    %s40 = sphi 0, %s24
    %s44 = sphi 0, %s44
    %s46 = sphi 0, %s44
    %s47 = sphi 0, %s46
    %s61 = sphi 0, %s47
    %s67 = sphi 0, %s69
    %s70 = sphi 0, %s67
    %s71 = sphi 0, %s70
    %s87 = sphi 0, %s71
    %s93 = sphi 0, %s95
    %s96 = sphi 0, %s93
    %s97 = sphi 0, %s96
    %s113 = sphi 0, %s97
  $region4: #{linear_bottleneck_forward.4} parent=0 // loop_header_branch
    %13 = sbr.rel (%p11) target = $region8
  $region5: #{linear_bottleneck_forward.4} parent=0 // loop_body
    %s15 = ssub.s32 %s10, 1
    %s16 = ssub.s32 %s10, 2
    %s17 = sadd.s32 %s10, 1
    %s18 = ssub.s32 %s10, %s17
    %p19 = scmp.eq.s32.totalorder %s18, 0
    %s21 = sadd.s32 %s20, 1
    %s22 = scalar_select %p19, %s20, %s21
    %p25 = pneg %p19
    %p26 = scmp.eq.s32.totalorder %s10, 1
    %p27 = por %p25, %p26
    %p28 = scmp.ne.s32.totalorder %s20, %s23
    %p29 = scmp.eq.s32.totalorder %s10, 0
    %p30 = por %p28, %p29
    %p31 = scmp.ne.s32.totalorder %s20, %s23
    %p32 = scmp.eq.s32.totalorder %s15, 1
    %p33 = por %p31, %p32
    %p34 = scmp.ne.s32.totalorder %s23, %s24
    %p35 = scmp.eq.s32.totalorder %s15, 0
    %p36 = por %p34, %p35
    %p37 = scmp.ne.s32.totalorder %s23, %s24
    %p38 = scmp.eq.s32.totalorder %s16, 1
    %p39 = por %p37, %p38
    %p41 = scmp.ne.s32.totalorder %s24, %s40
    %p42 = scmp.eq.s32.totalorder %s16, 0
    %p43 = por %p41, %p42
    %s45 = sadd.s32 %s44, 1
    %p48 = scmp.eq.s32.totalorder %s10, 1
    %p49 = scmp.ne.s32.totalorder %s44, %s46
    %p50 = scmp.eq.s32.totalorder %s10, 0
    %p51 = por %p49, %p50
    %p52 = scmp.ne.s32.totalorder %s44, %s46
    %p53 = scmp.eq.s32.totalorder %s15, 1
    %p54 = por %p52, %p53
    %p55 = scmp.ne.s32.totalorder %s46, %s47
    %p56 = scmp.eq.s32.totalorder %s15, 0
    %p57 = por %p55, %p56
    %p58 = scmp.ne.s32.totalorder %s46, %s47
    %p59 = scmp.eq.s32.totalorder %s16, 1
    %p60 = por %p58, %p59
    %p62 = scmp.ne.s32.totalorder %s47, %s61
    %p63 = scmp.eq.s32.totalorder %s16, 0
    %p64 = por %p62, %p63
    %s65 = ssub.s32 %s10, %s17
    %p66 = scmp.eq.s32.totalorder %s65, 0
    %s68 = sadd.s32 %s67, 1
    %s69 = scalar_select %p66, %s67, %s68
    %p72 = pneg %p66
    %p73 = scmp.eq.s32.totalorder %s10, 1
    %p74 = por %p72, %p73
    %p75 = scmp.ne.s32.totalorder %s67, %s70
    %p76 = scmp.eq.s32.totalorder %s10, 0
    %p77 = por %p75, %p76
    %p78 = scmp.ne.s32.totalorder %s67, %s70
    %p79 = scmp.eq.s32.totalorder %s15, 1
    %p80 = por %p78, %p79
    %p81 = scmp.ne.s32.totalorder %s70, %s71
    %p82 = scmp.eq.s32.totalorder %s15, 0
    %p83 = por %p81, %p82
    %p84 = scmp.ne.s32.totalorder %s70, %s71
    %p85 = scmp.eq.s32.totalorder %s16, 1
    %p86 = por %p84, %p85
    %p88 = scmp.ne.s32.totalorder %s71, %s87
    %p89 = scmp.eq.s32.totalorder %s16, 0
    %p90 = por %p88, %p89
    %s91 = ssub.s32 %s10, %s17
    %p92 = scmp.eq.s32.totalorder %s91, 0
    %s94 = sadd.s32 %s93, 1
    %s95 = scalar_select %p92, %s93, %s94
    %p98 = pneg %p92
    %p99 = scmp.eq.s32.totalorder %s10, 1
    %p100 = por %p98, %p99
    %p101 = scmp.ne.s32.totalorder %s93, %s96
    %p102 = scmp.eq.s32.totalorder %s10, 0
    %p103 = por %p101, %p102
    %p104 = scmp.ne.s32.totalorder %s93, %s96
    %p105 = scmp.eq.s32.totalorder %s15, 1
    %p106 = por %p104, %p105
    %p107 = scmp.ne.s32.totalorder %s96, %s97
    %p108 = scmp.eq.s32.totalorder %s15, 0
    %p109 = por %p107, %p108
    %p110 = scmp.ne.s32.totalorder %s96, %s97
    %p111 = scmp.eq.s32.totalorder %s16, 1
    %p112 = por %p110, %p111
    %p114 = scmp.ne.s32.totalorder %s97, %s113
    %p115 = scmp.eq.s32.totalorder %s16, 0
    %p116 = por %p114, %p115
    %p117 = scmp.le.s32.totalorder 1, %s10
    %p118 = scmp.lt.s32.totalorder %s10, 3
    %p119 = pnand %p117, %p118
    %p120 = pneg %p119
    // Predicated region
    $region9: #{linear_bottleneck_forward.4} parent=5 // pred_check
      _
    $region10: #{linear_bottleneck_forward.4} parent=5 // pred_check_branch
      %122 = sbr.rel (%p119) target = $region12
    $region11: #{linear_bottleneck_forward.4} parent=5 // pred_region
      %s123 = ssub.s32 %s10, 1
      // Predicated region
      $region13: #{linear_bottleneck_forward.4} parent=11 // pred_check
        %p124 = pneg %p57
      $region14: #{linear_bottleneck_forward.4} parent=11 // pred_check_branch
        %126 = sbr.rel (%p124) target = $region16
      $region15: #{linear_bottleneck_forward.4} parent=11 // pred_region
        _
      $region16: #{linear_bottleneck_forward.4} parent=11 // pred_fallthru
        _
    $region12: #{linear_bottleneck_forward.4} parent=5 // pred_fallthru
      _
    %p127 = scmp.lt.s32.totalorder %s10, 2
    // Predicated region
    $region17: #{linear_bottleneck_forward.4} parent=5 // pred_check
      %p128 = pneg %p127
    $region18: #{linear_bottleneck_forward.4} parent=5 // pred_check_branch
      %130 = sbr.rel (%p128) target = $region20
    $region19: #{linear_bottleneck_forward.4} parent=5 // pred_region
      // Predicated region
      $region21: #{linear_bottleneck_forward.4} parent=19 // pred_check
        %p131 = pneg %p30
      $region22: #{linear_bottleneck_forward.4} parent=19 // pred_check_branch
        %133 = sbr.rel (%p131) target = $region24
      $region23: #{linear_bottleneck_forward.4} parent=19 // pred_region
        %s134 = smul.u32 32, %s10
        %p135 = scmp.lt.s32.totalorder %s134, 63
        %s136 = scalar_select %p135, %s134, 63
        %s137 = smul.addr %s136, 8
        %s138 = scalar_lea.vmem %s0, %s137
        %s139 = smul.u32 32, %s10
      $region24: #{linear_bottleneck_forward.4} parent=19 // pred_fallthru
        _
    $region20: #{linear_bottleneck_forward.4} parent=5 // pred_fallthru
      _
    %p140 = scmp.le.s32.totalorder 1, %s10
    %p141 = scmp.lt.s32.totalorder %s10, 3
    %p142 = pnand %p140, %p141
    %p143 = pneg %p142
    // Predicated region
    $region25: #{linear_bottleneck_forward.4} parent=5 // pred_check
      _
    $region26: #{linear_bottleneck_forward.4} parent=5 // pred_check_branch
      %145 = sbr.rel (%p142) target = $region28
    $region27: #{linear_bottleneck_forward.4} parent=5 // pred_region
      %s146 = ssub.s32 %s10, 1
      %s147 = smul.u32 32, %s15
      %p148 = scmp.lt.s32.totalorder %s147, 63
      %s149 = scalar_select %p148, %s147, 63
      %s150 = smul.addr %s149, 8
      %s151 = scalar_lea.vmem %s0, %s150
      %p152 = pneg %p36
      %p153 = pneg %p33
      %p154 = pneg %p57
      %p155 = pneg %p54
      %p156 = pneg %p83
      %p157 = pneg %p80
      %p158 = scmp.lt.s32.totalorder %s15, 1
      %s159 = scalar_select %p158, %s15, 1
      %s160 = scalar_lea.vmem %s2, %s159
      %p161 = pneg %p109
      %p162 = pneg %p106
      %p163 = scmp.lt.s32.totalorder %s15, 1
      %s164 = scalar_select %p163, %s15, 1
      %s165 = scalar_lea.vmem %s3, %s164
      %s166 = smul.u32 32, %s15
      %p167 = scmp.lt.s32.totalorder %s166, 63
      %s168 = scalar_select %p167, %s166, 63
      %s169 = smul.addr %s168, 8
      %s170 = scalar_lea.vmem %s0, %s169
      %s171 = smul.u32 32, %s15
      %p172 = scmp.lt.s32.totalorder %s15, 1
      %s173 = scalar_select %p172, %s15, 1
      %s174 = scalar_lea.vmem %s2, %s173
      %p175 = scmp.lt.s32.totalorder %s15, 1
      %s176 = scalar_select %p175, %s15, 1
      %s177 = scalar_lea.vmem %s3, %s176
      %v178 = vld [vmem:[%s170] sm:$0xff]
      %v179 = vld [vmem:[%s170 + $0x8] sm:$0xff]
      %v180 = vld [vmem:[%s170 + $0x10] sm:$0xff]
      %v181 = vld [vmem:[%s170 + $0x18] sm:$0xff]
      %v182 = vld [vmem:[%s170 + $0x20] sm:$0xff]
      %v183 = vld [vmem:[%s170 + $0x28] sm:$0xff]
      %v184 = vld [vmem:[%s170 + $0x30] sm:$0xff]
      %v185 = vld [vmem:[%s170 + $0x38] sm:$0xff]
      %v186 = vld [vmem:[%s170 + $0x40] sm:$0xff]
      %v187 = vld [vmem:[%s170 + $0x48] sm:$0xff]
      %v188 = vld [vmem:[%s170 + $0x50] sm:$0xff]
      %v189 = vld [vmem:[%s170 + $0x58] sm:$0xff]
      %v190 = vld [vmem:[%s170 + $0x60] sm:$0xff]
      %v191 = vld [vmem:[%s170 + $0x68] sm:$0xff]
      %v192 = vld [vmem:[%s170 + $0x70] sm:$0xff]
      %v193 = vld [vmem:[%s170 + $0x78] sm:$0xff]
      %v194 = vld [vmem:[%s170 + $0x80] sm:$0xff]
      %v195 = vld [vmem:[%s170 + $0x88] sm:$0xff]
      %v196 = vld [vmem:[%s170 + $0x90] sm:$0xff]
      %v197 = vld [vmem:[%s170 + $0x98] sm:$0xff]
      %v198 = vld [vmem:[%s170 + $0xa0] sm:$0xff]
      %v199 = vld [vmem:[%s170 + $0xa8] sm:$0xff]
      %v200 = vld [vmem:[%s170 + $0xb0] sm:$0xff]
      %v201 = vld [vmem:[%s170 + $0xb8] sm:$0xff]
      %v202 = vld [vmem:[%s170 + $0xc0] sm:$0xff]
      %v203 = vld [vmem:[%s170 + $0xc8] sm:$0xff]
      %v204 = vld [vmem:[%s170 + $0xd0] sm:$0xff]
      %v205 = vld [vmem:[%s170 + $0xd8] sm:$0xff]
      %v206 = vld [vmem:[%s170 + $0xe0] sm:$0xff]
      %v207 = vld [vmem:[%s170 + $0xe8] sm:$0xff]
      %v208 = vld [vmem:[%s170 + $0xf0] sm:$0xff]
      %v209 = vld [vmem:[%s170 + $0xf8] sm:$0xff]
      %v210 = vld [vmem:[%s1] sm:$0xff]
      %v211 = vld [vmem:[%s1 + $0x8] sm:$0xff]
      %v212 = vld [vmem:[%s1 + $0x10] sm:$0xff]
      %v213 = vld [vmem:[%s1 + $0x18] sm:$0xff]
      %v214 = vld [vmem:[%s1 + $0x20] sm:$0xff]
      %v215 = vld [vmem:[%s1 + $0x28] sm:$0xff]
      %v216 = vld [vmem:[%s1 + $0x30] sm:$0xff]
      %v217 = vld [vmem:[%s1 + $0x38] sm:$0xff]
      %v218 = vld [vmem:[%s1 + $0x40] sm:$0xff]
      %v219 = vld [vmem:[%s1 + $0x48] sm:$0xff]
      %v220 = vld [vmem:[%s1 + $0x50] sm:$0xff]
      %v221 = vld [vmem:[%s1 + $0x58] sm:$0xff]
      %v222 = vld [vmem:[%s1 + $0x60] sm:$0xff]
      %v223 = vld [vmem:[%s1 + $0x68] sm:$0xff]
      %v224 = vld [vmem:[%s1 + $0x70] sm:$0xff]
      %v225 = vld [vmem:[%s1 + $0x78] sm:$0xff]
      %226 = vmatprep.subr.mxu0 0.0
      %227 = vmatpush1.msra.mxu0 %v210
      %228 = vmatprep.subr.mxu0 0.0
      %229 = vmatpush1.msra.mxu0 %v211
      %230 = vmatprep.subr.mxu0 0.0
      %231 = vmatpush1.msra.mxu0 %v212
      %232 = vmatprep.subr.mxu0 0.0
      %233 = vmatpush1.msra.mxu0 %v213
      %234 = vmatprep.subr.mxu0 0.0
      %235 = vmatpush1.msra.mxu0 %v214
      %236 = vmatprep.subr.mxu0 0.0
      %237 = vmatpush1.msra.mxu0 %v215
      %238 = vmatprep.subr.mxu0 0.0
      %239 = vmatpush1.msra.mxu0 %v216
      %240 = vmatprep.subr.mxu0 0.0
      %241 = vmatpush1.msra.mxu0 %v217
      %242 = vmatprep.subr.mxu0 0.0
      %243 = vmatpush1.msra.mxu0 %v218
      %244 = vmatprep.subr.mxu0 0.0
      %245 = vmatpush1.msra.mxu0 %v219
      %246 = vmatprep.subr.mxu0 0.0
      %247 = vmatpush1.msra.mxu0 %v220
      %248 = vmatprep.subr.mxu0 0.0
      %249 = vmatpush1.msra.mxu0 %v221
      %250 = vmatprep.subr.mxu0 0.0
      %251 = vmatpush1.msra.mxu0 %v222
      %252 = vmatprep.subr.mxu0 0.0
      %253 = vmatpush1.msra.mxu0 %v223
      %254 = vmatprep.subr.mxu0 0.0
      %255 = vmatpush1.msra.mxu0 %v224
      %256 = vmatprep.subr.mxu0 0.0
      %257 = vmatpush1.msra.mxu0 %v225
      %258 = vmatprep.subr.mxu0 0.0
      %259 = vmatpush1.msra.mxu0 0.0
      %260 = vmatprep.subr.mxu0 0.0
      %261 = vmatpush1.msra.mxu0 0.0
      %262 = vmatprep.subr.mxu0 0.0
      %263 = vmatpush1.msra.mxu0 0.0
      %264 = vmatprep.subr.mxu0 0.0
      %265 = vmatpush1.msra.mxu0 0.0
      %266 = vmatprep.subr.mxu0 0.0
      %267 = vmatpush1.msra.mxu0 0.0
      %268 = vmatprep.subr.mxu0 0.0
      %269 = vmatpush1.msra.mxu0 0.0
      %270 = vmatprep.subr.mxu0 0.0
      %271 = vmatpush1.msra.mxu0 0.0
      %272 = vmatprep.subr.mxu0 0.0
      %273 = vmatpush1.msra.mxu0 0.0
      %274 = vmatprep.subr.mxu0 0.0
      %275 = vmatpush1.msra.mxu0 0.0
      %276 = vmatprep.subr.mxu0 0.0
      %277 = vmatpush1.msra.mxu0 0.0
      %278 = vmatprep.subr.mxu0 0.0
      %279 = vmatpush1.msra.mxu0 0.0
      %280 = vmatprep.subr.mxu0 0.0
      %281 = vmatpush1.msra.mxu0 0.0
      %282 = vmatprep.subr.mxu0 0.0
      %283 = vmatpush1.msra.mxu0 0.0
      %284 = vmatprep.subr.mxu0 0.0
      %285 = vmatpush1.msra.mxu0 0.0
      %286 = vmatprep.subr.mxu0 0.0
      %287 = vmatpush1.msra.mxu0 0.0
      %288 = vmatprep.subr.mxu0 0.0
      %289 = vmatpush1.msra.mxu0 0.0
      %290 = vmatprep.mubr.f32.mxu0 0.0
      %291 = vmatmul.mubr.f32.gmra.mrb[0].mxu0 %v178
      %v292 = vpop.f32.mrb[0].mxu0
      %v293 = vadd.f32 0.0, %v292
      %v294 = vpop.f32.mrb[0].mxu0
      %295 = vmatprep.mubr.f32.mxu0 0.0
      %296 = vmatmul.mubr.f32.gmra.mrb[0].mxu0 %v179
      %v297 = vpop.f32.mrb[0].mxu0
      %v298 = vadd.f32 0.0, %v297
      %v299 = vpop.f32.mrb[0].mxu0
      %300 = vmatprep.mubr.f32.mxu0 0.0
      %301 = vmatmul.mubr.f32.gmra.mrb[0].mxu0 %v180
      %v302 = vpop.f32.mrb[0].mxu0
      %v303 = vadd.f32 0.0, %v302
      %v304 = vpop.f32.mrb[0].mxu0
      %305 = vmatprep.mubr.f32.mxu0 0.0
      %306 = vmatmul.mubr.f32.gmra.mrb[0].mxu0 %v181
      %v307 = vpop.f32.mrb[0].mxu0
      %v308 = vadd.f32 0.0, %v307
      %v309 = vpop.f32.mrb[0].mxu0
      %310 = vmatprep.mubr.f32.mxu0 0.0
      %311 = vmatmul.mubr.f32.gmra.mrb[0].mxu0 %v182
      %v312 = vpop.f32.mrb[0].mxu0
      %v313 = vadd.f32 0.0, %v312
      %v314 = vpop.f32.mrb[0].mxu0
      %315 = vmatprep.mubr.f32.mxu0 0.0
      %316 = vmatmul.mubr.f32.gmra.mrb[0].mxu0 %v183
      %v317 = vpop.f32.mrb[0].mxu0
      %v318 = vadd.f32 0.0, %v317
      %v319 = vpop.f32.mrb[0].mxu0
      %320 = vmatprep.mubr.f32.mxu0 0.0
      %321 = vmatmul.mubr.f32.gmra.mrb[0].mxu0 %v184
      %v322 = vpop.f32.mrb[0].mxu0
      %v323 = vadd.f32 0.0, %v322
      %v324 = vpop.f32.mrb[0].mxu0
      %325 = vmatprep.mubr.f32.mxu0 0.0
      %326 = vmatmul.mubr.f32.gmra.mrb[0].mxu0 %v185
      %v327 = vpop.f32.mrb[0].mxu0
      %v328 = vadd.f32 0.0, %v327
      %v329 = vpop.f32.mrb[0].mxu0
      %330 = vmatprep.mubr.f32.mxu0 0.0
      %331 = vmatmul.mubr.f32.gmra.mrb[0].mxu0 %v186
      %v332 = vpop.f32.mrb[0].mxu0
      %v333 = vadd.f32 0.0, %v332
      %v334 = vpop.f32.mrb[0].mxu0
      %335 = vmatprep.mubr.f32.mxu0 0.0
      %336 = vmatmul.mubr.f32.gmra.mrb[0].mxu0 %v187
      %v337 = vpop.f32.mrb[0].mxu0
      %v338 = vadd.f32 0.0, %v337
      %v339 = vpop.f32.mrb[0].mxu0
      %340 = vmatprep.mubr.f32.mxu0 0.0
      %341 = vmatmul.mubr.f32.gmra.mrb[0].mxu0 %v188
      %v342 = vpop.f32.mrb[0].mxu0
      %v343 = vadd.f32 0.0, %v342
      %v344 = vpop.f32.mrb[0].mxu0
      %345 = vmatprep.mubr.f32.mxu0 0.0
      %346 = vmatmul.mubr.f32.gmra.mrb[0].mxu0 %v189
      %v347 = vpop.f32.mrb[0].mxu0
      %v348 = vadd.f32 0.0, %v347
      %v349 = vpop.f32.mrb[0].mxu0
      %350 = vmatprep.mubr.f32.mxu0 0.0
      %351 = vmatmul.mubr.f32.gmra.mrb[0].mxu0 %v190
      %v352 = vpop.f32.mrb[0].mxu0
      %v353 = vadd.f32 0.0, %v352
      %v354 = vpop.f32.mrb[0].mxu0
      %355 = vmatprep.mubr.f32.mxu0 0.0
      %356 = vmatmul.mubr.f32.gmra.mrb[0].mxu0 %v191
      %v357 = vpop.f32.mrb[0].mxu0
      %v358 = vadd.f32 0.0, %v357
      %v359 = vpop.f32.mrb[0].mxu0
      %360 = vmatprep.mubr.f32.mxu0 0.0
      %361 = vmatmul.mubr.f32.gmra.mrb[0].mxu0 %v192
      %v362 = vpop.f32.mrb[0].mxu0
      %v363 = vadd.f32 0.0, %v362
      %v364 = vpop.f32.mrb[0].mxu0
      %365 = vmatprep.mubr.f32.mxu0 0.0
      %366 = vmatmul.mubr.f32.gmra.mrb[0].mxu0 %v193
      %v367 = vpop.f32.mrb[0].mxu0
      %v368 = vadd.f32 0.0, %v367
      %v369 = vpop.f32.mrb[0].mxu0
      %370 = vmatprep.mubr.f32.mxu0 0.0
      %371 = vmatmul.mubr.f32.gmra.mrb[0].mxu0 %v194
      %v372 = vpop.f32.mrb[0].mxu0
      %v373 = vadd.f32 0.0, %v372
      %v374 = vpop.f32.mrb[0].mxu0
      %375 = vmatprep.mubr.f32.mxu0 0.0
      %376 = vmatmul.mubr.f32.gmra.mrb[0].mxu0 %v195
      %v377 = vpop.f32.mrb[0].mxu0
      %v378 = vadd.f32 0.0, %v377
      %v379 = vpop.f32.mrb[0].mxu0
      %380 = vmatprep.mubr.f32.mxu0 0.0
      %381 = vmatmul.mubr.f32.gmra.mrb[0].mxu0 %v196
      %v382 = vpop.f32.mrb[0].mxu0
      %v383 = vadd.f32 0.0, %v382
      %v384 = vpop.f32.mrb[0].mxu0
      %385 = vmatprep.mubr.f32.mxu0 0.0
      %386 = vmatmul.mubr.f32.gmra.mrb[0].mxu0 %v197
      %v387 = vpop.f32.mrb[0].mxu0
      %v388 = vadd.f32 0.0, %v387
      %v389 = vpop.f32.mrb[0].mxu0
      %390 = vmatprep.mubr.f32.mxu0 0.0
      %391 = vmatmul.mubr.f32.gmra.mrb[0].mxu0 %v198
      %v392 = vpop.f32.mrb[0].mxu0
      %v393 = vadd.f32 0.0, %v392
      %v394 = vpop.f32.mrb[0].mxu0
      %395 = vmatprep.mubr.f32.mxu0 0.0
      %396 = vmatmul.mubr.f32.gmra.mrb[0].mxu0 %v199
      %v397 = vpop.f32.mrb[0].mxu0
      %v398 = vadd.f32 0.0, %v397
      %v399 = vpop.f32.mrb[0].mxu0
      %400 = vmatprep.mubr.f32.mxu0 0.0
      %401 = vmatmul.mubr.f32.gmra.mrb[0].mxu0 %v200
      %v402 = vpop.f32.mrb[0].mxu0
      %v403 = vadd.f32 0.0, %v402
      %v404 = vpop.f32.mrb[0].mxu0
      %405 = vmatprep.mubr.f32.mxu0 0.0
      %406 = vmatmul.mubr.f32.gmra.mrb[0].mxu0 %v201
      %v407 = vpop.f32.mrb[0].mxu0
      %v408 = vadd.f32 0.0, %v407
      %v409 = vpop.f32.mrb[0].mxu0
      %410 = vmatprep.mubr.f32.mxu0 0.0
      %411 = vmatmul.mubr.f32.gmra.mrb[0].mxu0 %v202
      %v412 = vpop.f32.mrb[0].mxu0
      %v413 = vadd.f32 0.0, %v412
      %v414 = vpop.f32.mrb[0].mxu0
      %415 = vmatprep.mubr.f32.mxu0 0.0
      %416 = vmatmul.mubr.f32.gmra.mrb[0].mxu0 %v203
      %v417 = vpop.f32.mrb[0].mxu0
      %v418 = vadd.f32 0.0, %v417
      %v419 = vpop.f32.mrb[0].mxu0
      %420 = vmatprep.mubr.f32.mxu0 0.0
      %421 = vmatmul.mubr.f32.gmra.mrb[0].mxu0 %v204
      %v422 = vpop.f32.mrb[0].mxu0
      %v423 = vadd.f32 0.0, %v422
      %v424 = vpop.f32.mrb[0].mxu0
      %425 = vmatprep.mubr.f32.mxu0 0.0
      %426 = vmatmul.mubr.f32.gmra.mrb[0].mxu0 %v205
      %v427 = vpop.f32.mrb[0].mxu0
      %v428 = vadd.f32 0.0, %v427
      %v429 = vpop.f32.mrb[0].mxu0
      %430 = vmatprep.mubr.f32.mxu0 0.0
      %431 = vmatmul.mubr.f32.gmra.mrb[0].mxu0 %v206
      %v432 = vpop.f32.mrb[0].mxu0
      %v433 = vadd.f32 0.0, %v432
      %v434 = vpop.f32.mrb[0].mxu0
      %435 = vmatprep.mubr.f32.mxu0 0.0
      %436 = vmatmul.mubr.f32.gmra.mrb[0].mxu0 %v207
      %v437 = vpop.f32.mrb[0].mxu0
      %v438 = vadd.f32 0.0, %v437
      %v439 = vpop.f32.mrb[0].mxu0
      %440 = vmatprep.mubr.f32.mxu0 0.0
      %441 = vmatmul.mubr.f32.gmra.mrb[0].mxu0 %v208
      %v442 = vpop.f32.mrb[0].mxu0
      %v443 = vadd.f32 0.0, %v442
      %v444 = vpop.f32.mrb[0].mxu0
      %445 = vmatprep.mubr.f32.mxu0 0.0
      %446 = vmatmul.mubr.f32.gmra.mrb[0].mxu0 %v209
      %v447 = vpop.f32.mrb[0].mxu0
      %v448 = vadd.f32 0.0, %v447
      %v449 = vpop.f32.mrb[0].mxu0
      %450 = vdwg.mxu0
      %v451 = vadd.f32 %v293, %v298
      %v452 = vadd.f32 %v451, %v303
      %v453 = vadd.f32 %v452, %v308
      %v454 = vadd.f32 %v453, %v313
      %v455 = vadd.f32 %v454, %v318
      %v456 = vadd.f32 %v455, %v323
      %v457 = vadd.f32 %v456, %v328
      %v458 = vadd.f32 %v457, %v333
      %v459 = vadd.f32 %v458, %v338
      %v460 = vadd.f32 %v459, %v343
      %v461 = vadd.f32 %v460, %v348
      %v462 = vadd.f32 %v461, %v353
      %v463 = vadd.f32 %v462, %v358
      %v464 = vadd.f32 %v463, %v363
      %v465 = vadd.f32 %v464, %v368
      %v466 = vadd.f32 %v465, %v373
      %v467 = vadd.f32 %v466, %v378
      %v468 = vadd.f32 %v467, %v383
      %v469 = vadd.f32 %v468, %v388
      %v470 = vadd.f32 %v469, %v393
      %v471 = vadd.f32 %v470, %v398
      %v472 = vadd.f32 %v471, %v403
      %v473 = vadd.f32 %v472, %v408
      %v474 = vadd.f32 %v473, %v413
      %v475 = vadd.f32 %v474, %v418
      %v476 = vadd.f32 %v475, %v423
      %v477 = vadd.f32 %v476, %v428
      %v478 = vadd.f32 %v477, %v433
      %v479 = vadd.f32 %v478, %v438
      %v480 = vadd.f32 %v479, %v443
      %v481 = vadd.f32 %v480, %v448
      %v482 = vrot.slane %v481, 4
      %v483 = vadd.f32 %v481, %v482
      %v484 = vrot.slane %v483, 2
      %v485 = vadd.f32 %v483, %v484
      %v486 = vrot.slane %v485, 1
      %v487 = vadd.f32 %v485, %v486
      %488 = vst [vmem:[%s174] sm:$0x1] %v487
      %v489 = vmul.f32 %v293, %v293
      %v490 = vmul.f32 %v298, %v298
      %v491 = vmul.f32 %v303, %v303
      %v492 = vmul.f32 %v308, %v308
      %v493 = vmul.f32 %v313, %v313
      %v494 = vmul.f32 %v318, %v318
      %v495 = vmul.f32 %v323, %v323
      %v496 = vmul.f32 %v328, %v328
      %v497 = vmul.f32 %v333, %v333
      %v498 = vmul.f32 %v338, %v338
      %v499 = vmul.f32 %v343, %v343
      %v500 = vmul.f32 %v348, %v348
      %v501 = vmul.f32 %v353, %v353
      %v502 = vmul.f32 %v358, %v358
      %v503 = vmul.f32 %v363, %v363
      %v504 = vmul.f32 %v368, %v368
      %v505 = vmul.f32 %v373, %v373
      %v506 = vmul.f32 %v378, %v378
      %v507 = vmul.f32 %v383, %v383
      %v508 = vmul.f32 %v388, %v388
      %v509 = vmul.f32 %v393, %v393
      %v510 = vmul.f32 %v398, %v398
      %v511 = vmul.f32 %v403, %v403
      %v512 = vmul.f32 %v408, %v408
      %v513 = vmul.f32 %v413, %v413
      %v514 = vmul.f32 %v418, %v418
      %v515 = vmul.f32 %v423, %v423
      %v516 = vmul.f32 %v428, %v428
      %v517 = vmul.f32 %v433, %v433
      %v518 = vmul.f32 %v438, %v438
      %v519 = vmul.f32 %v443, %v443
      %v520 = vmul.f32 %v448, %v448
      %v521 = vadd.f32 %v489, %v490
      %v522 = vadd.f32 %v521, %v491
      %v523 = vadd.f32 %v522, %v492
      %v524 = vadd.f32 %v523, %v493
      %v525 = vadd.f32 %v524, %v494
      %v526 = vadd.f32 %v525, %v495
      %v527 = vadd.f32 %v526, %v496
      %v528 = vadd.f32 %v527, %v497
      %v529 = vadd.f32 %v528, %v498
      %v530 = vadd.f32 %v529, %v499
      %v531 = vadd.f32 %v530, %v500
      %v532 = vadd.f32 %v531, %v501
      %v533 = vadd.f32 %v532, %v502
      %v534 = vadd.f32 %v533, %v503
      %v535 = vadd.f32 %v534, %v504
      %v536 = vadd.f32 %v535, %v505
      %v537 = vadd.f32 %v536, %v506
      %v538 = vadd.f32 %v537, %v507
      %v539 = vadd.f32 %v538, %v508
      %v540 = vadd.f32 %v539, %v509
      %v541 = vadd.f32 %v540, %v510
      %v542 = vadd.f32 %v541, %v511
      %v543 = vadd.f32 %v542, %v512
      %v544 = vadd.f32 %v543, %v513
      %v545 = vadd.f32 %v544, %v514
      %v546 = vadd.f32 %v545, %v515
      %v547 = vadd.f32 %v546, %v516
      %v548 = vadd.f32 %v547, %v517
      %v549 = vadd.f32 %v548, %v518
      %v550 = vadd.f32 %v549, %v519
      %v551 = vadd.f32 %v550, %v520
      %v552 = vrot.slane %v551, 4
      %v553 = vadd.f32 %v551, %v552
      %v554 = vrot.slane %v553, 2
      %v555 = vadd.f32 %v553, %v554
      %v556 = vrot.slane %v555, 1
      %v557 = vadd.f32 %v555, %v556
      %558 = vst [vmem:[%s177] sm:$0x1] %v557
      %p559 = scmp.lt.s32.totalorder %s15, 1
      %s560 = scalar_select %p559, %s15, 1
      %s561 = scalar_lea.vmem %s2, %s560
      %p562 = scmp.lt.s32.totalorder %s15, 1
      %s563 = scalar_select %p562, %s15, 1
      %s564 = scalar_lea.vmem %s3, %s563
      // Predicated region
      $region29: #{linear_bottleneck_forward.4} parent=27 // pred_check
        %p565 = pneg %p80
      $region30: #{linear_bottleneck_forward.4} parent=27 // pred_check_branch
        %567 = sbr.rel (%p565) target = $region32
      $region31: #{linear_bottleneck_forward.4} parent=27 // pred_region
        _
      $region32: #{linear_bottleneck_forward.4} parent=27 // pred_fallthru
        _
      // Predicated region
      $region33: #{linear_bottleneck_forward.4} parent=27 // pred_check
        %p568 = pneg %p106
      $region34: #{linear_bottleneck_forward.4} parent=27 // pred_check_branch
        %570 = sbr.rel (%p568) target = $region36
      $region35: #{linear_bottleneck_forward.4} parent=27 // pred_region
        _
      $region36: #{linear_bottleneck_forward.4} parent=27 // pred_fallthru
        _
    $region28: #{linear_bottleneck_forward.4} parent=5 // pred_fallthru
      _
    %p571 = scmp.le.s32.totalorder 2, %s10
    // Predicated region
    $region37: #{linear_bottleneck_forward.4} parent=5 // pred_check
      %p572 = pneg %p571
    $region38: #{linear_bottleneck_forward.4} parent=5 // pred_check_branch
      %574 = sbr.rel (%p572) target = $region40
    $region39: #{linear_bottleneck_forward.4} parent=5 // pred_region
      %s575 = ssub.s32 %s10, 2
      // Predicated region
      $region41: #{linear_bottleneck_forward.4} parent=39 // pred_check
        %p576 = pneg %p86
      $region42: #{linear_bottleneck_forward.4} parent=39 // pred_check_branch
        %578 = sbr.rel (%p576) target = $region44
      $region43: #{linear_bottleneck_forward.4} parent=39 // pred_region
        %p579 = scmp.lt.s32.totalorder %s16, 1
        %s580 = scalar_select %p579, %s16, 1
        %s581 = scalar_lea.vmem %s2, %s580
      $region44: #{linear_bottleneck_forward.4} parent=39 // pred_fallthru
        _
      // Predicated region
      $region45: #{linear_bottleneck_forward.4} parent=39 // pred_check
        %p582 = pneg %p112
      $region46: #{linear_bottleneck_forward.4} parent=39 // pred_check_branch
        %584 = sbr.rel (%p582) target = $region48
      $region47: #{linear_bottleneck_forward.4} parent=39 // pred_region
        %p585 = scmp.lt.s32.totalorder %s16, 1
        %s586 = scalar_select %p585, %s16, 1
        %s587 = scalar_lea.vmem %s3, %s586
      $region48: #{linear_bottleneck_forward.4} parent=39 // pred_fallthru
        _
    $region40: #{linear_bottleneck_forward.4} parent=5 // pred_fallthru
      _
  $region6: #{linear_bottleneck_forward.4} parent=0 // loop_footer
    %s14 = sadd.s32 1, %s10
  $region7: #{linear_bottleneck_forward.4} parent=0 // loop_footer_branch
    %9 = sbr.rel target = $region3
  $region8: #{linear_bottleneck_forward.4} parent=0 // loop_exit
    _

// kernel: linear_bottleneck_forward.6
$region0: #{linear_bottleneck_forward.6}
  #allocation0 [shape = 'u32[]', space=smem, size = 0x4, offset = 0x4, fixed_abs, tag = 'smem constant byte address 0x4 - core index']
  #allocation1 [shape = 'u32[144,128]{1,0:T(1,128)}', space=vmem, size = 0x12000, scoped, tag = 'internal scratch']
  %s0 = inlined_call_operand.vmem [shape: f32[512,128], index: 0, kind: input, shape index: {}]
  %s1 = inlined_call_operand.vmem [shape: f32[1,128], index: 1, kind: input, shape index: {}]
  %s2 = inlined_call_operand.vmem [shape: f32[1,128], index: 2, kind: input, shape index: {}]
  %s3 = inlined_call_operand.vmem [shape: f32[128,128], index: 3, kind: input, shape index: {}]
  %s4 = inlined_call_operand.vmem [shape: f32[512,128], index: 4, kind: output, shape index: {0}]
  %s5 = inlined_call_operand.vmem [shape: f32[2,1,128], index: 5, kind: output, shape index: {1}]
  %s6 = inlined_call_operand.vmem [shape: f32[2,1,128], index: 6, kind: output, shape index: {2}]
  %7 = xla_tuple %s4, %s5, %s6
  %s8 = sld [smem:[#allocation0]]
  $region65: #{linear_bottleneck_forward.6} parent=0
    _
  %s10 = ssub.s32 1, %s8
  %s11 = scalar_select 0, %s10, %s8
  loop: start=0, step=1, limit=4
  $region2: #{linear_bottleneck_forward.6} parent=0 // loop_pre_header
    _
  $region3: #{linear_bottleneck_forward.6} parent=0 // loop_header
    %s13 = sphi 0, %s17
    %p14 = scmp.ge.s32.totalorder %s13, 4
    %s23 = sphi 0, %s25
    %s26 = sphi 0, %s23
    %s27 = sphi 0, %s26
    %s43 = sphi 0, %s27
    %s47 = sphi 0, %s47
    %s49 = sphi 0, %s47
    %s50 = sphi 0, %s49
    %s64 = sphi 0, %s50
    %s68 = sphi 0, %s68
    %s70 = sphi 0, %s68
    %s71 = sphi 0, %s70
    %s85 = sphi 0, %s71
    %s89 = sphi 0, %s89
    %s91 = sphi 0, %s89
    %s92 = sphi 0, %s91
    %s106 = sphi 0, %s92
    %s112 = sphi 0, %s114
    %s115 = sphi 0, %s112
    %s116 = sphi 0, %s115
    %s132 = sphi 0, %s116
    %s138 = sphi 0, %s140
    %s141 = sphi 0, %s138
    %s142 = sphi 0, %s141
    %s158 = sphi 0, %s142
    %s164 = sphi 0, %s166
    %s167 = sphi 0, %s164
    %s168 = sphi 0, %s167
    %s184 = sphi 0, %s168
  $region4: #{linear_bottleneck_forward.6} parent=0 // loop_header_branch
    %16 = sbr.rel (%p14) target = $region8
  $region5: #{linear_bottleneck_forward.6} parent=0 // loop_body
    %s18 = ssub.s32 %s13, 1
    %s19 = ssub.s32 %s13, 2
    %s20 = sadd.s32 %s13, 1
    %s21 = ssub.s32 %s13, %s20
    %p22 = scmp.eq.s32.totalorder %s21, 0
    %s24 = sadd.s32 %s23, 1
    %s25 = scalar_select %p22, %s23, %s24
    %p28 = pneg %p22
    %p29 = scmp.eq.s32.totalorder %s13, 1
    %p30 = por %p28, %p29
    %p31 = scmp.ne.s32.totalorder %s23, %s26
    %p32 = scmp.eq.s32.totalorder %s13, 0
    %p33 = por %p31, %p32
    %p34 = scmp.ne.s32.totalorder %s23, %s26
    %p35 = scmp.eq.s32.totalorder %s18, 1
    %p36 = por %p34, %p35
    %p37 = scmp.ne.s32.totalorder %s26, %s27
    %p38 = scmp.eq.s32.totalorder %s18, 0
    %p39 = por %p37, %p38
    %p40 = scmp.ne.s32.totalorder %s26, %s27
    %p41 = scmp.eq.s32.totalorder %s19, 1
    %p42 = por %p40, %p41
    %p44 = scmp.ne.s32.totalorder %s27, %s43
    %p45 = scmp.eq.s32.totalorder %s19, 0
    %p46 = por %p44, %p45
    %s48 = sadd.s32 %s47, 1
    %p51 = scmp.eq.s32.totalorder %s13, 1
    %p52 = scmp.ne.s32.totalorder %s47, %s49
    %p53 = scmp.eq.s32.totalorder %s13, 0
    %p54 = por %p52, %p53
    %p55 = scmp.ne.s32.totalorder %s47, %s49
    %p56 = scmp.eq.s32.totalorder %s18, 1
    %p57 = por %p55, %p56
    %p58 = scmp.ne.s32.totalorder %s49, %s50
    %p59 = scmp.eq.s32.totalorder %s18, 0
    %p60 = por %p58, %p59
    %p61 = scmp.ne.s32.totalorder %s49, %s50
    %p62 = scmp.eq.s32.totalorder %s19, 1
    %p63 = por %p61, %p62
    %p65 = scmp.ne.s32.totalorder %s50, %s64
    %p66 = scmp.eq.s32.totalorder %s19, 0
    %p67 = por %p65, %p66
    %s69 = sadd.s32 %s68, 1
    %p72 = scmp.eq.s32.totalorder %s13, 1
    %p73 = scmp.ne.s32.totalorder %s68, %s70
    %p74 = scmp.eq.s32.totalorder %s13, 0
    %p75 = por %p73, %p74
    %p76 = scmp.ne.s32.totalorder %s68, %s70
    %p77 = scmp.eq.s32.totalorder %s18, 1
    %p78 = por %p76, %p77
    %p79 = scmp.ne.s32.totalorder %s70, %s71
    %p80 = scmp.eq.s32.totalorder %s18, 0
    %p81 = por %p79, %p80
    %p82 = scmp.ne.s32.totalorder %s70, %s71
    %p83 = scmp.eq.s32.totalorder %s19, 1
    %p84 = por %p82, %p83
    %p86 = scmp.ne.s32.totalorder %s71, %s85
    %p87 = scmp.eq.s32.totalorder %s19, 0
    %p88 = por %p86, %p87
    %s90 = sadd.s32 %s89, 1
    %p93 = scmp.eq.s32.totalorder %s13, 1
    %p94 = scmp.ne.s32.totalorder %s89, %s91
    %p95 = scmp.eq.s32.totalorder %s13, 0
    %p96 = por %p94, %p95
    %p97 = scmp.ne.s32.totalorder %s89, %s91
    %p98 = scmp.eq.s32.totalorder %s18, 1
    %p99 = por %p97, %p98
    %p100 = scmp.ne.s32.totalorder %s91, %s92
    %p101 = scmp.eq.s32.totalorder %s18, 0
    %p102 = por %p100, %p101
    %p103 = scmp.ne.s32.totalorder %s91, %s92
    %p104 = scmp.eq.s32.totalorder %s19, 1
    %p105 = por %p103, %p104
    %p107 = scmp.ne.s32.totalorder %s92, %s106
    %p108 = scmp.eq.s32.totalorder %s19, 0
    %p109 = por %p107, %p108
    %s110 = ssub.s32 %s13, %s20
    %p111 = scmp.eq.s32.totalorder %s110, 0
    %s113 = sadd.s32 %s112, 1
    %s114 = scalar_select %p111, %s112, %s113
    %p117 = pneg %p111
    %p118 = scmp.eq.s32.totalorder %s13, 1
    %p119 = por %p117, %p118
    %p120 = scmp.ne.s32.totalorder %s112, %s115
    %p121 = scmp.eq.s32.totalorder %s13, 0
    %p122 = por %p120, %p121
    %p123 = scmp.ne.s32.totalorder %s112, %s115
    %p124 = scmp.eq.s32.totalorder %s18, 1
    %p125 = por %p123, %p124
    %p126 = scmp.ne.s32.totalorder %s115, %s116
    %p127 = scmp.eq.s32.totalorder %s18, 0
    %p128 = por %p126, %p127
    %p129 = scmp.ne.s32.totalorder %s115, %s116
    %p130 = scmp.eq.s32.totalorder %s19, 1
    %p131 = por %p129, %p130
    %p133 = scmp.ne.s32.totalorder %s116, %s132
    %p134 = scmp.eq.s32.totalorder %s19, 0
    %p135 = por %p133, %p134
    %s136 = ssub.s32 %s13, %s20
    %p137 = scmp.eq.s32.totalorder %s136, 0
    %s139 = sadd.s32 %s138, 1
    %s140 = scalar_select %p137, %s138, %s139
    %p143 = pneg %p137
    %p144 = scmp.eq.s32.totalorder %s13, 1
    %p145 = por %p143, %p144
    %p146 = scmp.ne.s32.totalorder %s138, %s141
    %p147 = scmp.eq.s32.totalorder %s13, 0
    %p148 = por %p146, %p147
    %p149 = scmp.ne.s32.totalorder %s138, %s141
    %p150 = scmp.eq.s32.totalorder %s18, 1
    %p151 = por %p149, %p150
    %p152 = scmp.ne.s32.totalorder %s141, %s142
    %p153 = scmp.eq.s32.totalorder %s18, 0
    %p154 = por %p152, %p153
    %p155 = scmp.ne.s32.totalorder %s141, %s142
    %p156 = scmp.eq.s32.totalorder %s19, 1
    %p157 = por %p155, %p156
    %p159 = scmp.ne.s32.totalorder %s142, %s158
    %p160 = scmp.eq.s32.totalorder %s19, 0
    %p161 = por %p159, %p160
    %s162 = ssub.s32 %s13, %s20
    %p163 = scmp.eq.s32.totalorder %s162, 0
    %s165 = sadd.s32 %s164, 1
    %s166 = scalar_select %p163, %s164, %s165
    %p169 = pneg %p163
    %p170 = scmp.eq.s32.totalorder %s13, 1
    %p171 = por %p169, %p170
    %p172 = scmp.ne.s32.totalorder %s164, %s167
    %p173 = scmp.eq.s32.totalorder %s13, 0
    %p174 = por %p172, %p173
    %p175 = scmp.ne.s32.totalorder %s164, %s167
    %p176 = scmp.eq.s32.totalorder %s18, 1
    %p177 = por %p175, %p176
    %p178 = scmp.ne.s32.totalorder %s167, %s168
    %p179 = scmp.eq.s32.totalorder %s18, 0
    %p180 = por %p178, %p179
    %p181 = scmp.ne.s32.totalorder %s167, %s168
    %p182 = scmp.eq.s32.totalorder %s19, 1
    %p183 = por %p181, %p182
    %p185 = scmp.ne.s32.totalorder %s168, %s184
    %p186 = scmp.eq.s32.totalorder %s19, 0
    %p187 = por %p185, %p186
    %p188 = scmp.le.s32.totalorder 1, %s13
    %p189 = scmp.lt.s32.totalorder %s13, 3
    %p190 = pnand %p188, %p189
    %p191 = pneg %p190
    // Predicated region
    $region9: #{linear_bottleneck_forward.6} parent=5 // pred_check
      _
    $region10: #{linear_bottleneck_forward.6} parent=5 // pred_check_branch
      %193 = sbr.rel (%p190) target = $region12
    $region11: #{linear_bottleneck_forward.6} parent=5 // pred_region
      %s194 = ssub.s32 %s13, 1
      // Predicated region
      $region13: #{linear_bottleneck_forward.6} parent=11 // pred_check
        %p195 = pneg %p60
      $region14: #{linear_bottleneck_forward.6} parent=11 // pred_check_branch
        %197 = sbr.rel (%p195) target = $region16
      $region15: #{linear_bottleneck_forward.6} parent=11 // pred_region
        _
      $region16: #{linear_bottleneck_forward.6} parent=11 // pred_fallthru
        _
      // Predicated region
      $region17: #{linear_bottleneck_forward.6} parent=11 // pred_check
        %p198 = pneg %p81
      $region18: #{linear_bottleneck_forward.6} parent=11 // pred_check_branch
        %200 = sbr.rel (%p198) target = $region20
      $region19: #{linear_bottleneck_forward.6} parent=11 // pred_region
        _
      $region20: #{linear_bottleneck_forward.6} parent=11 // pred_fallthru
        _
      // Predicated region
      $region21: #{linear_bottleneck_forward.6} parent=11 // pred_check
        %p201 = pneg %p102
      $region22: #{linear_bottleneck_forward.6} parent=11 // pred_check_branch
        %203 = sbr.rel (%p201) target = $region24
      $region23: #{linear_bottleneck_forward.6} parent=11 // pred_region
        _
      $region24: #{linear_bottleneck_forward.6} parent=11 // pred_fallthru
        _
    $region12: #{linear_bottleneck_forward.6} parent=5 // pred_fallthru
      _
    %p204 = scmp.lt.s32.totalorder %s13, 2
    // Predicated region
    $region25: #{linear_bottleneck_forward.6} parent=5 // pred_check
      %p205 = pneg %p204
    $region26: #{linear_bottleneck_forward.6} parent=5 // pred_check_branch
      %207 = sbr.rel (%p205) target = $region28
    $region27: #{linear_bottleneck_forward.6} parent=5 // pred_region
      // Predicated region
      $region29: #{linear_bottleneck_forward.6} parent=27 // pred_check
        %p208 = pneg %p33
      $region30: #{linear_bottleneck_forward.6} parent=27 // pred_check_branch
        %210 = sbr.rel (%p208) target = $region32
      $region31: #{linear_bottleneck_forward.6} parent=27 // pred_region
        %s211 = smul.u32 32, %s13
        %p212 = scmp.lt.s32.totalorder %s211, 63
        %s213 = scalar_select %p212, %s211, 63
        %s214 = smul.addr %s213, 8
        %s215 = scalar_lea.vmem %s0, %s214
        %s216 = smul.u32 32, %s13
      $region32: #{linear_bottleneck_forward.6} parent=27 // pred_fallthru
        _
    $region28: #{linear_bottleneck_forward.6} parent=5 // pred_fallthru
      _
    %p217 = scmp.le.s32.totalorder 1, %s13
    %p218 = scmp.lt.s32.totalorder %s13, 3
    %p219 = pnand %p217, %p218
    %p220 = pneg %p219
    // Predicated region
    $region33: #{linear_bottleneck_forward.6} parent=5 // pred_check
      _
    $region34: #{linear_bottleneck_forward.6} parent=5 // pred_check_branch
      %222 = sbr.rel (%p219) target = $region36
    $region35: #{linear_bottleneck_forward.6} parent=5 // pred_region
      %s223 = ssub.s32 %s13, 1
      %s224 = smul.u32 32, %s18
      %p225 = scmp.lt.s32.totalorder %s224, 63
      %s226 = scalar_select %p225, %s224, 63
      %s227 = smul.addr %s226, 8
      %s228 = scalar_lea.vmem %s0, %s227
      %p229 = pneg %p39
      %p230 = pneg %p36
      %p231 = pneg %p60
      %p232 = pneg %p57
      %p233 = pneg %p81
      %p234 = pneg %p78
      %p235 = pneg %p102
      %p236 = pneg %p99
      %p237 = pneg %p128
      %p238 = pneg %p125
      %s239 = smul.u32 32, %s18
      %p240 = scmp.lt.s32.totalorder %s239, 63
      %s241 = scalar_select %p240, %s239, 63
      %s242 = smul.addr %s241, 8
      %s243 = scalar_lea.vmem %s4, %s242
      %p244 = pneg %p154
      %p245 = pneg %p151
      %p246 = scmp.lt.s32.totalorder %s18, 1
      %s247 = scalar_select %p246, %s18, 1
      %s248 = scalar_lea.vmem %s5, %s247
      %p249 = pneg %p180
      %p250 = pneg %p177
      %p251 = scmp.lt.s32.totalorder %s18, 1
      %s252 = scalar_select %p251, %s18, 1
      %s253 = scalar_lea.vmem %s6, %s252
      %s254 = smul.u32 32, %s18
      %p255 = scmp.lt.s32.totalorder %s254, 63
      %s256 = scalar_select %p255, %s254, 63
      %s257 = smul.addr %s256, 8
      %s258 = scalar_lea.vmem %s0, %s257
      %s259 = smul.u32 32, %s18
      %s260 = smul.u32 32, %s18
      %p261 = scmp.lt.s32.totalorder %s260, 63
      %s262 = scalar_select %p261, %s260, 63
      %s263 = smul.addr %s262, 8
      %s264 = scalar_lea.vmem %s4, %s263
      %s265 = smul.u32 32, %s18
      %p266 = scmp.lt.s32.totalorder %s18, 1
      %s267 = scalar_select %p266, %s18, 1
      %s268 = scalar_lea.vmem %s5, %s267
      %p269 = scmp.lt.s32.totalorder %s18, 1
      %s270 = scalar_select %p269, %s18, 1
      %s271 = scalar_lea.vmem %s6, %s270
      %v272 = vld [vmem:[%s258] sm:$0xff]
      %v273 = vld [vmem:[%s258 + $0x8] sm:$0xff]
      %v274 = vld [vmem:[%s258 + $0x10] sm:$0xff]
      %v275 = vld [vmem:[%s258 + $0x18] sm:$0xff]
      %v276 = vld [vmem:[%s258 + $0x20] sm:$0xff]
      %v277 = vld [vmem:[%s258 + $0x28] sm:$0xff]
      %v278 = vld [vmem:[%s258 + $0x30] sm:$0xff]
      %v279 = vld [vmem:[%s258 + $0x38] sm:$0xff]
      %v280 = vld [vmem:[%s258 + $0x40] sm:$0xff]
      %v281 = vld [vmem:[%s258 + $0x48] sm:$0xff]
      %v282 = vld [vmem:[%s258 + $0x50] sm:$0xff]
      %v283 = vld [vmem:[%s258 + $0x58] sm:$0xff]
      %v284 = vld [vmem:[%s258 + $0x60] sm:$0xff]
      %v285 = vld [vmem:[%s258 + $0x68] sm:$0xff]
      %v286 = vld [vmem:[%s258 + $0x70] sm:$0xff]
      %v287 = vld [vmem:[%s258 + $0x78] sm:$0xff]
      %v288 = vld [vmem:[%s258 + $0x80] sm:$0xff]
      %v289 = vld [vmem:[%s258 + $0x88] sm:$0xff]
      %v290 = vld [vmem:[%s258 + $0x90] sm:$0xff]
      %v291 = vld [vmem:[%s258 + $0x98] sm:$0xff]
      %v292 = vld [vmem:[%s258 + $0xa0] sm:$0xff]
      %v293 = vld [vmem:[%s258 + $0xa8] sm:$0xff]
      %v294 = vld [vmem:[%s258 + $0xb0] sm:$0xff]
      %v295 = vld [vmem:[%s258 + $0xb8] sm:$0xff]
      %v296 = vld [vmem:[%s258 + $0xc0] sm:$0xff]
      %v297 = vld [vmem:[%s258 + $0xc8] sm:$0xff]
      %v298 = vld [vmem:[%s258 + $0xd0] sm:$0xff]
      %v299 = vld [vmem:[%s258 + $0xd8] sm:$0xff]
      %v300 = vld [vmem:[%s258 + $0xe0] sm:$0xff]
      %v301 = vld [vmem:[%s258 + $0xe8] sm:$0xff]
      %v302 = vld [vmem:[%s258 + $0xf0] sm:$0xff]
      %v303 = vld [vmem:[%s258 + $0xf8] sm:$0xff]
      %v304 = vld [vmem:[%s1] sm:$0x1]
      %v306 = vlaneseq
      %v307 = vshrl.u32 %v306, 7
      %v308 = vsub.s32 0, %v307
      %v309 = vrot.slane %v304, %v308
      %v311 = vmul.f32 %v272, %v309
      %v312 = vmul.f32 %v273, %v309
      %v313 = vmul.f32 %v274, %v309
      %v314 = vmul.f32 %v275, %v309
      %v315 = vmul.f32 %v276, %v309
      %v316 = vmul.f32 %v277, %v309
      %v317 = vmul.f32 %v278, %v309
      %v318 = vmul.f32 %v279, %v309
      %v319 = vmul.f32 %v280, %v309
      %v320 = vmul.f32 %v281, %v309
      %v321 = vmul.f32 %v282, %v309
      %v322 = vmul.f32 %v283, %v309
      %v323 = vmul.f32 %v284, %v309
      %v324 = vmul.f32 %v285, %v309
      %v325 = vmul.f32 %v286, %v309
      %v326 = vmul.f32 %v287, %v309
      %v327 = vmul.f32 %v288, %v309
      %v328 = vmul.f32 %v289, %v309
      %v329 = vmul.f32 %v290, %v309
      %v330 = vmul.f32 %v291, %v309
      %v331 = vmul.f32 %v292, %v309
      %v332 = vmul.f32 %v293, %v309
      %v333 = vmul.f32 %v294, %v309
      %v334 = vmul.f32 %v295, %v309
      %v335 = vmul.f32 %v296, %v309
      %v336 = vmul.f32 %v297, %v309
      %v337 = vmul.f32 %v298, %v309
      %v338 = vmul.f32 %v299, %v309
      %v339 = vmul.f32 %v300, %v309
      %v340 = vmul.f32 %v301, %v309
      %v341 = vmul.f32 %v302, %v309
      %v342 = vmul.f32 %v303, %v309
      %v343 = vld [vmem:[%s2] sm:$0x1]
      %v345 = vlaneseq
      %v346 = vshrl.u32 %v345, 7
      %v347 = vsub.s32 0, %v346
      %v348 = vrot.slane %v343, %v347
      %v350 = vadd.f32 %v311, %v348
      %v351 = vadd.f32 %v312, %v348
      %v352 = vadd.f32 %v313, %v348
      %v353 = vadd.f32 %v314, %v348
      %v354 = vadd.f32 %v315, %v348
      %v355 = vadd.f32 %v316, %v348
      %v356 = vadd.f32 %v317, %v348
      %v357 = vadd.f32 %v318, %v348
      %v358 = vadd.f32 %v319, %v348
      %v359 = vadd.f32 %v320, %v348
      %v360 = vadd.f32 %v321, %v348
      %v361 = vadd.f32 %v322, %v348
      %v362 = vadd.f32 %v323, %v348
      %v363 = vadd.f32 %v324, %v348
      %v364 = vadd.f32 %v325, %v348
      %v365 = vadd.f32 %v326, %v348
      %v366 = vadd.f32 %v327, %v348
      %v367 = vadd.f32 %v328, %v348
      %v368 = vadd.f32 %v329, %v348
      %v369 = vadd.f32 %v330, %v348
      %v370 = vadd.f32 %v331, %v348
      %v371 = vadd.f32 %v332, %v348
      %v372 = vadd.f32 %v333, %v348
      %v373 = vadd.f32 %v334, %v348
      %v374 = vadd.f32 %v335, %v348
      %v375 = vadd.f32 %v336, %v348
      %v376 = vadd.f32 %v337, %v348
      %v377 = vadd.f32 %v338, %v348
      %v378 = vadd.f32 %v339, %v348
      %v379 = vadd.f32 %v340, %v348
      %v380 = vadd.f32 %v341, %v348
      %v381 = vadd.f32 %v342, %v348
      %v382 = vmax.f32 %v350, 0.0
      %v383 = vmax.f32 %v351, 0.0
      %v384 = vmax.f32 %v352, 0.0
      %v385 = vmax.f32 %v353, 0.0
      %v386 = vmax.f32 %v354, 0.0
      %v387 = vmax.f32 %v355, 0.0
      %v388 = vmax.f32 %v356, 0.0
      %v389 = vmax.f32 %v357, 0.0
      %v390 = vmax.f32 %v358, 0.0
      %v391 = vmax.f32 %v359, 0.0
      %v392 = vmax.f32 %v360, 0.0
      %v393 = vmax.f32 %v361, 0.0
      %v394 = vmax.f32 %v362, 0.0
      %v395 = vmax.f32 %v363, 0.0
      %v396 = vmax.f32 %v364, 0.0
      %v397 = vmax.f32 %v365, 0.0
      %v398 = vmax.f32 %v366, 0.0
      %v399 = vmax.f32 %v367, 0.0
      %v400 = vmax.f32 %v368, 0.0
      %v401 = vmax.f32 %v369, 0.0
      %v402 = vmax.f32 %v370, 0.0
      %v403 = vmax.f32 %v371, 0.0
      %v404 = vmax.f32 %v372, 0.0
      %v405 = vmax.f32 %v373, 0.0
      %v406 = vmax.f32 %v374, 0.0
      %v407 = vmax.f32 %v375, 0.0
      %v408 = vmax.f32 %v376, 0.0
      %v409 = vmax.f32 %v377, 0.0
      %v410 = vmax.f32 %v378, 0.0
      %v411 = vmax.f32 %v379, 0.0
      %v412 = vmax.f32 %v380, 0.0
      %v413 = vmax.f32 %v381, 0.0
      %v414 = vmin.f32 %v382, 6.0
      %v415 = vmin.f32 %v383, 6.0
      %v416 = vmin.f32 %v384, 6.0
      %v417 = vmin.f32 %v385, 6.0
      %v418 = vmin.f32 %v386, 6.0
      %v419 = vmin.f32 %v387, 6.0
      %v420 = vmin.f32 %v388, 6.0
      %v421 = vmin.f32 %v389, 6.0
      %v422 = vmin.f32 %v390, 6.0
      %v423 = vmin.f32 %v391, 6.0
      %v424 = vmin.f32 %v392, 6.0
      %v425 = vmin.f32 %v393, 6.0
      %v426 = vmin.f32 %v394, 6.0
      %v427 = vmin.f32 %v395, 6.0
      %v428 = vmin.f32 %v396, 6.0
      %v429 = vmin.f32 %v397, 6.0
      %v430 = vmin.f32 %v398, 6.0
      %v431 = vmin.f32 %v399, 6.0
      %v432 = vmin.f32 %v400, 6.0
      %v433 = vmin.f32 %v401, 6.0
      %v434 = vmin.f32 %v402, 6.0
      %v435 = vmin.f32 %v403, 6.0
      %v436 = vmin.f32 %v404, 6.0
      %v437 = vmin.f32 %v405, 6.0
      %v438 = vmin.f32 %v406, 6.0
      %v439 = vmin.f32 %v407, 6.0
      %v440 = vmin.f32 %v408, 6.0
      %v441 = vmin.f32 %v409, 6.0
      %v442 = vmin.f32 %v410, 6.0
      %v443 = vmin.f32 %v411, 6.0
      %v444 = vmin.f32 %v412, 6.0
      %v445 = vmin.f32 %v413, 6.0
      %v446 = vld [vmem:[%s3] sm:$0xff]
      %v447 = vld [vmem:[%s3 + $0x8] sm:$0xff]
      %v448 = vld [vmem:[%s3 + $0x10] sm:$0xff]
      %v449 = vld [vmem:[%s3 + $0x18] sm:$0xff]
      %v450 = vld [vmem:[%s3 + $0x20] sm:$0xff]
      %v451 = vld [vmem:[%s3 + $0x28] sm:$0xff]
      %v452 = vld [vmem:[%s3 + $0x30] sm:$0xff]
      %v453 = vld [vmem:[%s3 + $0x38] sm:$0xff]
      %v454 = vld [vmem:[%s3 + $0x40] sm:$0xff]
      %v455 = vld [vmem:[%s3 + $0x48] sm:$0xff]
      %v456 = vld [vmem:[%s3 + $0x50] sm:$0xff]
      %v457 = vld [vmem:[%s3 + $0x58] sm:$0xff]
      %v458 = vld [vmem:[%s3 + $0x60] sm:$0xff]
      %v459 = vld [vmem:[%s3 + $0x68] sm:$0xff]
      %v460 = vld [vmem:[%s3 + $0x70] sm:$0xff]
      %v461 = vld [vmem:[%s3 + $0x78] sm:$0xff]
      %462 = vmatprep.subr.mxu0 0.0
      %463 = vmatpush1.msra.mxu0 %v446
      %464 = vmatprep.subr.mxu0 0.0
      %465 = vmatpush1.msra.mxu0 %v447
      %466 = vmatprep.subr.mxu0 0.0
      %467 = vmatpush1.msra.mxu0 %v448
      %468 = vmatprep.subr.mxu0 0.0
      %469 = vmatpush1.msra.mxu0 %v449
      %470 = vmatprep.subr.mxu0 0.0
      %471 = vmatpush1.msra.mxu0 %v450
      %472 = vmatprep.subr.mxu0 0.0
      %473 = vmatpush1.msra.mxu0 %v451
      %474 = vmatprep.subr.mxu0 0.0
      %475 = vmatpush1.msra.mxu0 %v452
      %476 = vmatprep.subr.mxu0 0.0
      %477 = vmatpush1.msra.mxu0 %v453
      %478 = vmatprep.subr.mxu0 0.0
      %479 = vmatpush1.msra.mxu0 %v454
      %480 = vmatprep.subr.mxu0 0.0
      %481 = vmatpush1.msra.mxu0 %v455
      %482 = vmatprep.subr.mxu0 0.0
      %483 = vmatpush1.msra.mxu0 %v456
      %484 = vmatprep.subr.mxu0 0.0
      %485 = vmatpush1.msra.mxu0 %v457
      %486 = vmatprep.subr.mxu0 0.0
      %487 = vmatpush1.msra.mxu0 %v458
      %488 = vmatprep.subr.mxu0 0.0
      %489 = vmatpush1.msra.mxu0 %v459
      %490 = vmatprep.subr.mxu0 0.0
      %491 = vmatpush1.msra.mxu0 %v460
      %492 = vmatprep.subr.mxu0 0.0
      %493 = vmatpush1.msra.mxu0 %v461
      %494 = vmatprep.subr.mxu0 0.0
      %495 = vmatpush1.msra.mxu0 0.0
      %496 = vmatprep.subr.mxu0 0.0
      %497 = vmatpush1.msra.mxu0 0.0
      %498 = vmatprep.subr.mxu0 0.0
      %499 = vmatpush1.msra.mxu0 0.0
      %500 = vmatprep.subr.mxu0 0.0
      %501 = vmatpush1.msra.mxu0 0.0
      %502 = vmatprep.subr.mxu0 0.0
      %503 = vmatpush1.msra.mxu0 0.0
      %504 = vmatprep.subr.mxu0 0.0
      %505 = vmatpush1.msra.mxu0 0.0
      %506 = vmatprep.subr.mxu0 0.0
      %507 = vmatpush1.msra.mxu0 0.0
      %508 = vmatprep.subr.mxu0 0.0
      %509 = vmatpush1.msra.mxu0 0.0
      %510 = vmatprep.subr.mxu0 0.0
      %511 = vmatpush1.msra.mxu0 0.0
      %512 = vmatprep.subr.mxu0 0.0
      %513 = vmatpush1.msra.mxu0 0.0
      %514 = vmatprep.subr.mxu0 0.0
      %515 = vmatpush1.msra.mxu0 0.0
      %516 = vmatprep.subr.mxu0 0.0
      %517 = vmatpush1.msra.mxu0 0.0
      %518 = vmatprep.subr.mxu0 0.0
      %519 = vmatpush1.msra.mxu0 0.0
      %520 = vmatprep.subr.mxu0 0.0
      %521 = vmatpush1.msra.mxu0 0.0
      %522 = vmatprep.subr.mxu0 0.0
      %523 = vmatpush1.msra.mxu0 0.0
      %524 = vmatprep.subr.mxu0 0.0
      %525 = vmatpush1.msra.mxu0 0.0
      %526 = vmatprep.mubr.f32.mxu0 0.0
      %527 = vmatmul.mubr.f32.gmra.mrb[0].mxu0 %v414
      %v528 = vpop.f32.mrb[0].mxu0
      %v529 = vadd.f32 0.0, %v528
      %v530 = vpop.f32.mrb[0].mxu0
      %531 = vmatprep.mubr.f32.mxu0 0.0
      %532 = vmatmul.mubr.f32.gmra.mrb[0].mxu0 %v415
      %v533 = vpop.f32.mrb[0].mxu0
      %v534 = vadd.f32 0.0, %v533
      %v535 = vpop.f32.mrb[0].mxu0
      %536 = vmatprep.mubr.f32.mxu0 0.0
      %537 = vmatmul.mubr.f32.gmra.mrb[0].mxu0 %v416
      %v538 = vpop.f32.mrb[0].mxu0
      %v539 = vadd.f32 0.0, %v538
      %v540 = vpop.f32.mrb[0].mxu0
      %541 = vmatprep.mubr.f32.mxu0 0.0
      %542 = vmatmul.mubr.f32.gmra.mrb[0].mxu0 %v417
      %v543 = vpop.f32.mrb[0].mxu0
      %v544 = vadd.f32 0.0, %v543
      %v545 = vpop.f32.mrb[0].mxu0
      %546 = vmatprep.mubr.f32.mxu0 0.0
      %547 = vmatmul.mubr.f32.gmra.mrb[0].mxu0 %v418
      %v548 = vpop.f32.mrb[0].mxu0
      %v549 = vadd.f32 0.0, %v548
      %v550 = vpop.f32.mrb[0].mxu0
      %551 = vmatprep.mubr.f32.mxu0 0.0
      %552 = vmatmul.mubr.f32.gmra.mrb[0].mxu0 %v419
      %v553 = vpop.f32.mrb[0].mxu0
      %v554 = vadd.f32 0.0, %v553
      %v555 = vpop.f32.mrb[0].mxu0
      %556 = vmatprep.mubr.f32.mxu0 0.0
      %557 = vmatmul.mubr.f32.gmra.mrb[0].mxu0 %v420
      %v558 = vpop.f32.mrb[0].mxu0
      %v559 = vadd.f32 0.0, %v558
      %v560 = vpop.f32.mrb[0].mxu0
      %561 = vmatprep.mubr.f32.mxu0 0.0
      %562 = vmatmul.mubr.f32.gmra.mrb[0].mxu0 %v421
      %v563 = vpop.f32.mrb[0].mxu0
      %v564 = vadd.f32 0.0, %v563
      %v565 = vpop.f32.mrb[0].mxu0
      %566 = vmatprep.mubr.f32.mxu0 0.0
      %567 = vmatmul.mubr.f32.gmra.mrb[0].mxu0 %v422
      %v568 = vpop.f32.mrb[0].mxu0
      %v569 = vadd.f32 0.0, %v568
      %v570 = vpop.f32.mrb[0].mxu0
      %571 = vmatprep.mubr.f32.mxu0 0.0
      %572 = vmatmul.mubr.f32.gmra.mrb[0].mxu0 %v423
      %v573 = vpop.f32.mrb[0].mxu0
      %v574 = vadd.f32 0.0, %v573
      %v575 = vpop.f32.mrb[0].mxu0
      %576 = vmatprep.mubr.f32.mxu0 0.0
      %577 = vmatmul.mubr.f32.gmra.mrb[0].mxu0 %v424
      %v578 = vpop.f32.mrb[0].mxu0
      %v579 = vadd.f32 0.0, %v578
      %v580 = vpop.f32.mrb[0].mxu0
      %581 = vmatprep.mubr.f32.mxu0 0.0
      %582 = vmatmul.mubr.f32.gmra.mrb[0].mxu0 %v425
      %v583 = vpop.f32.mrb[0].mxu0
      %v584 = vadd.f32 0.0, %v583
      %v585 = vpop.f32.mrb[0].mxu0
      %586 = vmatprep.mubr.f32.mxu0 0.0
      %587 = vmatmul.mubr.f32.gmra.mrb[0].mxu0 %v426
      %v588 = vpop.f32.mrb[0].mxu0
      %v589 = vadd.f32 0.0, %v588
      %v590 = vpop.f32.mrb[0].mxu0
      %591 = vmatprep.mubr.f32.mxu0 0.0
      %592 = vmatmul.mubr.f32.gmra.mrb[0].mxu0 %v427
      %v593 = vpop.f32.mrb[0].mxu0
      %v594 = vadd.f32 0.0, %v593
      %v595 = vpop.f32.mrb[0].mxu0
      %596 = vmatprep.mubr.f32.mxu0 0.0
      %597 = vmatmul.mubr.f32.gmra.mrb[0].mxu0 %v428
      %v598 = vpop.f32.mrb[0].mxu0
      %v599 = vadd.f32 0.0, %v598
      %v600 = vpop.f32.mrb[0].mxu0
      %601 = vmatprep.mubr.f32.mxu0 0.0
      %602 = vmatmul.mubr.f32.gmra.mrb[0].mxu0 %v429
      %v603 = vpop.f32.mrb[0].mxu0
      %v604 = vadd.f32 0.0, %v603
      %v605 = vpop.f32.mrb[0].mxu0
      %606 = vmatprep.mubr.f32.mxu0 0.0
      %607 = vmatmul.mubr.f32.gmra.mrb[0].mxu0 %v430
      %v608 = vpop.f32.mrb[0].mxu0
      %v609 = vadd.f32 0.0, %v608
      %v610 = vpop.f32.mrb[0].mxu0
      %611 = vmatprep.mubr.f32.mxu0 0.0
      %612 = vmatmul.mubr.f32.gmra.mrb[0].mxu0 %v431
      %v613 = vpop.f32.mrb[0].mxu0
      %v614 = vadd.f32 0.0, %v613
      %v615 = vpop.f32.mrb[0].mxu0
      %616 = vmatprep.mubr.f32.mxu0 0.0
      %617 = vmatmul.mubr.f32.gmra.mrb[0].mxu0 %v432
      %v618 = vpop.f32.mrb[0].mxu0
      %v619 = vadd.f32 0.0, %v618
      %v620 = vpop.f32.mrb[0].mxu0
      %621 = vmatprep.mubr.f32.mxu0 0.0
      %622 = vmatmul.mubr.f32.gmra.mrb[0].mxu0 %v433
      %v623 = vpop.f32.mrb[0].mxu0
      %v624 = vadd.f32 0.0, %v623
      %v625 = vpop.f32.mrb[0].mxu0
      %626 = vmatprep.mubr.f32.mxu0 0.0
      %627 = vmatmul.mubr.f32.gmra.mrb[0].mxu0 %v434
      %v628 = vpop.f32.mrb[0].mxu0
      %v629 = vadd.f32 0.0, %v628
      %v630 = vpop.f32.mrb[0].mxu0
      %631 = vmatprep.mubr.f32.mxu0 0.0
      %632 = vmatmul.mubr.f32.gmra.mrb[0].mxu0 %v435
      %v633 = vpop.f32.mrb[0].mxu0
      %v634 = vadd.f32 0.0, %v633
      %v635 = vpop.f32.mrb[0].mxu0
      %636 = vmatprep.mubr.f32.mxu0 0.0
      %637 = vmatmul.mubr.f32.gmra.mrb[0].mxu0 %v436
      %v638 = vpop.f32.mrb[0].mxu0
      %v639 = vadd.f32 0.0, %v638
      %v640 = vpop.f32.mrb[0].mxu0
      %641 = vmatprep.mubr.f32.mxu0 0.0
      %642 = vmatmul.mubr.f32.gmra.mrb[0].mxu0 %v437
      %v643 = vpop.f32.mrb[0].mxu0
      %v644 = vadd.f32 0.0, %v643
      %v645 = vpop.f32.mrb[0].mxu0
      %646 = vmatprep.mubr.f32.mxu0 0.0
      %647 = vmatmul.mubr.f32.gmra.mrb[0].mxu0 %v438
      %v648 = vpop.f32.mrb[0].mxu0
      %v649 = vadd.f32 0.0, %v648
      %v650 = vpop.f32.mrb[0].mxu0
      %651 = vmatprep.mubr.f32.mxu0 0.0
      %652 = vmatmul.mubr.f32.gmra.mrb[0].mxu0 %v439
      %v653 = vpop.f32.mrb[0].mxu0
      %v654 = vadd.f32 0.0, %v653
      %v655 = vpop.f32.mrb[0].mxu0
      %656 = vmatprep.mubr.f32.mxu0 0.0
      %657 = vmatmul.mubr.f32.gmra.mrb[0].mxu0 %v440
      %v658 = vpop.f32.mrb[0].mxu0
      %v659 = vadd.f32 0.0, %v658
      %v660 = vpop.f32.mrb[0].mxu0
      %661 = vmatprep.mubr.f32.mxu0 0.0
      %662 = vmatmul.mubr.f32.gmra.mrb[0].mxu0 %v441
      %v663 = vpop.f32.mrb[0].mxu0
      %v664 = vadd.f32 0.0, %v663
      %v665 = vpop.f32.mrb[0].mxu0
      %666 = vmatprep.mubr.f32.mxu0 0.0
      %667 = vmatmul.mubr.f32.gmra.mrb[0].mxu0 %v442
      %v668 = vpop.f32.mrb[0].mxu0
      %v669 = vadd.f32 0.0, %v668
      %v670 = vpop.f32.mrb[0].mxu0
      %671 = vmatprep.mubr.f32.mxu0 0.0
      %672 = vmatmul.mubr.f32.gmra.mrb[0].mxu0 %v443
      %v673 = vpop.f32.mrb[0].mxu0
      %v674 = vadd.f32 0.0, %v673
      %v675 = vpop.f32.mrb[0].mxu0
      %676 = vmatprep.mubr.f32.mxu0 0.0
      %677 = vmatmul.mubr.f32.gmra.mrb[0].mxu0 %v444
      %v678 = vpop.f32.mrb[0].mxu0
      %v679 = vadd.f32 0.0, %v678
      %v680 = vpop.f32.mrb[0].mxu0
      %681 = vmatprep.mubr.f32.mxu0 0.0
      %682 = vmatmul.mubr.f32.gmra.mrb[0].mxu0 %v445
      %v683 = vpop.f32.mrb[0].mxu0
      %v684 = vadd.f32 0.0, %v683
      %v685 = vpop.f32.mrb[0].mxu0
      %686 = vdwg.mxu0
      %687 = vst [vmem:[%s264] sm:$0xff] %v529
      %688 = vst [vmem:[%s264 + $0x8] sm:$0xff] %v534
      %689 = vst [vmem:[%s264 + $0x10] sm:$0xff] %v539
      %690 = vst [vmem:[%s264 + $0x18] sm:$0xff] %v544
      %691 = vst [vmem:[%s264 + $0x20] sm:$0xff] %v549
      %692 = vst [vmem:[%s264 + $0x28] sm:$0xff] %v554
      %693 = vst [vmem:[%s264 + $0x30] sm:$0xff] %v559
      %694 = vst [vmem:[%s264 + $0x38] sm:$0xff] %v564
      %695 = vst [vmem:[%s264 + $0x40] sm:$0xff] %v569
      %696 = vst [vmem:[%s264 + $0x48] sm:$0xff] %v574
      %697 = vst [vmem:[%s264 + $0x50] sm:$0xff] %v579
      %698 = vst [vmem:[%s264 + $0x58] sm:$0xff] %v584
      %699 = vst [vmem:[%s264 + $0x60] sm:$0xff] %v589
      %700 = vst [vmem:[%s264 + $0x68] sm:$0xff] %v594
      %701 = vst [vmem:[%s264 + $0x70] sm:$0xff] %v599
      %702 = vst [vmem:[%s264 + $0x78] sm:$0xff] %v604
      %703 = vst [vmem:[%s264 + $0x80] sm:$0xff] %v609
      %704 = vst [vmem:[%s264 + $0x88] sm:$0xff] %v614
      %705 = vst [vmem:[%s264 + $0x90] sm:$0xff] %v619
      %706 = vst [vmem:[%s264 + $0x98] sm:$0xff] %v624
      %707 = vst [vmem:[%s264 + $0xa0] sm:$0xff] %v629
      %708 = vst [vmem:[%s264 + $0xa8] sm:$0xff] %v634
      %709 = vst [vmem:[%s264 + $0xb0] sm:$0xff] %v639
      %710 = vst [vmem:[%s264 + $0xb8] sm:$0xff] %v644
      %711 = vst [vmem:[%s264 + $0xc0] sm:$0xff] %v649
      %712 = vst [vmem:[%s264 + $0xc8] sm:$0xff] %v654
      %713 = vst [vmem:[%s264 + $0xd0] sm:$0xff] %v659
      %714 = vst [vmem:[%s264 + $0xd8] sm:$0xff] %v664
      %715 = vst [vmem:[%s264 + $0xe0] sm:$0xff] %v669
      %716 = vst [vmem:[%s264 + $0xe8] sm:$0xff] %v674
      %717 = vst [vmem:[%s264 + $0xf0] sm:$0xff] %v679
      %718 = vst [vmem:[%s264 + $0xf8] sm:$0xff] %v684
      %v719 = vadd.f32 %v529, %v534
      %v720 = vadd.f32 %v719, %v539
      %v721 = vadd.f32 %v720, %v544
      %v722 = vadd.f32 %v721, %v549
      %v723 = vadd.f32 %v722, %v554
      %v724 = vadd.f32 %v723, %v559
      %v725 = vadd.f32 %v724, %v564
      %v726 = vadd.f32 %v725, %v569
      %v727 = vadd.f32 %v726, %v574
      %v728 = vadd.f32 %v727, %v579
      %v729 = vadd.f32 %v728, %v584
      %v730 = vadd.f32 %v729, %v589
      %v731 = vadd.f32 %v730, %v594
      %v732 = vadd.f32 %v731, %v599
      %v733 = vadd.f32 %v732, %v604
      %v734 = vadd.f32 %v733, %v609
      %v735 = vadd.f32 %v734, %v614
      %v736 = vadd.f32 %v735, %v619
      %v737 = vadd.f32 %v736, %v624
      %v738 = vadd.f32 %v737, %v629
      %v739 = vadd.f32 %v738, %v634
      %v740 = vadd.f32 %v739, %v639
      %v741 = vadd.f32 %v740, %v644
      %v742 = vadd.f32 %v741, %v649
      %v743 = vadd.f32 %v742, %v654
      %v744 = vadd.f32 %v743, %v659
      %v745 = vadd.f32 %v744, %v664
      %v746 = vadd.f32 %v745, %v669
      %v747 = vadd.f32 %v746, %v674
      %v748 = vadd.f32 %v747, %v679
      %v749 = vadd.f32 %v748, %v684
      %v750 = vrot.slane %v749, 4
      %v751 = vadd.f32 %v749, %v750
      %v752 = vrot.slane %v751, 2
      %v753 = vadd.f32 %v751, %v752
      %v754 = vrot.slane %v753, 1
      %v755 = vadd.f32 %v753, %v754
      %756 = vst [vmem:[%s268] sm:$0x1] %v755
      %v757 = vmul.f32 %v529, %v529
      %v758 = vmul.f32 %v534, %v534
      %v759 = vmul.f32 %v539, %v539
      %v760 = vmul.f32 %v544, %v544
      %v761 = vmul.f32 %v549, %v549
      %v762 = vmul.f32 %v554, %v554
      %v763 = vmul.f32 %v559, %v559
      %v764 = vmul.f32 %v564, %v564
      %v765 = vmul.f32 %v569, %v569
      %v766 = vmul.f32 %v574, %v574
      %v767 = vmul.f32 %v579, %v579
      %v768 = vmul.f32 %v584, %v584
      %v769 = vmul.f32 %v589, %v589
      %v770 = vmul.f32 %v594, %v594
      %v771 = vmul.f32 %v599, %v599
      %v772 = vmul.f32 %v604, %v604
      %v773 = vmul.f32 %v609, %v609
      %v774 = vmul.f32 %v614, %v614
      %v775 = vmul.f32 %v619, %v619
      %v776 = vmul.f32 %v624, %v624
      %v777 = vmul.f32 %v629, %v629
      %v778 = vmul.f32 %v634, %v634
      %v779 = vmul.f32 %v639, %v639
      %v780 = vmul.f32 %v644, %v644
      %v781 = vmul.f32 %v649, %v649
      %v782 = vmul.f32 %v654, %v654
      %v783 = vmul.f32 %v659, %v659
      %v784 = vmul.f32 %v664, %v664
      %v785 = vmul.f32 %v669, %v669
      %v786 = vmul.f32 %v674, %v674
      %v787 = vmul.f32 %v679, %v679
      %v788 = vmul.f32 %v684, %v684
      %v789 = vadd.f32 %v757, %v758
      %v790 = vadd.f32 %v789, %v759
      %v791 = vadd.f32 %v790, %v760
      %v792 = vadd.f32 %v791, %v761
      %v793 = vadd.f32 %v792, %v762
      %v794 = vadd.f32 %v793, %v763
      %v795 = vadd.f32 %v794, %v764
      %v796 = vadd.f32 %v795, %v765
      %v797 = vadd.f32 %v796, %v766
      %v798 = vadd.f32 %v797, %v767
      %v799 = vadd.f32 %v798, %v768
      %v800 = vadd.f32 %v799, %v769
      %v801 = vadd.f32 %v800, %v770
      %v802 = vadd.f32 %v801, %v771
      %v803 = vadd.f32 %v802, %v772
      %v804 = vadd.f32 %v803, %v773
      %v805 = vadd.f32 %v804, %v774
      %v806 = vadd.f32 %v805, %v775
      %v807 = vadd.f32 %v806, %v776
      %v808 = vadd.f32 %v807, %v777
      %v809 = vadd.f32 %v808, %v778
      %v810 = vadd.f32 %v809, %v779
      %v811 = vadd.f32 %v810, %v780
      %v812 = vadd.f32 %v811, %v781
      %v813 = vadd.f32 %v812, %v782
      %v814 = vadd.f32 %v813, %v783
      %v815 = vadd.f32 %v814, %v784
      %v816 = vadd.f32 %v815, %v785
      %v817 = vadd.f32 %v816, %v786
      %v818 = vadd.f32 %v817, %v787
      %v819 = vadd.f32 %v818, %v788
      %v820 = vrot.slane %v819, 4
      %v821 = vadd.f32 %v819, %v820
      %v822 = vrot.slane %v821, 2
      %v823 = vadd.f32 %v821, %v822
      %v824 = vrot.slane %v823, 1
      %v825 = vadd.f32 %v823, %v824
      %826 = vst [vmem:[%s271] sm:$0x1] %v825
      %s827 = smul.u32 32, %s18
      %p828 = scmp.lt.s32.totalorder %s827, 63
      %s829 = scalar_select %p828, %s827, 63
      %s830 = smul.addr %s829, 8
      %s831 = scalar_lea.vmem %s4, %s830
      %p832 = scmp.lt.s32.totalorder %s18, 1
      %s833 = scalar_select %p832, %s18, 1
      %s834 = scalar_lea.vmem %s5, %s833
      %p835 = scmp.lt.s32.totalorder %s18, 1
      %s836 = scalar_select %p835, %s18, 1
      %s837 = scalar_lea.vmem %s6, %s836
      // Predicated region
      $region37: #{linear_bottleneck_forward.6} parent=35 // pred_check
        %p838 = pneg %p125
      $region38: #{linear_bottleneck_forward.6} parent=35 // pred_check_branch
        %840 = sbr.rel (%p838) target = $region40
      $region39: #{linear_bottleneck_forward.6} parent=35 // pred_region
        %s841 = smul.u32 32, %s18
      $region40: #{linear_bottleneck_forward.6} parent=35 // pred_fallthru
        _
      // Predicated region
      $region41: #{linear_bottleneck_forward.6} parent=35 // pred_check
        %p842 = pneg %p151
      $region42: #{linear_bottleneck_forward.6} parent=35 // pred_check_branch
        %844 = sbr.rel (%p842) target = $region44
      $region43: #{linear_bottleneck_forward.6} parent=35 // pred_region
        _
      $region44: #{linear_bottleneck_forward.6} parent=35 // pred_fallthru
        _
      // Predicated region
      $region45: #{linear_bottleneck_forward.6} parent=35 // pred_check
        %p845 = pneg %p177
      $region46: #{linear_bottleneck_forward.6} parent=35 // pred_check_branch
        %847 = sbr.rel (%p845) target = $region48
      $region47: #{linear_bottleneck_forward.6} parent=35 // pred_region
        _
      $region48: #{linear_bottleneck_forward.6} parent=35 // pred_fallthru
        _
    $region36: #{linear_bottleneck_forward.6} parent=5 // pred_fallthru
      _
    %p848 = scmp.le.s32.totalorder 2, %s13
    // Predicated region
    $region49: #{linear_bottleneck_forward.6} parent=5 // pred_check
      %p849 = pneg %p848
    $region50: #{linear_bottleneck_forward.6} parent=5 // pred_check_branch
      %851 = sbr.rel (%p849) target = $region52
    $region51: #{linear_bottleneck_forward.6} parent=5 // pred_region
      %s852 = ssub.s32 %s13, 2
      // Predicated region
      $region53: #{linear_bottleneck_forward.6} parent=51 // pred_check
        %p853 = pneg %p131
      $region54: #{linear_bottleneck_forward.6} parent=51 // pred_check_branch
        %855 = sbr.rel (%p853) target = $region56
      $region55: #{linear_bottleneck_forward.6} parent=51 // pred_region
        %s856 = smul.u32 32, %s19
        %p857 = scmp.lt.s32.totalorder %s856, 63
        %s858 = scalar_select %p857, %s856, 63
        %s859 = smul.addr %s858, 8
        %s860 = scalar_lea.vmem %s4, %s859
      $region56: #{linear_bottleneck_forward.6} parent=51 // pred_fallthru
        _
      // Predicated region
      $region57: #{linear_bottleneck_forward.6} parent=51 // pred_check
        %p861 = pneg %p157
      $region58: #{linear_bottleneck_forward.6} parent=51 // pred_check_branch
        %863 = sbr.rel (%p861) target = $region60
      $region59: #{linear_bottleneck_forward.6} parent=51 // pred_region
        %p864 = scmp.lt.s32.totalorder %s19, 1
        %s865 = scalar_select %p864, %s19, 1
        %s866 = scalar_lea.vmem %s5, %s865
      $region60: #{linear_bottleneck_forward.6} parent=51 // pred_fallthru
        _
      // Predicated region
      $region61: #{linear_bottleneck_forward.6} parent=51 // pred_check
        %p867 = pneg %p183
      $region62: #{linear_bottleneck_forward.6} parent=51 // pred_check_branch
        %869 = sbr.rel (%p867) target = $region64
      $region63: #{linear_bottleneck_forward.6} parent=51 // pred_region
        %p870 = scmp.lt.s32.totalorder %s19, 1
        %s871 = scalar_select %p870, %s19, 1
        %s872 = scalar_lea.vmem %s6, %s871
      $region64: #{linear_bottleneck_forward.6} parent=51 // pred_fallthru
        _
    $region52: #{linear_bottleneck_forward.6} parent=5 // pred_fallthru
      _
  $region6: #{linear_bottleneck_forward.6} parent=0 // loop_footer
    %s17 = sadd.s32 1, %s13
  $region7: #{linear_bottleneck_forward.6} parent=0 // loop_footer_branch
    %12 = sbr.rel target = $region3
  $region8: #{linear_bottleneck_forward.6} parent=0 // loop_exit
    _

// kernel: linear_bottleneck_forward.7
$region0: #{linear_bottleneck_forward.7}
  #allocation0 [shape = 'u32[]', space=smem, size = 0x4, offset = 0x4, fixed_abs, tag = 'smem constant byte address 0x4 - core index']
  #allocation1 [shape = 'u32[144,128]{1,0:T(1,128)}', space=vmem, size = 0x12000, scoped, tag = 'internal scratch']
  %s0 = inlined_call_operand.vmem [shape: f32[512,128], index: 0, kind: input, shape index: {}]
  %s1 = inlined_call_operand.vmem [shape: f32[1,128], index: 1, kind: input, shape index: {}]
  %s2 = inlined_call_operand.vmem [shape: f32[1,128], index: 2, kind: input, shape index: {}]
  %s3 = inlined_call_operand.vmem [shape: f32[512,128], index: 3, kind: input, shape index: {}]
  %s4 = inlined_call_operand.vmem [shape: f32[512,128], index: 4, kind: output, shape index: {}]
  %s5 = sld [smem:[#allocation0]]
  $region49: #{linear_bottleneck_forward.7} parent=0
    _
  %s7 = ssub.s32 1, %s5
  %s8 = scalar_select 0, %s7, %s5
  loop: start=0, step=1, limit=4
  $region2: #{linear_bottleneck_forward.7} parent=0 // loop_pre_header
    _
  $region3: #{linear_bottleneck_forward.7} parent=0 // loop_header
    %s10 = sphi 0, %s14
    %p11 = scmp.ge.s32.totalorder %s10, 4
    %s20 = sphi 0, %s22
    %s23 = sphi 0, %s20
    %s24 = sphi 0, %s23
    %s40 = sphi 0, %s24
    %s44 = sphi 0, %s44
    %s46 = sphi 0, %s44
    %s47 = sphi 0, %s46
    %s61 = sphi 0, %s47
    %s65 = sphi 0, %s65
    %s67 = sphi 0, %s65
    %s68 = sphi 0, %s67
    %s82 = sphi 0, %s68
    %s88 = sphi 0, %s90
    %s91 = sphi 0, %s88
    %s92 = sphi 0, %s91
    %s108 = sphi 0, %s92
    %s114 = sphi 0, %s116
    %s117 = sphi 0, %s114
    %s118 = sphi 0, %s117
    %s134 = sphi 0, %s118
  $region4: #{linear_bottleneck_forward.7} parent=0 // loop_header_branch
    %13 = sbr.rel (%p11) target = $region8
  $region5: #{linear_bottleneck_forward.7} parent=0 // loop_body
    %s15 = ssub.s32 %s10, 1
    %s16 = ssub.s32 %s10, 2
    %s17 = sadd.s32 %s10, 1
    %s18 = ssub.s32 %s10, %s17
    %p19 = scmp.eq.s32.totalorder %s18, 0
    %s21 = sadd.s32 %s20, 1
    %s22 = scalar_select %p19, %s20, %s21
    %p25 = pneg %p19
    %p26 = scmp.eq.s32.totalorder %s10, 1
    %p27 = por %p25, %p26
    %p28 = scmp.ne.s32.totalorder %s20, %s23
    %p29 = scmp.eq.s32.totalorder %s10, 0
    %p30 = por %p28, %p29
    %p31 = scmp.ne.s32.totalorder %s20, %s23
    %p32 = scmp.eq.s32.totalorder %s15, 1
    %p33 = por %p31, %p32
    %p34 = scmp.ne.s32.totalorder %s23, %s24
    %p35 = scmp.eq.s32.totalorder %s15, 0
    %p36 = por %p34, %p35
    %p37 = scmp.ne.s32.totalorder %s23, %s24
    %p38 = scmp.eq.s32.totalorder %s16, 1
    %p39 = por %p37, %p38
    %p41 = scmp.ne.s32.totalorder %s24, %s40
    %p42 = scmp.eq.s32.totalorder %s16, 0
    %p43 = por %p41, %p42
    %s45 = sadd.s32 %s44, 1
    %p48 = scmp.eq.s32.totalorder %s10, 1
    %p49 = scmp.ne.s32.totalorder %s44, %s46
    %p50 = scmp.eq.s32.totalorder %s10, 0
    %p51 = por %p49, %p50
    %p52 = scmp.ne.s32.totalorder %s44, %s46
    %p53 = scmp.eq.s32.totalorder %s15, 1
    %p54 = por %p52, %p53
    %p55 = scmp.ne.s32.totalorder %s46, %s47
    %p56 = scmp.eq.s32.totalorder %s15, 0
    %p57 = por %p55, %p56
    %p58 = scmp.ne.s32.totalorder %s46, %s47
    %p59 = scmp.eq.s32.totalorder %s16, 1
    %p60 = por %p58, %p59
    %p62 = scmp.ne.s32.totalorder %s47, %s61
    %p63 = scmp.eq.s32.totalorder %s16, 0
    %p64 = por %p62, %p63
    %s66 = sadd.s32 %s65, 1
    %p69 = scmp.eq.s32.totalorder %s10, 1
    %p70 = scmp.ne.s32.totalorder %s65, %s67
    %p71 = scmp.eq.s32.totalorder %s10, 0
    %p72 = por %p70, %p71
    %p73 = scmp.ne.s32.totalorder %s65, %s67
    %p74 = scmp.eq.s32.totalorder %s15, 1
    %p75 = por %p73, %p74
    %p76 = scmp.ne.s32.totalorder %s67, %s68
    %p77 = scmp.eq.s32.totalorder %s15, 0
    %p78 = por %p76, %p77
    %p79 = scmp.ne.s32.totalorder %s67, %s68
    %p80 = scmp.eq.s32.totalorder %s16, 1
    %p81 = por %p79, %p80
    %p83 = scmp.ne.s32.totalorder %s68, %s82
    %p84 = scmp.eq.s32.totalorder %s16, 0
    %p85 = por %p83, %p84
    %s86 = ssub.s32 %s10, %s17
    %p87 = scmp.eq.s32.totalorder %s86, 0
    %s89 = sadd.s32 %s88, 1
    %s90 = scalar_select %p87, %s88, %s89
    %p93 = pneg %p87
    %p94 = scmp.eq.s32.totalorder %s10, 1
    %p95 = por %p93, %p94
    %p96 = scmp.ne.s32.totalorder %s88, %s91
    %p97 = scmp.eq.s32.totalorder %s10, 0
    %p98 = por %p96, %p97
    %p99 = scmp.ne.s32.totalorder %s88, %s91
    %p100 = scmp.eq.s32.totalorder %s15, 1
    %p101 = por %p99, %p100
    %p102 = scmp.ne.s32.totalorder %s91, %s92
    %p103 = scmp.eq.s32.totalorder %s15, 0
    %p104 = por %p102, %p103
    %p105 = scmp.ne.s32.totalorder %s91, %s92
    %p106 = scmp.eq.s32.totalorder %s16, 1
    %p107 = por %p105, %p106
    %p109 = scmp.ne.s32.totalorder %s92, %s108
    %p110 = scmp.eq.s32.totalorder %s16, 0
    %p111 = por %p109, %p110
    %s112 = ssub.s32 %s10, %s17
    %p113 = scmp.eq.s32.totalorder %s112, 0
    %s115 = sadd.s32 %s114, 1
    %s116 = scalar_select %p113, %s114, %s115
    %p119 = pneg %p113
    %p120 = scmp.eq.s32.totalorder %s10, 1
    %p121 = por %p119, %p120
    %p122 = scmp.ne.s32.totalorder %s114, %s117
    %p123 = scmp.eq.s32.totalorder %s10, 0
    %p124 = por %p122, %p123
    %p125 = scmp.ne.s32.totalorder %s114, %s117
    %p126 = scmp.eq.s32.totalorder %s15, 1
    %p127 = por %p125, %p126
    %p128 = scmp.ne.s32.totalorder %s117, %s118
    %p129 = scmp.eq.s32.totalorder %s15, 0
    %p130 = por %p128, %p129
    %p131 = scmp.ne.s32.totalorder %s117, %s118
    %p132 = scmp.eq.s32.totalorder %s16, 1
    %p133 = por %p131, %p132
    %p135 = scmp.ne.s32.totalorder %s118, %s134
    %p136 = scmp.eq.s32.totalorder %s16, 0
    %p137 = por %p135, %p136
    %p138 = scmp.le.s32.totalorder 1, %s10
    %p139 = scmp.lt.s32.totalorder %s10, 3
    %p140 = pnand %p138, %p139
    %p141 = pneg %p140
    // Predicated region
    $region9: #{linear_bottleneck_forward.7} parent=5 // pred_check
      _
    $region10: #{linear_bottleneck_forward.7} parent=5 // pred_check_branch
      %143 = sbr.rel (%p140) target = $region12
    $region11: #{linear_bottleneck_forward.7} parent=5 // pred_region
      %s144 = ssub.s32 %s10, 1
      // Predicated region
      $region13: #{linear_bottleneck_forward.7} parent=11 // pred_check
        %p145 = pneg %p57
      $region14: #{linear_bottleneck_forward.7} parent=11 // pred_check_branch
        %147 = sbr.rel (%p145) target = $region16
      $region15: #{linear_bottleneck_forward.7} parent=11 // pred_region
        _
      $region16: #{linear_bottleneck_forward.7} parent=11 // pred_fallthru
        _
      // Predicated region
      $region17: #{linear_bottleneck_forward.7} parent=11 // pred_check
        %p148 = pneg %p78
      $region18: #{linear_bottleneck_forward.7} parent=11 // pred_check_branch
        %150 = sbr.rel (%p148) target = $region20
      $region19: #{linear_bottleneck_forward.7} parent=11 // pred_region
        _
      $region20: #{linear_bottleneck_forward.7} parent=11 // pred_fallthru
        _
    $region12: #{linear_bottleneck_forward.7} parent=5 // pred_fallthru
      _
    %p151 = scmp.lt.s32.totalorder %s10, 2
    // Predicated region
    $region21: #{linear_bottleneck_forward.7} parent=5 // pred_check
      %p152 = pneg %p151
    $region22: #{linear_bottleneck_forward.7} parent=5 // pred_check_branch
      %154 = sbr.rel (%p152) target = $region24
    $region23: #{linear_bottleneck_forward.7} parent=5 // pred_region
      // Predicated region
      $region25: #{linear_bottleneck_forward.7} parent=23 // pred_check
        %p155 = pneg %p30
      $region26: #{linear_bottleneck_forward.7} parent=23 // pred_check_branch
        %157 = sbr.rel (%p155) target = $region28
      $region27: #{linear_bottleneck_forward.7} parent=23 // pred_region
        %s158 = smul.u32 32, %s10
        %p159 = scmp.lt.s32.totalorder %s158, 63
        %s160 = scalar_select %p159, %s158, 63
        %s161 = smul.addr %s160, 8
        %s162 = scalar_lea.vmem %s0, %s161
        %s163 = smul.u32 32, %s10
      $region28: #{linear_bottleneck_forward.7} parent=23 // pred_fallthru
        _
      // Predicated region
      $region29: #{linear_bottleneck_forward.7} parent=23 // pred_check
        %p164 = pneg %p98
      $region30: #{linear_bottleneck_forward.7} parent=23 // pred_check_branch
        %166 = sbr.rel (%p164) target = $region32
      $region31: #{linear_bottleneck_forward.7} parent=23 // pred_region
        %s167 = smul.u32 32, %s10
        %p168 = scmp.lt.s32.totalorder %s167, 63
        %s169 = scalar_select %p168, %s167, 63
        %s170 = smul.addr %s169, 8
        %s171 = scalar_lea.vmem %s3, %s170
        %s172 = smul.u32 32, %s10
      $region32: #{linear_bottleneck_forward.7} parent=23 // pred_fallthru
        _
    $region24: #{linear_bottleneck_forward.7} parent=5 // pred_fallthru
      _
    %p173 = scmp.le.s32.totalorder 1, %s10
    %p174 = scmp.lt.s32.totalorder %s10, 3
    %p175 = pnand %p173, %p174
    %p176 = pneg %p175
    // Predicated region
    $region33: #{linear_bottleneck_forward.7} parent=5 // pred_check
      _
    $region34: #{linear_bottleneck_forward.7} parent=5 // pred_check_branch
      %178 = sbr.rel (%p175) target = $region36
    $region35: #{linear_bottleneck_forward.7} parent=5 // pred_region
      %s179 = ssub.s32 %s10, 1
      %s180 = smul.u32 32, %s15
      %p181 = scmp.lt.s32.totalorder %s180, 63
      %s182 = scalar_select %p181, %s180, 63
      %s183 = smul.addr %s182, 8
      %s184 = scalar_lea.vmem %s0, %s183
      %p185 = pneg %p36
      %p186 = pneg %p33
      %p187 = pneg %p57
      %p188 = pneg %p54
      %p189 = pneg %p78
      %p190 = pneg %p75
      %s191 = smul.u32 32, %s15
      %p192 = scmp.lt.s32.totalorder %s191, 63
      %s193 = scalar_select %p192, %s191, 63
      %s194 = smul.addr %s193, 8
      %s195 = scalar_lea.vmem %s3, %s194
      %p196 = pneg %p104
      %p197 = pneg %p101
      %p198 = pneg %p130
      %p199 = pneg %p127
      %s200 = smul.u32 32, %s15
      %p201 = scmp.lt.s32.totalorder %s200, 63
      %s202 = scalar_select %p201, %s200, 63
      %s203 = smul.addr %s202, 8
      %s204 = scalar_lea.vmem %s4, %s203
      %s205 = smul.u32 32, %s15
      %p206 = scmp.lt.s32.totalorder %s205, 63
      %s207 = scalar_select %p206, %s205, 63
      %s208 = smul.addr %s207, 8
      %s209 = scalar_lea.vmem %s0, %s208
      %s210 = smul.u32 32, %s15
      %s211 = smul.u32 32, %s15
      %p212 = scmp.lt.s32.totalorder %s211, 63
      %s213 = scalar_select %p212, %s211, 63
      %s214 = smul.addr %s213, 8
      %s215 = scalar_lea.vmem %s3, %s214
      %s216 = smul.u32 32, %s15
      %s217 = smul.u32 32, %s15
      %p218 = scmp.lt.s32.totalorder %s217, 63
      %s219 = scalar_select %p218, %s217, 63
      %s220 = smul.addr %s219, 8
      %s221 = scalar_lea.vmem %s4, %s220
      %s222 = smul.u32 32, %s15
      %v223 = vld [vmem:[%s209] sm:$0xff]
      %v224 = vld [vmem:[%s209 + $0x8] sm:$0xff]
      %v225 = vld [vmem:[%s209 + $0x10] sm:$0xff]
      %v226 = vld [vmem:[%s209 + $0x18] sm:$0xff]
      %v227 = vld [vmem:[%s209 + $0x20] sm:$0xff]
      %v228 = vld [vmem:[%s209 + $0x28] sm:$0xff]
      %v229 = vld [vmem:[%s209 + $0x30] sm:$0xff]
      %v230 = vld [vmem:[%s209 + $0x38] sm:$0xff]
      %v231 = vld [vmem:[%s209 + $0x40] sm:$0xff]
      %v232 = vld [vmem:[%s209 + $0x48] sm:$0xff]
      %v233 = vld [vmem:[%s209 + $0x50] sm:$0xff]
      %v234 = vld [vmem:[%s209 + $0x58] sm:$0xff]
      %v235 = vld [vmem:[%s209 + $0x60] sm:$0xff]
      %v236 = vld [vmem:[%s209 + $0x68] sm:$0xff]
      %v237 = vld [vmem:[%s209 + $0x70] sm:$0xff]
      %v238 = vld [vmem:[%s209 + $0x78] sm:$0xff]
      %v239 = vld [vmem:[%s209 + $0x80] sm:$0xff]
      %v240 = vld [vmem:[%s209 + $0x88] sm:$0xff]
      %v241 = vld [vmem:[%s209 + $0x90] sm:$0xff]
      %v242 = vld [vmem:[%s209 + $0x98] sm:$0xff]
      %v243 = vld [vmem:[%s209 + $0xa0] sm:$0xff]
      %v244 = vld [vmem:[%s209 + $0xa8] sm:$0xff]
      %v245 = vld [vmem:[%s209 + $0xb0] sm:$0xff]
      %v246 = vld [vmem:[%s209 + $0xb8] sm:$0xff]
      %v247 = vld [vmem:[%s209 + $0xc0] sm:$0xff]
      %v248 = vld [vmem:[%s209 + $0xc8] sm:$0xff]
      %v249 = vld [vmem:[%s209 + $0xd0] sm:$0xff]
      %v250 = vld [vmem:[%s209 + $0xd8] sm:$0xff]
      %v251 = vld [vmem:[%s209 + $0xe0] sm:$0xff]
      %v252 = vld [vmem:[%s209 + $0xe8] sm:$0xff]
      %v253 = vld [vmem:[%s209 + $0xf0] sm:$0xff]
      %v254 = vld [vmem:[%s209 + $0xf8] sm:$0xff]
      %v255 = vld [vmem:[%s1] sm:$0x1]
      %v257 = vlaneseq
      %v258 = vshrl.u32 %v257, 7
      %v259 = vsub.s32 0, %v258
      %v260 = vrot.slane %v255, %v259
      %v262 = vmul.f32 %v223, %v260
      %v263 = vmul.f32 %v224, %v260
      %v264 = vmul.f32 %v225, %v260
      %v265 = vmul.f32 %v226, %v260
      %v266 = vmul.f32 %v227, %v260
      %v267 = vmul.f32 %v228, %v260
      %v268 = vmul.f32 %v229, %v260
      %v269 = vmul.f32 %v230, %v260
      %v270 = vmul.f32 %v231, %v260
      %v271 = vmul.f32 %v232, %v260
      %v272 = vmul.f32 %v233, %v260
      %v273 = vmul.f32 %v234, %v260
      %v274 = vmul.f32 %v235, %v260
      %v275 = vmul.f32 %v236, %v260
      %v276 = vmul.f32 %v237, %v260
      %v277 = vmul.f32 %v238, %v260
      %v278 = vmul.f32 %v239, %v260
      %v279 = vmul.f32 %v240, %v260
      %v280 = vmul.f32 %v241, %v260
      %v281 = vmul.f32 %v242, %v260
      %v282 = vmul.f32 %v243, %v260
      %v283 = vmul.f32 %v244, %v260
      %v284 = vmul.f32 %v245, %v260
      %v285 = vmul.f32 %v246, %v260
      %v286 = vmul.f32 %v247, %v260
      %v287 = vmul.f32 %v248, %v260
      %v288 = vmul.f32 %v249, %v260
      %v289 = vmul.f32 %v250, %v260
      %v290 = vmul.f32 %v251, %v260
      %v291 = vmul.f32 %v252, %v260
      %v292 = vmul.f32 %v253, %v260
      %v293 = vmul.f32 %v254, %v260
      %v294 = vld [vmem:[%s2] sm:$0x1]
      %v296 = vlaneseq
      %v297 = vshrl.u32 %v296, 7
      %v298 = vsub.s32 0, %v297
      %v299 = vrot.slane %v294, %v298
      %v301 = vadd.f32 %v262, %v299
      %v302 = vadd.f32 %v263, %v299
      %v303 = vadd.f32 %v264, %v299
      %v304 = vadd.f32 %v265, %v299
      %v305 = vadd.f32 %v266, %v299
      %v306 = vadd.f32 %v267, %v299
      %v307 = vadd.f32 %v268, %v299
      %v308 = vadd.f32 %v269, %v299
      %v309 = vadd.f32 %v270, %v299
      %v310 = vadd.f32 %v271, %v299
      %v311 = vadd.f32 %v272, %v299
      %v312 = vadd.f32 %v273, %v299
      %v313 = vadd.f32 %v274, %v299
      %v314 = vadd.f32 %v275, %v299
      %v315 = vadd.f32 %v276, %v299
      %v316 = vadd.f32 %v277, %v299
      %v317 = vadd.f32 %v278, %v299
      %v318 = vadd.f32 %v279, %v299
      %v319 = vadd.f32 %v280, %v299
      %v320 = vadd.f32 %v281, %v299
      %v321 = vadd.f32 %v282, %v299
      %v322 = vadd.f32 %v283, %v299
      %v323 = vadd.f32 %v284, %v299
      %v324 = vadd.f32 %v285, %v299
      %v325 = vadd.f32 %v286, %v299
      %v326 = vadd.f32 %v287, %v299
      %v327 = vadd.f32 %v288, %v299
      %v328 = vadd.f32 %v289, %v299
      %v329 = vadd.f32 %v290, %v299
      %v330 = vadd.f32 %v291, %v299
      %v331 = vadd.f32 %v292, %v299
      %v332 = vadd.f32 %v293, %v299
      %v333 = vld [vmem:[%s215] sm:$0xff]
      %v334 = vld [vmem:[%s215 + $0x8] sm:$0xff]
      %v335 = vld [vmem:[%s215 + $0x10] sm:$0xff]
      %v336 = vld [vmem:[%s215 + $0x18] sm:$0xff]
      %v337 = vld [vmem:[%s215 + $0x20] sm:$0xff]
      %v338 = vld [vmem:[%s215 + $0x28] sm:$0xff]
      %v339 = vld [vmem:[%s215 + $0x30] sm:$0xff]
      %v340 = vld [vmem:[%s215 + $0x38] sm:$0xff]
      %v341 = vld [vmem:[%s215 + $0x40] sm:$0xff]
      %v342 = vld [vmem:[%s215 + $0x48] sm:$0xff]
      %v343 = vld [vmem:[%s215 + $0x50] sm:$0xff]
      %v344 = vld [vmem:[%s215 + $0x58] sm:$0xff]
      %v345 = vld [vmem:[%s215 + $0x60] sm:$0xff]
      %v346 = vld [vmem:[%s215 + $0x68] sm:$0xff]
      %v347 = vld [vmem:[%s215 + $0x70] sm:$0xff]
      %v348 = vld [vmem:[%s215 + $0x78] sm:$0xff]
      %v349 = vld [vmem:[%s215 + $0x80] sm:$0xff]
      %v350 = vld [vmem:[%s215 + $0x88] sm:$0xff]
      %v351 = vld [vmem:[%s215 + $0x90] sm:$0xff]
      %v352 = vld [vmem:[%s215 + $0x98] sm:$0xff]
      %v353 = vld [vmem:[%s215 + $0xa0] sm:$0xff]
      %v354 = vld [vmem:[%s215 + $0xa8] sm:$0xff]
      %v355 = vld [vmem:[%s215 + $0xb0] sm:$0xff]
      %v356 = vld [vmem:[%s215 + $0xb8] sm:$0xff]
      %v357 = vld [vmem:[%s215 + $0xc0] sm:$0xff]
      %v358 = vld [vmem:[%s215 + $0xc8] sm:$0xff]
      %v359 = vld [vmem:[%s215 + $0xd0] sm:$0xff]
      %v360 = vld [vmem:[%s215 + $0xd8] sm:$0xff]
      %v361 = vld [vmem:[%s215 + $0xe0] sm:$0xff]
      %v362 = vld [vmem:[%s215 + $0xe8] sm:$0xff]
      %v363 = vld [vmem:[%s215 + $0xf0] sm:$0xff]
      %v364 = vld [vmem:[%s215 + $0xf8] sm:$0xff]
      %v365 = vadd.f32 %v301, %v333
      %v366 = vadd.f32 %v302, %v334
      %v367 = vadd.f32 %v303, %v335
      %v368 = vadd.f32 %v304, %v336
      %v369 = vadd.f32 %v305, %v337
      %v370 = vadd.f32 %v306, %v338
      %v371 = vadd.f32 %v307, %v339
      %v372 = vadd.f32 %v308, %v340
      %v373 = vadd.f32 %v309, %v341
      %v374 = vadd.f32 %v310, %v342
      %v375 = vadd.f32 %v311, %v343
      %v376 = vadd.f32 %v312, %v344
      %v377 = vadd.f32 %v313, %v345
      %v378 = vadd.f32 %v314, %v346
      %v379 = vadd.f32 %v315, %v347
      %v380 = vadd.f32 %v316, %v348
      %v381 = vadd.f32 %v317, %v349
      %v382 = vadd.f32 %v318, %v350
      %v383 = vadd.f32 %v319, %v351
      %v384 = vadd.f32 %v320, %v352
      %v385 = vadd.f32 %v321, %v353
      %v386 = vadd.f32 %v322, %v354
      %v387 = vadd.f32 %v323, %v355
      %v388 = vadd.f32 %v324, %v356
      %v389 = vadd.f32 %v325, %v357
      %v390 = vadd.f32 %v326, %v358
      %v391 = vadd.f32 %v327, %v359
      %v392 = vadd.f32 %v328, %v360
      %v393 = vadd.f32 %v329, %v361
      %v394 = vadd.f32 %v330, %v362
      %v395 = vadd.f32 %v331, %v363
      %v396 = vadd.f32 %v332, %v364
      %397 = vst [vmem:[%s221] sm:$0xff] %v365
      %398 = vst [vmem:[%s221 + $0x8] sm:$0xff] %v366
      %399 = vst [vmem:[%s221 + $0x10] sm:$0xff] %v367
      %400 = vst [vmem:[%s221 + $0x18] sm:$0xff] %v368
      %401 = vst [vmem:[%s221 + $0x20] sm:$0xff] %v369
      %402 = vst [vmem:[%s221 + $0x28] sm:$0xff] %v370
      %403 = vst [vmem:[%s221 + $0x30] sm:$0xff] %v371
      %404 = vst [vmem:[%s221 + $0x38] sm:$0xff] %v372
      %405 = vst [vmem:[%s221 + $0x40] sm:$0xff] %v373
      %406 = vst [vmem:[%s221 + $0x48] sm:$0xff] %v374
      %407 = vst [vmem:[%s221 + $0x50] sm:$0xff] %v375
      %408 = vst [vmem:[%s221 + $0x58] sm:$0xff] %v376
      %409 = vst [vmem:[%s221 + $0x60] sm:$0xff] %v377
      %410 = vst [vmem:[%s221 + $0x68] sm:$0xff] %v378
      %411 = vst [vmem:[%s221 + $0x70] sm:$0xff] %v379
      %412 = vst [vmem:[%s221 + $0x78] sm:$0xff] %v380
      %413 = vst [vmem:[%s221 + $0x80] sm:$0xff] %v381
      %414 = vst [vmem:[%s221 + $0x88] sm:$0xff] %v382
      %415 = vst [vmem:[%s221 + $0x90] sm:$0xff] %v383
      %416 = vst [vmem:[%s221 + $0x98] sm:$0xff] %v384
      %417 = vst [vmem:[%s221 + $0xa0] sm:$0xff] %v385
      %418 = vst [vmem:[%s221 + $0xa8] sm:$0xff] %v386
      %419 = vst [vmem:[%s221 + $0xb0] sm:$0xff] %v387
      %420 = vst [vmem:[%s221 + $0xb8] sm:$0xff] %v388
      %421 = vst [vmem:[%s221 + $0xc0] sm:$0xff] %v389
      %422 = vst [vmem:[%s221 + $0xc8] sm:$0xff] %v390
      %423 = vst [vmem:[%s221 + $0xd0] sm:$0xff] %v391
      %424 = vst [vmem:[%s221 + $0xd8] sm:$0xff] %v392
      %425 = vst [vmem:[%s221 + $0xe0] sm:$0xff] %v393
      %426 = vst [vmem:[%s221 + $0xe8] sm:$0xff] %v394
      %427 = vst [vmem:[%s221 + $0xf0] sm:$0xff] %v395
      %428 = vst [vmem:[%s221 + $0xf8] sm:$0xff] %v396
      %s429 = smul.u32 32, %s15
      %p430 = scmp.lt.s32.totalorder %s429, 63
      %s431 = scalar_select %p430, %s429, 63
      %s432 = smul.addr %s431, 8
      %s433 = scalar_lea.vmem %s4, %s432
      // Predicated region
      $region37: #{linear_bottleneck_forward.7} parent=35 // pred_check
        %p434 = pneg %p127
      $region38: #{linear_bottleneck_forward.7} parent=35 // pred_check_branch
        %436 = sbr.rel (%p434) target = $region40
      $region39: #{linear_bottleneck_forward.7} parent=35 // pred_region
        %s437 = smul.u32 32, %s15
      $region40: #{linear_bottleneck_forward.7} parent=35 // pred_fallthru
        _
    $region36: #{linear_bottleneck_forward.7} parent=5 // pred_fallthru
      _
    %p438 = scmp.le.s32.totalorder 2, %s10
    // Predicated region
    $region41: #{linear_bottleneck_forward.7} parent=5 // pred_check
      %p439 = pneg %p438
    $region42: #{linear_bottleneck_forward.7} parent=5 // pred_check_branch
      %441 = sbr.rel (%p439) target = $region44
    $region43: #{linear_bottleneck_forward.7} parent=5 // pred_region
      %s442 = ssub.s32 %s10, 2
      // Predicated region
      $region45: #{linear_bottleneck_forward.7} parent=43 // pred_check
        %p443 = pneg %p133
      $region46: #{linear_bottleneck_forward.7} parent=43 // pred_check_branch
        %445 = sbr.rel (%p443) target = $region48
      $region47: #{linear_bottleneck_forward.7} parent=43 // pred_region
        %s446 = smul.u32 32, %s16
        %p447 = scmp.lt.s32.totalorder %s446, 63
        %s448 = scalar_select %p447, %s446, 63
        %s449 = smul.addr %s448, 8
        %s450 = scalar_lea.vmem %s4, %s449
      $region48: #{linear_bottleneck_forward.7} parent=43 // pred_fallthru
        _
    $region44: #{linear_bottleneck_forward.7} parent=5 // pred_fallthru
      _
  $region6: #{linear_bottleneck_forward.7} parent=0 // loop_footer
    %s14 = sadd.s32 1, %s10
  $region7: #{linear_bottleneck_forward.7} parent=0 // loop_footer_branch
    %9 = sbr.rel target = $region3
  $region8: #{linear_bottleneck_forward.7} parent=0 // loop_exit
    _

// kernel: linear_bottleneck_forward.5
$region0: #{linear_bottleneck_forward.5}
  #allocation0 [shape = 'u32[]', space=smem, size = 0x4, offset = 0x4, fixed_abs, tag = 'smem constant byte address 0x4 - core index']
  #allocation1 [shape = 'u32[144,128]{1,0:T(1,128)}', space=vmem, size = 0x12000, scoped, tag = 'internal scratch']
  #allocation2 [shape = 'f32[18,32,128]{2,1,0:T(8,128)}', space=vmem, size = 0x48000, scoped, tag = 'scratch operand']
  %s0 = inlined_call_operand.vmem [shape: f32[512,128], index: 0, kind: input, shape index: {}]
  %s1 = inlined_call_operand.vmem [shape: f32[128,128], index: 1, kind: input, shape index: {}]
  %s2 = inlined_call_operand.vmem [shape: f32[1,128], index: 2, kind: input, shape index: {}]
  %s3 = inlined_call_operand.vmem [shape: f32[1,128], index: 3, kind: input, shape index: {}]
  %s4 = inlined_call_operand.vmem [shape: f32[9,128], index: 4, kind: input, shape index: {}]
  %s5 = inlined_call_operand.vmem [shape: f32[2,16,16,128], index: 5, kind: output, shape index: {0}]
  %s6 = inlined_call_operand.vmem [shape: f32[2,1,128], index: 6, kind: output, shape index: {1}]
  %s7 = inlined_call_operand.vmem [shape: f32[2,1,128], index: 7, kind: output, shape index: {2}]
  %8 = xla_tuple %s5, %s6, %s7
  %s9 = sld [smem:[#allocation0]]
  $region69: #{linear_bottleneck_forward.5} parent=0
    _
  %s11 = ssub.s32 1, %s9
  %s12 = scalar_select 0, %s11, %s9
  loop: start=0, step=1, limit=4
  $region2: #{linear_bottleneck_forward.5} parent=0 // loop_pre_header
    _
  $region3: #{linear_bottleneck_forward.5} parent=0 // loop_header
    %s14 = sphi 0, %s18
    %p15 = scmp.ge.s32.totalorder %s14, 4
    %s24 = sphi 0, %s26
    %s27 = sphi 0, %s24
    %s28 = sphi 0, %s27
    %s44 = sphi 0, %s28
    %s48 = sphi 0, %s48
    %s50 = sphi 0, %s48
    %s51 = sphi 0, %s50
    %s65 = sphi 0, %s51
    %s69 = sphi 0, %s69
    %s71 = sphi 0, %s69
    %s72 = sphi 0, %s71
    %s86 = sphi 0, %s72
    %s90 = sphi 0, %s90
    %s92 = sphi 0, %s90
    %s93 = sphi 0, %s92
    %s107 = sphi 0, %s93
    %s111 = sphi 0, %s111
    %s113 = sphi 0, %s111
    %s114 = sphi 0, %s113
    %s128 = sphi 0, %s114
    %s134 = sphi 0, %s136
    %s137 = sphi 0, %s134
    %s138 = sphi 0, %s137
    %s154 = sphi 0, %s138
    %s160 = sphi 0, %s162
    %s163 = sphi 0, %s160
    %s164 = sphi 0, %s163
    %s180 = sphi 0, %s164
    %s186 = sphi 0, %s188
    %s189 = sphi 0, %s186
    %s190 = sphi 0, %s189
    %s206 = sphi 0, %s190
  $region4: #{linear_bottleneck_forward.5} parent=0 // loop_header_branch
    %17 = sbr.rel (%p15) target = $region8
  $region5: #{linear_bottleneck_forward.5} parent=0 // loop_body
    %s19 = ssub.s32 %s14, 1
    %s20 = ssub.s32 %s14, 2
    %s21 = sadd.s32 %s14, 1
    %s22 = ssub.s32 %s14, %s21
    %p23 = scmp.eq.s32.totalorder %s22, 0
    %s25 = sadd.s32 %s24, 1
    %s26 = scalar_select %p23, %s24, %s25
    %p29 = pneg %p23
    %p30 = scmp.eq.s32.totalorder %s14, 1
    %p31 = por %p29, %p30
    %p32 = scmp.ne.s32.totalorder %s24, %s27
    %p33 = scmp.eq.s32.totalorder %s14, 0
    %p34 = por %p32, %p33
    %p35 = scmp.ne.s32.totalorder %s24, %s27
    %p36 = scmp.eq.s32.totalorder %s19, 1
    %p37 = por %p35, %p36
    %p38 = scmp.ne.s32.totalorder %s27, %s28
    %p39 = scmp.eq.s32.totalorder %s19, 0
    %p40 = por %p38, %p39
    %p41 = scmp.ne.s32.totalorder %s27, %s28
    %p42 = scmp.eq.s32.totalorder %s20, 1
    %p43 = por %p41, %p42
    %p45 = scmp.ne.s32.totalorder %s28, %s44
    %p46 = scmp.eq.s32.totalorder %s20, 0
    %p47 = por %p45, %p46
    %s49 = sadd.s32 %s48, 1
    %p52 = scmp.eq.s32.totalorder %s14, 1
    %p53 = scmp.ne.s32.totalorder %s48, %s50
    %p54 = scmp.eq.s32.totalorder %s14, 0
    %p55 = por %p53, %p54
    %p56 = scmp.ne.s32.totalorder %s48, %s50
    %p57 = scmp.eq.s32.totalorder %s19, 1
    %p58 = por %p56, %p57
    %p59 = scmp.ne.s32.totalorder %s50, %s51
    %p60 = scmp.eq.s32.totalorder %s19, 0
    %p61 = por %p59, %p60
    %p62 = scmp.ne.s32.totalorder %s50, %s51
    %p63 = scmp.eq.s32.totalorder %s20, 1
    %p64 = por %p62, %p63
    %p66 = scmp.ne.s32.totalorder %s51, %s65
    %p67 = scmp.eq.s32.totalorder %s20, 0
    %p68 = por %p66, %p67
    %s70 = sadd.s32 %s69, 1
    %p73 = scmp.eq.s32.totalorder %s14, 1
    %p74 = scmp.ne.s32.totalorder %s69, %s71
    %p75 = scmp.eq.s32.totalorder %s14, 0
    %p76 = por %p74, %p75
    %p77 = scmp.ne.s32.totalorder %s69, %s71
    %p78 = scmp.eq.s32.totalorder %s19, 1
    %p79 = por %p77, %p78
    %p80 = scmp.ne.s32.totalorder %s71, %s72
    %p81 = scmp.eq.s32.totalorder %s19, 0
    %p82 = por %p80, %p81
    %p83 = scmp.ne.s32.totalorder %s71, %s72
    %p84 = scmp.eq.s32.totalorder %s20, 1
    %p85 = por %p83, %p84
    %p87 = scmp.ne.s32.totalorder %s72, %s86
    %p88 = scmp.eq.s32.totalorder %s20, 0
    %p89 = por %p87, %p88
    %s91 = sadd.s32 %s90, 1
    %p94 = scmp.eq.s32.totalorder %s14, 1
    %p95 = scmp.ne.s32.totalorder %s90, %s92
    %p96 = scmp.eq.s32.totalorder %s14, 0
    %p97 = por %p95, %p96
    %p98 = scmp.ne.s32.totalorder %s90, %s92
    %p99 = scmp.eq.s32.totalorder %s19, 1
    %p100 = por %p98, %p99
    %p101 = scmp.ne.s32.totalorder %s92, %s93
    %p102 = scmp.eq.s32.totalorder %s19, 0
    %p103 = por %p101, %p102
    %p104 = scmp.ne.s32.totalorder %s92, %s93
    %p105 = scmp.eq.s32.totalorder %s20, 1
    %p106 = por %p104, %p105
    %p108 = scmp.ne.s32.totalorder %s93, %s107
    %p109 = scmp.eq.s32.totalorder %s20, 0
    %p110 = por %p108, %p109
    %s112 = sadd.s32 %s111, 1
    %p115 = scmp.eq.s32.totalorder %s14, 1
    %p116 = scmp.ne.s32.totalorder %s111, %s113
    %p117 = scmp.eq.s32.totalorder %s14, 0
    %p118 = por %p116, %p117
    %p119 = scmp.ne.s32.totalorder %s111, %s113
    %p120 = scmp.eq.s32.totalorder %s19, 1
    %p121 = por %p119, %p120
    %p122 = scmp.ne.s32.totalorder %s113, %s114
    %p123 = scmp.eq.s32.totalorder %s19, 0
    %p124 = por %p122, %p123
    %p125 = scmp.ne.s32.totalorder %s113, %s114
    %p126 = scmp.eq.s32.totalorder %s20, 1
    %p127 = por %p125, %p126
    %p129 = scmp.ne.s32.totalorder %s114, %s128
    %p130 = scmp.eq.s32.totalorder %s20, 0
    %p131 = por %p129, %p130
    %s132 = ssub.s32 %s14, %s21
    %p133 = scmp.eq.s32.totalorder %s132, 0
    %s135 = sadd.s32 %s134, 1
    %s136 = scalar_select %p133, %s134, %s135
    %p139 = pneg %p133
    %p140 = scmp.eq.s32.totalorder %s14, 1
    %p141 = por %p139, %p140
    %p142 = scmp.ne.s32.totalorder %s134, %s137
    %p143 = scmp.eq.s32.totalorder %s14, 0
    %p144 = por %p142, %p143
    %p145 = scmp.ne.s32.totalorder %s134, %s137
    %p146 = scmp.eq.s32.totalorder %s19, 1
    %p147 = por %p145, %p146
    %p148 = scmp.ne.s32.totalorder %s137, %s138
    %p149 = scmp.eq.s32.totalorder %s19, 0
    %p150 = por %p148, %p149
    %p151 = scmp.ne.s32.totalorder %s137, %s138
    %p152 = scmp.eq.s32.totalorder %s20, 1
    %p153 = por %p151, %p152
    %p155 = scmp.ne.s32.totalorder %s138, %s154
    %p156 = scmp.eq.s32.totalorder %s20, 0
    %p157 = por %p155, %p156
    %s158 = ssub.s32 %s14, %s21
    %p159 = scmp.eq.s32.totalorder %s158, 0
    %s161 = sadd.s32 %s160, 1
    %s162 = scalar_select %p159, %s160, %s161
    %p165 = pneg %p159
    %p166 = scmp.eq.s32.totalorder %s14, 1
    %p167 = por %p165, %p166
    %p168 = scmp.ne.s32.totalorder %s160, %s163
    %p169 = scmp.eq.s32.totalorder %s14, 0
    %p170 = por %p168, %p169
    %p171 = scmp.ne.s32.totalorder %s160, %s163
    %p172 = scmp.eq.s32.totalorder %s19, 1
    %p173 = por %p171, %p172
    %p174 = scmp.ne.s32.totalorder %s163, %s164
    %p175 = scmp.eq.s32.totalorder %s19, 0
    %p176 = por %p174, %p175
    %p177 = scmp.ne.s32.totalorder %s163, %s164
    %p178 = scmp.eq.s32.totalorder %s20, 1
    %p179 = por %p177, %p178
    %p181 = scmp.ne.s32.totalorder %s164, %s180
    %p182 = scmp.eq.s32.totalorder %s20, 0
    %p183 = por %p181, %p182
    %s184 = ssub.s32 %s14, %s21
    %p185 = scmp.eq.s32.totalorder %s184, 0
    %s187 = sadd.s32 %s186, 1
    %s188 = scalar_select %p185, %s186, %s187
    %p191 = pneg %p185
    %p192 = scmp.eq.s32.totalorder %s14, 1
    %p193 = por %p191, %p192
    %p194 = scmp.ne.s32.totalorder %s186, %s189
    %p195 = scmp.eq.s32.totalorder %s14, 0
    %p196 = por %p194, %p195
    %p197 = scmp.ne.s32.totalorder %s186, %s189
    %p198 = scmp.eq.s32.totalorder %s19, 1
    %p199 = por %p197, %p198
    %p200 = scmp.ne.s32.totalorder %s189, %s190
    %p201 = scmp.eq.s32.totalorder %s19, 0
    %p202 = por %p200, %p201
    %p203 = scmp.ne.s32.totalorder %s189, %s190
    %p204 = scmp.eq.s32.totalorder %s20, 1
    %p205 = por %p203, %p204
    %p207 = scmp.ne.s32.totalorder %s190, %s206
    %p208 = scmp.eq.s32.totalorder %s20, 0
    %p209 = por %p207, %p208
    %p210 = scmp.le.s32.totalorder 1, %s14
    %p211 = scmp.lt.s32.totalorder %s14, 3
    %p212 = pnand %p210, %p211
    %p213 = pneg %p212
    // Predicated region
    $region9: #{linear_bottleneck_forward.5} parent=5 // pred_check
      _
    $region10: #{linear_bottleneck_forward.5} parent=5 // pred_check_branch
      %215 = sbr.rel (%p212) target = $region12
    $region11: #{linear_bottleneck_forward.5} parent=5 // pred_region
      %s216 = ssub.s32 %s14, 1
      // Predicated region
      $region13: #{linear_bottleneck_forward.5} parent=11 // pred_check
        %p217 = pneg %p61
      $region14: #{linear_bottleneck_forward.5} parent=11 // pred_check_branch
        %219 = sbr.rel (%p217) target = $region16
      $region15: #{linear_bottleneck_forward.5} parent=11 // pred_region
        _
      $region16: #{linear_bottleneck_forward.5} parent=11 // pred_fallthru
        _
      // Predicated region
      $region17: #{linear_bottleneck_forward.5} parent=11 // pred_check
        %p220 = pneg %p82
      $region18: #{linear_bottleneck_forward.5} parent=11 // pred_check_branch
        %222 = sbr.rel (%p220) target = $region20
      $region19: #{linear_bottleneck_forward.5} parent=11 // pred_region
        _
      $region20: #{linear_bottleneck_forward.5} parent=11 // pred_fallthru
        _
      // Predicated region
      $region21: #{linear_bottleneck_forward.5} parent=11 // pred_check
        %p223 = pneg %p103
      $region22: #{linear_bottleneck_forward.5} parent=11 // pred_check_branch
        %225 = sbr.rel (%p223) target = $region24
      $region23: #{linear_bottleneck_forward.5} parent=11 // pred_region
        _
      $region24: #{linear_bottleneck_forward.5} parent=11 // pred_fallthru
        _
      // Predicated region
      $region25: #{linear_bottleneck_forward.5} parent=11 // pred_check
        %p226 = pneg %p124
      $region26: #{linear_bottleneck_forward.5} parent=11 // pred_check_branch
        %228 = sbr.rel (%p226) target = $region28
      $region27: #{linear_bottleneck_forward.5} parent=11 // pred_region
        _
      $region28: #{linear_bottleneck_forward.5} parent=11 // pred_fallthru
        _
    $region12: #{linear_bottleneck_forward.5} parent=5 // pred_fallthru
      _
    %p229 = scmp.lt.s32.totalorder %s14, 2
    // Predicated region
    $region29: #{linear_bottleneck_forward.5} parent=5 // pred_check
      %p230 = pneg %p229
    $region30: #{linear_bottleneck_forward.5} parent=5 // pred_check_branch
      %232 = sbr.rel (%p230) target = $region32
    $region31: #{linear_bottleneck_forward.5} parent=5 // pred_region
      // Predicated region
      $region33: #{linear_bottleneck_forward.5} parent=31 // pred_check
        %p233 = pneg %p34
      $region34: #{linear_bottleneck_forward.5} parent=31 // pred_check_branch
        %235 = sbr.rel (%p233) target = $region36
      $region35: #{linear_bottleneck_forward.5} parent=31 // pred_region
        %s236 = smul.u32 32, %s14
        %p237 = scmp.lt.s32.totalorder %s236, 63
        %s238 = scalar_select %p237, %s236, 63
        %s239 = smul.addr %s238, 8
        %s240 = scalar_lea.vmem %s0, %s239
        %s241 = smul.u32 32, %s14
      $region36: #{linear_bottleneck_forward.5} parent=31 // pred_fallthru
        _
    $region32: #{linear_bottleneck_forward.5} parent=5 // pred_fallthru
      _
    %p242 = scmp.le.s32.totalorder 1, %s14
    %p243 = scmp.lt.s32.totalorder %s14, 3
    %p244 = pnand %p242, %p243
    %p245 = pneg %p244
    // Predicated region
    $region37: #{linear_bottleneck_forward.5} parent=5 // pred_check
      _
    $region38: #{linear_bottleneck_forward.5} parent=5 // pred_check_branch
      %247 = sbr.rel (%p244) target = $region40
    $region39: #{linear_bottleneck_forward.5} parent=5 // pred_region
      %s248 = ssub.s32 %s14, 1
      %s249 = smul.u32 32, %s19
      %p250 = scmp.lt.s32.totalorder %s249, 63
      %s251 = scalar_select %p250, %s249, 63
      %s252 = smul.addr %s251, 8
      %s253 = scalar_lea.vmem %s0, %s252
      %p254 = pneg %p40
      %p255 = pneg %p37
      %p256 = pneg %p61
      %p257 = pneg %p58
      %p258 = pneg %p82
      %p259 = pneg %p79
      %p260 = pneg %p103
      %p261 = pneg %p100
      %p262 = pneg %p124
      %p263 = pneg %p121
      %p264 = pneg %p150
      %p265 = pneg %p147
      %p266 = scmp.lt.s32.totalorder %s19, 1
      %s267 = scalar_select %p266, %s19, 1
      %s268 = smul.addr %s267, 32
      %s269 = smul.addr %s268, 8
      %s270 = scalar_lea.vmem %s5, %s269
      %p271 = pneg %p176
      %p272 = pneg %p173
      %p273 = scmp.lt.s32.totalorder %s19, 1
      %s274 = scalar_select %p273, %s19, 1
      %s275 = scalar_lea.vmem %s6, %s274
      %p276 = pneg %p202
      %p277 = pneg %p199
      %p278 = scmp.lt.s32.totalorder %s19, 1
      %s279 = scalar_select %p278, %s19, 1
      %s280 = scalar_lea.vmem %s7, %s279
      %s281 = smul.u32 32, %s19
      %p282 = scmp.lt.s32.totalorder %s281, 63
      %s283 = scalar_select %p282, %s281, 63
      %s284 = smul.addr %s283, 8
      %s285 = scalar_lea.vmem %s0, %s284
      %s286 = smul.u32 32, %s19
      %p287 = scmp.lt.s32.totalorder %s19, 1
      %s288 = scalar_select %p287, %s19, 1
      %s289 = smul.addr %s288, 32
      %s290 = smul.addr %s289, 8
      %s291 = scalar_lea.vmem %s5, %s290
      %p292 = scmp.lt.s32.totalorder %s19, 1
      %s293 = scalar_select %p292, %s19, 1
      %s294 = scalar_lea.vmem %s6, %s293
      %p295 = scmp.lt.s32.totalorder %s19, 1
      %s296 = scalar_select %p295, %s19, 1
      %s297 = scalar_lea.vmem %s7, %s296
      %v298 = vld [vmem:[%s285] sm:$0xff]
      %v299 = vld [vmem:[%s285 + $0x8] sm:$0xff]
      %v300 = vld [vmem:[%s285 + $0x10] sm:$0xff]
      %v301 = vld [vmem:[%s285 + $0x18] sm:$0xff]
      %v302 = vld [vmem:[%s285 + $0x20] sm:$0xff]
      %v303 = vld [vmem:[%s285 + $0x28] sm:$0xff]
      %v304 = vld [vmem:[%s285 + $0x30] sm:$0xff]
      %v305 = vld [vmem:[%s285 + $0x38] sm:$0xff]
      %v306 = vld [vmem:[%s285 + $0x40] sm:$0xff]
      %v307 = vld [vmem:[%s285 + $0x48] sm:$0xff]
      %v308 = vld [vmem:[%s285 + $0x50] sm:$0xff]
      %v309 = vld [vmem:[%s285 + $0x58] sm:$0xff]
      %v310 = vld [vmem:[%s285 + $0x60] sm:$0xff]
      %v311 = vld [vmem:[%s285 + $0x68] sm:$0xff]
      %v312 = vld [vmem:[%s285 + $0x70] sm:$0xff]
      %v313 = vld [vmem:[%s285 + $0x78] sm:$0xff]
      %v314 = vld [vmem:[%s285 + $0x80] sm:$0xff]
      %v315 = vld [vmem:[%s285 + $0x88] sm:$0xff]
      %v316 = vld [vmem:[%s285 + $0x90] sm:$0xff]
      %v317 = vld [vmem:[%s285 + $0x98] sm:$0xff]
      %v318 = vld [vmem:[%s285 + $0xa0] sm:$0xff]
      %v319 = vld [vmem:[%s285 + $0xa8] sm:$0xff]
      %v320 = vld [vmem:[%s285 + $0xb0] sm:$0xff]
      %v321 = vld [vmem:[%s285 + $0xb8] sm:$0xff]
      %v322 = vld [vmem:[%s285 + $0xc0] sm:$0xff]
      %v323 = vld [vmem:[%s285 + $0xc8] sm:$0xff]
      %v324 = vld [vmem:[%s285 + $0xd0] sm:$0xff]
      %v325 = vld [vmem:[%s285 + $0xd8] sm:$0xff]
      %v326 = vld [vmem:[%s285 + $0xe0] sm:$0xff]
      %v327 = vld [vmem:[%s285 + $0xe8] sm:$0xff]
      %v328 = vld [vmem:[%s285 + $0xf0] sm:$0xff]
      %v329 = vld [vmem:[%s285 + $0xf8] sm:$0xff]
      %v330 = vld [vmem:[%s1] sm:$0xff]
      %v331 = vld [vmem:[%s1 + $0x8] sm:$0xff]
      %v332 = vld [vmem:[%s1 + $0x10] sm:$0xff]
      %v333 = vld [vmem:[%s1 + $0x18] sm:$0xff]
      %v334 = vld [vmem:[%s1 + $0x20] sm:$0xff]
      %v335 = vld [vmem:[%s1 + $0x28] sm:$0xff]
      %v336 = vld [vmem:[%s1 + $0x30] sm:$0xff]
      %v337 = vld [vmem:[%s1 + $0x38] sm:$0xff]
      %v338 = vld [vmem:[%s1 + $0x40] sm:$0xff]
      %v339 = vld [vmem:[%s1 + $0x48] sm:$0xff]
      %v340 = vld [vmem:[%s1 + $0x50] sm:$0xff]
      %v341 = vld [vmem:[%s1 + $0x58] sm:$0xff]
      %v342 = vld [vmem:[%s1 + $0x60] sm:$0xff]
      %v343 = vld [vmem:[%s1 + $0x68] sm:$0xff]
      %v344 = vld [vmem:[%s1 + $0x70] sm:$0xff]
      %v345 = vld [vmem:[%s1 + $0x78] sm:$0xff]
      %346 = vmatprep.subr.mxu0 0.0
      %347 = vmatpush1.msra.mxu0 %v330
      %348 = vmatprep.subr.mxu0 0.0
      %349 = vmatpush1.msra.mxu0 %v331
      %350 = vmatprep.subr.mxu0 0.0
      %351 = vmatpush1.msra.mxu0 %v332
      %352 = vmatprep.subr.mxu0 0.0
      %353 = vmatpush1.msra.mxu0 %v333
      %354 = vmatprep.subr.mxu0 0.0
      %355 = vmatpush1.msra.mxu0 %v334
      %356 = vmatprep.subr.mxu0 0.0
      %357 = vmatpush1.msra.mxu0 %v335
      %358 = vmatprep.subr.mxu0 0.0
      %359 = vmatpush1.msra.mxu0 %v336
      %360 = vmatprep.subr.mxu0 0.0
      %361 = vmatpush1.msra.mxu0 %v337
      %362 = vmatprep.subr.mxu0 0.0
      %363 = vmatpush1.msra.mxu0 %v338
      %364 = vmatprep.subr.mxu0 0.0
      %365 = vmatpush1.msra.mxu0 %v339
      %366 = vmatprep.subr.mxu0 0.0
      %367 = vmatpush1.msra.mxu0 %v340
      %368 = vmatprep.subr.mxu0 0.0
      %369 = vmatpush1.msra.mxu0 %v341
      %370 = vmatprep.subr.mxu0 0.0
      %371 = vmatpush1.msra.mxu0 %v342
      %372 = vmatprep.subr.mxu0 0.0
      %373 = vmatpush1.msra.mxu0 %v343
      %374 = vmatprep.subr.mxu0 0.0
      %375 = vmatpush1.msra.mxu0 %v344
      %376 = vmatprep.subr.mxu0 0.0
      %377 = vmatpush1.msra.mxu0 %v345
      %378 = vmatprep.subr.mxu0 0.0
      %379 = vmatpush1.msra.mxu0 0.0
      %380 = vmatprep.subr.mxu0 0.0
      %381 = vmatpush1.msra.mxu0 0.0
      %382 = vmatprep.subr.mxu0 0.0
      %383 = vmatpush1.msra.mxu0 0.0
      %384 = vmatprep.subr.mxu0 0.0
      %385 = vmatpush1.msra.mxu0 0.0
      %386 = vmatprep.subr.mxu0 0.0
      %387 = vmatpush1.msra.mxu0 0.0
      %388 = vmatprep.subr.mxu0 0.0
      %389 = vmatpush1.msra.mxu0 0.0
      %390 = vmatprep.subr.mxu0 0.0
      %391 = vmatpush1.msra.mxu0 0.0
      %392 = vmatprep.subr.mxu0 0.0
      %393 = vmatpush1.msra.mxu0 0.0
      %394 = vmatprep.subr.mxu0 0.0
      %395 = vmatpush1.msra.mxu0 0.0
      %396 = vmatprep.subr.mxu0 0.0
      %397 = vmatpush1.msra.mxu0 0.0
      %398 = vmatprep.subr.mxu0 0.0
      %399 = vmatpush1.msra.mxu0 0.0
      %400 = vmatprep.subr.mxu0 0.0
      %401 = vmatpush1.msra.mxu0 0.0
      %402 = vmatprep.subr.mxu0 0.0
      %403 = vmatpush1.msra.mxu0 0.0
      %404 = vmatprep.subr.mxu0 0.0
      %405 = vmatpush1.msra.mxu0 0.0
      %406 = vmatprep.subr.mxu0 0.0
      %407 = vmatpush1.msra.mxu0 0.0
      %408 = vmatprep.subr.mxu0 0.0
      %409 = vmatpush1.msra.mxu0 0.0
      %410 = vmatprep.mubr.f32.mxu0 0.0
      %411 = vmatmul.mubr.f32.gmra.mrb[0].mxu0 %v298
      %v412 = vpop.f32.mrb[0].mxu0
      %v413 = vadd.f32 0.0, %v412
      %v414 = vpop.f32.mrb[0].mxu0
      %415 = vmatprep.mubr.f32.mxu0 0.0
      %416 = vmatmul.mubr.f32.gmra.mrb[0].mxu0 %v299
      %v417 = vpop.f32.mrb[0].mxu0
      %v418 = vadd.f32 0.0, %v417
      %v419 = vpop.f32.mrb[0].mxu0
      %420 = vmatprep.mubr.f32.mxu0 0.0
      %421 = vmatmul.mubr.f32.gmra.mrb[0].mxu0 %v300
      %v422 = vpop.f32.mrb[0].mxu0
      %v423 = vadd.f32 0.0, %v422
      %v424 = vpop.f32.mrb[0].mxu0
      %425 = vmatprep.mubr.f32.mxu0 0.0
      %426 = vmatmul.mubr.f32.gmra.mrb[0].mxu0 %v301
      %v427 = vpop.f32.mrb[0].mxu0
      %v428 = vadd.f32 0.0, %v427
      %v429 = vpop.f32.mrb[0].mxu0
      %430 = vmatprep.mubr.f32.mxu0 0.0
      %431 = vmatmul.mubr.f32.gmra.mrb[0].mxu0 %v302
      %v432 = vpop.f32.mrb[0].mxu0
      %v433 = vadd.f32 0.0, %v432
      %v434 = vpop.f32.mrb[0].mxu0
      %435 = vmatprep.mubr.f32.mxu0 0.0
      %436 = vmatmul.mubr.f32.gmra.mrb[0].mxu0 %v303
      %v437 = vpop.f32.mrb[0].mxu0
      %v438 = vadd.f32 0.0, %v437
      %v439 = vpop.f32.mrb[0].mxu0
      %440 = vmatprep.mubr.f32.mxu0 0.0
      %441 = vmatmul.mubr.f32.gmra.mrb[0].mxu0 %v304
      %v442 = vpop.f32.mrb[0].mxu0
      %v443 = vadd.f32 0.0, %v442
      %v444 = vpop.f32.mrb[0].mxu0
      %445 = vmatprep.mubr.f32.mxu0 0.0
      %446 = vmatmul.mubr.f32.gmra.mrb[0].mxu0 %v305
      %v447 = vpop.f32.mrb[0].mxu0
      %v448 = vadd.f32 0.0, %v447
      %v449 = vpop.f32.mrb[0].mxu0
      %450 = vmatprep.mubr.f32.mxu0 0.0
      %451 = vmatmul.mubr.f32.gmra.mrb[0].mxu0 %v306
      %v452 = vpop.f32.mrb[0].mxu0
      %v453 = vadd.f32 0.0, %v452
      %v454 = vpop.f32.mrb[0].mxu0
      %455 = vmatprep.mubr.f32.mxu0 0.0
      %456 = vmatmul.mubr.f32.gmra.mrb[0].mxu0 %v307
      %v457 = vpop.f32.mrb[0].mxu0
      %v458 = vadd.f32 0.0, %v457
      %v459 = vpop.f32.mrb[0].mxu0
      %460 = vmatprep.mubr.f32.mxu0 0.0
      %461 = vmatmul.mubr.f32.gmra.mrb[0].mxu0 %v308
      %v462 = vpop.f32.mrb[0].mxu0
      %v463 = vadd.f32 0.0, %v462
      %v464 = vpop.f32.mrb[0].mxu0
      %465 = vmatprep.mubr.f32.mxu0 0.0
      %466 = vmatmul.mubr.f32.gmra.mrb[0].mxu0 %v309
      %v467 = vpop.f32.mrb[0].mxu0
      %v468 = vadd.f32 0.0, %v467
      %v469 = vpop.f32.mrb[0].mxu0
      %470 = vmatprep.mubr.f32.mxu0 0.0
      %471 = vmatmul.mubr.f32.gmra.mrb[0].mxu0 %v310
      %v472 = vpop.f32.mrb[0].mxu0
      %v473 = vadd.f32 0.0, %v472
      %v474 = vpop.f32.mrb[0].mxu0
      %475 = vmatprep.mubr.f32.mxu0 0.0
      %476 = vmatmul.mubr.f32.gmra.mrb[0].mxu0 %v311
      %v477 = vpop.f32.mrb[0].mxu0
      %v478 = vadd.f32 0.0, %v477
      %v479 = vpop.f32.mrb[0].mxu0
      %480 = vmatprep.mubr.f32.mxu0 0.0
      %481 = vmatmul.mubr.f32.gmra.mrb[0].mxu0 %v312
      %v482 = vpop.f32.mrb[0].mxu0
      %v483 = vadd.f32 0.0, %v482
      %v484 = vpop.f32.mrb[0].mxu0
      %485 = vmatprep.mubr.f32.mxu0 0.0
      %486 = vmatmul.mubr.f32.gmra.mrb[0].mxu0 %v313
      %v487 = vpop.f32.mrb[0].mxu0
      %v488 = vadd.f32 0.0, %v487
      %v489 = vpop.f32.mrb[0].mxu0
      %490 = vmatprep.mubr.f32.mxu0 0.0
      %491 = vmatmul.mubr.f32.gmra.mrb[0].mxu0 %v314
      %v492 = vpop.f32.mrb[0].mxu0
      %v493 = vadd.f32 0.0, %v492
      %v494 = vpop.f32.mrb[0].mxu0
      %495 = vmatprep.mubr.f32.mxu0 0.0
      %496 = vmatmul.mubr.f32.gmra.mrb[0].mxu0 %v315
      %v497 = vpop.f32.mrb[0].mxu0
      %v498 = vadd.f32 0.0, %v497
      %v499 = vpop.f32.mrb[0].mxu0
      %500 = vmatprep.mubr.f32.mxu0 0.0
      %501 = vmatmul.mubr.f32.gmra.mrb[0].mxu0 %v316
      %v502 = vpop.f32.mrb[0].mxu0
      %v503 = vadd.f32 0.0, %v502
      %v504 = vpop.f32.mrb[0].mxu0
      %505 = vmatprep.mubr.f32.mxu0 0.0
      %506 = vmatmul.mubr.f32.gmra.mrb[0].mxu0 %v317
      %v507 = vpop.f32.mrb[0].mxu0
      %v508 = vadd.f32 0.0, %v507
      %v509 = vpop.f32.mrb[0].mxu0
      %510 = vmatprep.mubr.f32.mxu0 0.0
      %511 = vmatmul.mubr.f32.gmra.mrb[0].mxu0 %v318
      %v512 = vpop.f32.mrb[0].mxu0
      %v513 = vadd.f32 0.0, %v512
      %v514 = vpop.f32.mrb[0].mxu0
      %515 = vmatprep.mubr.f32.mxu0 0.0
      %516 = vmatmul.mubr.f32.gmra.mrb[0].mxu0 %v319
      %v517 = vpop.f32.mrb[0].mxu0
      %v518 = vadd.f32 0.0, %v517
      %v519 = vpop.f32.mrb[0].mxu0
      %520 = vmatprep.mubr.f32.mxu0 0.0
      %521 = vmatmul.mubr.f32.gmra.mrb[0].mxu0 %v320
      %v522 = vpop.f32.mrb[0].mxu0
      %v523 = vadd.f32 0.0, %v522
      %v524 = vpop.f32.mrb[0].mxu0
      %525 = vmatprep.mubr.f32.mxu0 0.0
      %526 = vmatmul.mubr.f32.gmra.mrb[0].mxu0 %v321
      %v527 = vpop.f32.mrb[0].mxu0
      %v528 = vadd.f32 0.0, %v527
      %v529 = vpop.f32.mrb[0].mxu0
      %530 = vmatprep.mubr.f32.mxu0 0.0
      %531 = vmatmul.mubr.f32.gmra.mrb[0].mxu0 %v322
      %v532 = vpop.f32.mrb[0].mxu0
      %v533 = vadd.f32 0.0, %v532
      %v534 = vpop.f32.mrb[0].mxu0
      %535 = vmatprep.mubr.f32.mxu0 0.0
      %536 = vmatmul.mubr.f32.gmra.mrb[0].mxu0 %v323
      %v537 = vpop.f32.mrb[0].mxu0
      %v538 = vadd.f32 0.0, %v537
      %v539 = vpop.f32.mrb[0].mxu0
      %540 = vmatprep.mubr.f32.mxu0 0.0
      %541 = vmatmul.mubr.f32.gmra.mrb[0].mxu0 %v324
      %v542 = vpop.f32.mrb[0].mxu0
      %v543 = vadd.f32 0.0, %v542
      %v544 = vpop.f32.mrb[0].mxu0
      %545 = vmatprep.mubr.f32.mxu0 0.0
      %546 = vmatmul.mubr.f32.gmra.mrb[0].mxu0 %v325
      %v547 = vpop.f32.mrb[0].mxu0
      %v548 = vadd.f32 0.0, %v547
      %v549 = vpop.f32.mrb[0].mxu0
      %550 = vmatprep.mubr.f32.mxu0 0.0
      %551 = vmatmul.mubr.f32.gmra.mrb[0].mxu0 %v326
      %v552 = vpop.f32.mrb[0].mxu0
      %v553 = vadd.f32 0.0, %v552
      %v554 = vpop.f32.mrb[0].mxu0
      %555 = vmatprep.mubr.f32.mxu0 0.0
      %556 = vmatmul.mubr.f32.gmra.mrb[0].mxu0 %v327
      %v557 = vpop.f32.mrb[0].mxu0
      %v558 = vadd.f32 0.0, %v557
      %v559 = vpop.f32.mrb[0].mxu0
      %560 = vmatprep.mubr.f32.mxu0 0.0
      %561 = vmatmul.mubr.f32.gmra.mrb[0].mxu0 %v328
      %v562 = vpop.f32.mrb[0].mxu0
      %v563 = vadd.f32 0.0, %v562
      %v564 = vpop.f32.mrb[0].mxu0
      %565 = vmatprep.mubr.f32.mxu0 0.0
      %566 = vmatmul.mubr.f32.gmra.mrb[0].mxu0 %v329
      %v567 = vpop.f32.mrb[0].mxu0
      %v568 = vadd.f32 0.0, %v567
      %v569 = vpop.f32.mrb[0].mxu0
      %570 = vdwg.mxu0
      %v571 = vld [vmem:[%s2] sm:$0x1]
      %v573 = vlaneseq
      %v574 = vshrl.u32 %v573, 7
      %v575 = vsub.s32 0, %v574
      %v576 = vrot.slane %v571, %v575
      %v578 = vmul.f32 %v413, %v576
      %v579 = vmul.f32 %v418, %v576
      %v580 = vmul.f32 %v423, %v576
      %v581 = vmul.f32 %v428, %v576
      %v582 = vmul.f32 %v433, %v576
      %v583 = vmul.f32 %v438, %v576
      %v584 = vmul.f32 %v443, %v576
      %v585 = vmul.f32 %v448, %v576
      %v586 = vmul.f32 %v453, %v576
      %v587 = vmul.f32 %v458, %v576
      %v588 = vmul.f32 %v463, %v576
      %v589 = vmul.f32 %v468, %v576
      %v590 = vmul.f32 %v473, %v576
      %v591 = vmul.f32 %v478, %v576
      %v592 = vmul.f32 %v483, %v576
      %v593 = vmul.f32 %v488, %v576
      %v594 = vmul.f32 %v493, %v576
      %v595 = vmul.f32 %v498, %v576
      %v596 = vmul.f32 %v503, %v576
      %v597 = vmul.f32 %v508, %v576
      %v598 = vmul.f32 %v513, %v576
      %v599 = vmul.f32 %v518, %v576
      %v600 = vmul.f32 %v523, %v576
      %v601 = vmul.f32 %v528, %v576
      %v602 = vmul.f32 %v533, %v576
      %v603 = vmul.f32 %v538, %v576
      %v604 = vmul.f32 %v543, %v576
      %v605 = vmul.f32 %v548, %v576
      %v606 = vmul.f32 %v553, %v576
      %v607 = vmul.f32 %v558, %v576
      %v608 = vmul.f32 %v563, %v576
      %v609 = vmul.f32 %v568, %v576
      %v610 = vld [vmem:[%s3] sm:$0x1]
      %v612 = vlaneseq
      %v613 = vshrl.u32 %v612, 7
      %v614 = vsub.s32 0, %v613
      %v615 = vrot.slane %v610, %v614
      %v617 = vadd.f32 %v578, %v615
      %v618 = vadd.f32 %v579, %v615
      %v619 = vadd.f32 %v580, %v615
      %v620 = vadd.f32 %v581, %v615
      %v621 = vadd.f32 %v582, %v615
      %v622 = vadd.f32 %v583, %v615
      %v623 = vadd.f32 %v584, %v615
      %v624 = vadd.f32 %v585, %v615
      %v625 = vadd.f32 %v586, %v615
      %v626 = vadd.f32 %v587, %v615
      %v627 = vadd.f32 %v588, %v615
      %v628 = vadd.f32 %v589, %v615
      %v629 = vadd.f32 %v590, %v615
      %v630 = vadd.f32 %v591, %v615
      %v631 = vadd.f32 %v592, %v615
      %v632 = vadd.f32 %v593, %v615
      %v633 = vadd.f32 %v594, %v615
      %v634 = vadd.f32 %v595, %v615
      %v635 = vadd.f32 %v596, %v615
      %v636 = vadd.f32 %v597, %v615
      %v637 = vadd.f32 %v598, %v615
      %v638 = vadd.f32 %v599, %v615
      %v639 = vadd.f32 %v600, %v615
      %v640 = vadd.f32 %v601, %v615
      %v641 = vadd.f32 %v602, %v615
      %v642 = vadd.f32 %v603, %v615
      %v643 = vadd.f32 %v604, %v615
      %v644 = vadd.f32 %v605, %v615
      %v645 = vadd.f32 %v606, %v615
      %v646 = vadd.f32 %v607, %v615
      %v647 = vadd.f32 %v608, %v615
      %v648 = vadd.f32 %v609, %v615
      %v649 = vmax.f32 %v617, 0.0
      %v650 = vmax.f32 %v618, 0.0
      %v651 = vmax.f32 %v619, 0.0
      %v652 = vmax.f32 %v620, 0.0
      %v653 = vmax.f32 %v621, 0.0
      %v654 = vmax.f32 %v622, 0.0
      %v655 = vmax.f32 %v623, 0.0
      %v656 = vmax.f32 %v624, 0.0
      %v657 = vmax.f32 %v625, 0.0
      %v658 = vmax.f32 %v626, 0.0
      %v659 = vmax.f32 %v627, 0.0
      %v660 = vmax.f32 %v628, 0.0
      %v661 = vmax.f32 %v629, 0.0
      %v662 = vmax.f32 %v630, 0.0
      %v663 = vmax.f32 %v631, 0.0
      %v664 = vmax.f32 %v632, 0.0
      %v665 = vmax.f32 %v633, 0.0
      %v666 = vmax.f32 %v634, 0.0
      %v667 = vmax.f32 %v635, 0.0
      %v668 = vmax.f32 %v636, 0.0
      %v669 = vmax.f32 %v637, 0.0
      %v670 = vmax.f32 %v638, 0.0
      %v671 = vmax.f32 %v639, 0.0
      %v672 = vmax.f32 %v640, 0.0
      %v673 = vmax.f32 %v641, 0.0
      %v674 = vmax.f32 %v642, 0.0
      %v675 = vmax.f32 %v643, 0.0
      %v676 = vmax.f32 %v644, 0.0
      %v677 = vmax.f32 %v645, 0.0
      %v678 = vmax.f32 %v646, 0.0
      %v679 = vmax.f32 %v647, 0.0
      %v680 = vmax.f32 %v648, 0.0
      %v681 = vmin.f32 %v649, 6.0
      %v682 = vmin.f32 %v650, 6.0
      %v683 = vmin.f32 %v651, 6.0
      %v684 = vmin.f32 %v652, 6.0
      %v685 = vmin.f32 %v653, 6.0
      %v686 = vmin.f32 %v654, 6.0
      %v687 = vmin.f32 %v655, 6.0
      %v688 = vmin.f32 %v656, 6.0
      %v689 = vmin.f32 %v657, 6.0
      %v690 = vmin.f32 %v658, 6.0
      %v691 = vmin.f32 %v659, 6.0
      %v692 = vmin.f32 %v660, 6.0
      %v693 = vmin.f32 %v661, 6.0
      %v694 = vmin.f32 %v662, 6.0
      %v695 = vmin.f32 %v663, 6.0
      %v696 = vmin.f32 %v664, 6.0
      %v697 = vmin.f32 %v665, 6.0
      %v698 = vmin.f32 %v666, 6.0
      %v699 = vmin.f32 %v667, 6.0
      %v700 = vmin.f32 %v668, 6.0
      %v701 = vmin.f32 %v669, 6.0
      %v702 = vmin.f32 %v670, 6.0
      %v703 = vmin.f32 %v671, 6.0
      %v704 = vmin.f32 %v672, 6.0
      %v705 = vmin.f32 %v673, 6.0
      %v706 = vmin.f32 %v674, 6.0
      %v707 = vmin.f32 %v675, 6.0
      %v708 = vmin.f32 %v676, 6.0
      %v709 = vmin.f32 %v677, 6.0
      %v710 = vmin.f32 %v678, 6.0
      %v711 = vmin.f32 %v679, 6.0
      %v712 = vmin.f32 %v680, 6.0
      %713 = vst [vmem:[#allocation2] sm:$0xff] 0.0
      %714 = vst [vmem:[#allocation2 + $0x8] sm:$0xff] 0.0
      %715 = vst [vmem:[#allocation2 + $0x10] sm:$0xff] 0.0
      %716 = vst [vmem:[#allocation2 + $0x18] sm:$0xff] 0.0
      %717 = vst [vmem:[#allocation2 + $0x20] sm:$0xff] 0.0
      %718 = vst [vmem:[#allocation2 + $0x28] sm:$0xff] 0.0
      %719 = vst [vmem:[#allocation2 + $0x30] sm:$0xff] 0.0
      %720 = vst [vmem:[#allocation2 + $0x38] sm:$0xff] 0.0
      %721 = vst [vmem:[#allocation2 + $0x40] sm:$0xff] 0.0
      %722 = vst [vmem:[#allocation2 + $0x48] sm:$0xff] 0.0
      %723 = vst [vmem:[#allocation2 + $0x50] sm:$0xff] 0.0
      %724 = vst [vmem:[#allocation2 + $0x58] sm:$0xff] 0.0
      %725 = vst [vmem:[#allocation2 + $0x60] sm:$0xff] 0.0
      %726 = vst [vmem:[#allocation2 + $0x68] sm:$0xff] 0.0
      %727 = vst [vmem:[#allocation2 + $0x70] sm:$0xff] 0.0
      %728 = vst [vmem:[#allocation2 + $0x78] sm:$0xff] 0.0
      %729 = vst [vmem:[#allocation2 + $0x80] sm:$0xff] 0.0
      %730 = vst [vmem:[#allocation2 + $0x88] sm:$0xff] 0.0
      %731 = vst [vmem:[#allocation2 + $0x90] sm:$0xff] 0.0
      %732 = vst [vmem:[#allocation2 + $0x98] sm:$0xff] 0.0
      %733 = vst [vmem:[#allocation2 + $0xa0] sm:$0xff] 0.0
      %734 = vst [vmem:[#allocation2 + $0xa8] sm:$0xff] 0.0
      %735 = vst [vmem:[#allocation2 + $0xb0] sm:$0xff] 0.0
      %736 = vst [vmem:[#allocation2 + $0xb8] sm:$0xff] 0.0
      %737 = vst [vmem:[#allocation2 + $0xc0] sm:$0xff] 0.0
      %738 = vst [vmem:[#allocation2 + $0xc8] sm:$0xff] 0.0
      %739 = vst [vmem:[#allocation2 + $0xd0] sm:$0xff] 0.0
      %740 = vst [vmem:[#allocation2 + $0xd8] sm:$0xff] 0.0
      %741 = vst [vmem:[#allocation2 + $0xe0] sm:$0xff] 0.0
      %742 = vst [vmem:[#allocation2 + $0xe8] sm:$0xff] 0.0
      %743 = vst [vmem:[#allocation2 + $0xf0] sm:$0xff] 0.0
      %744 = vst [vmem:[#allocation2 + $0xf8] sm:$0xff] 0.0
      %745 = vst [vmem:[#allocation2 + $0x100] sm:$0xff] 0.0
      %746 = vst [vmem:[#allocation2 + $0x108] sm:$0xff] 0.0
      %747 = vst [vmem:[#allocation2 + $0x110] sm:$0xff] 0.0
      %748 = vst [vmem:[#allocation2 + $0x118] sm:$0xff] 0.0
      %749 = vst [vmem:[#allocation2 + $0x120] sm:$0xff] 0.0
      %750 = vst [vmem:[#allocation2 + $0x128] sm:$0xff] 0.0
      %751 = vst [vmem:[#allocation2 + $0x130] sm:$0xff] 0.0
      %752 = vst [vmem:[#allocation2 + $0x138] sm:$0xff] 0.0
      %753 = vst [vmem:[#allocation2 + $0x140] sm:$0xff] 0.0
      %754 = vst [vmem:[#allocation2 + $0x148] sm:$0xff] 0.0
      %755 = vst [vmem:[#allocation2 + $0x150] sm:$0xff] 0.0
      %756 = vst [vmem:[#allocation2 + $0x158] sm:$0xff] 0.0
      %757 = vst [vmem:[#allocation2 + $0x160] sm:$0xff] 0.0
      %758 = vst [vmem:[#allocation2 + $0x168] sm:$0xff] 0.0
      %759 = vst [vmem:[#allocation2 + $0x170] sm:$0xff] 0.0
      %760 = vst [vmem:[#allocation2 + $0x178] sm:$0xff] 0.0
      %761 = vst [vmem:[#allocation2 + $0x180] sm:$0xff] 0.0
      %762 = vst [vmem:[#allocation2 + $0x188] sm:$0xff] 0.0
      %763 = vst [vmem:[#allocation2 + $0x190] sm:$0xff] 0.0
      %764 = vst [vmem:[#allocation2 + $0x198] sm:$0xff] 0.0
      %765 = vst [vmem:[#allocation2 + $0x1a0] sm:$0xff] 0.0
      %766 = vst [vmem:[#allocation2 + $0x1a8] sm:$0xff] 0.0
      %767 = vst [vmem:[#allocation2 + $0x1b0] sm:$0xff] 0.0
      %768 = vst [vmem:[#allocation2 + $0x1b8] sm:$0xff] 0.0
      %769 = vst [vmem:[#allocation2 + $0x1c0] sm:$0xff] 0.0
      %770 = vst [vmem:[#allocation2 + $0x1c8] sm:$0xff] 0.0
      %771 = vst [vmem:[#allocation2 + $0x1d0] sm:$0xff] 0.0
      %772 = vst [vmem:[#allocation2 + $0x1d8] sm:$0xff] 0.0
      %773 = vst [vmem:[#allocation2 + $0x1e0] sm:$0xff] 0.0
      %774 = vst [vmem:[#allocation2 + $0x1e8] sm:$0xff] 0.0
      %775 = vst [vmem:[#allocation2 + $0x1f0] sm:$0xff] 0.0
      %776 = vst [vmem:[#allocation2 + $0x1f8] sm:$0xff] 0.0
      %777 = vst [vmem:[#allocation2 + $0x200] sm:$0xff] 0.0
      %778 = vst [vmem:[#allocation2 + $0x208] sm:$0xff] 0.0
      %779 = vst [vmem:[#allocation2 + $0x210] sm:$0xff] 0.0
      %780 = vst [vmem:[#allocation2 + $0x218] sm:$0xff] 0.0
      %781 = vst [vmem:[#allocation2 + $0x220] sm:$0xff] 0.0
      %782 = vst [vmem:[#allocation2 + $0x228] sm:$0xff] 0.0
      %783 = vst [vmem:[#allocation2 + $0x230] sm:$0xff] 0.0
      %784 = vst [vmem:[#allocation2 + $0x238] sm:$0xff] 0.0
      %s785 = scalar_lea.vmem [#allocation2], 32
      %786 = vst [vmem:[%s785 + $0x8] sm:$0xff] %v681
      %787 = vst [vmem:[%s785 + $0x10] sm:$0xff] %v682
      %788 = vst [vmem:[%s785 + $0x28] sm:$0xff] %v683
      %789 = vst [vmem:[%s785 + $0x30] sm:$0xff] %v684
      %790 = vst [vmem:[%s785 + $0x48] sm:$0xff] %v685
      %791 = vst [vmem:[%s785 + $0x50] sm:$0xff] %v686
      %792 = vst [vmem:[%s785 + $0x68] sm:$0xff] %v687
      %793 = vst [vmem:[%s785 + $0x70] sm:$0xff] %v688
      %794 = vst [vmem:[%s785 + $0x88] sm:$0xff] %v689
      %795 = vst [vmem:[%s785 + $0x90] sm:$0xff] %v690
      %796 = vst [vmem:[%s785 + $0xa8] sm:$0xff] %v691
      %797 = vst [vmem:[%s785 + $0xb0] sm:$0xff] %v692
      %798 = vst [vmem:[%s785 + $0xc8] sm:$0xff] %v693
      %799 = vst [vmem:[%s785 + $0xd0] sm:$0xff] %v694
      %800 = vst [vmem:[%s785 + $0xe8] sm:$0xff] %v695
      %801 = vst [vmem:[%s785 + $0xf0] sm:$0xff] %v696
      %802 = vst [vmem:[%s785 + $0x108] sm:$0xff] %v697
      %803 = vst [vmem:[%s785 + $0x110] sm:$0xff] %v698
      %804 = vst [vmem:[%s785 + $0x128] sm:$0xff] %v699
      %805 = vst [vmem:[%s785 + $0x130] sm:$0xff] %v700
      %806 = vst [vmem:[%s785 + $0x148] sm:$0xff] %v701
      %807 = vst [vmem:[%s785 + $0x150] sm:$0xff] %v702
      %808 = vst [vmem:[%s785 + $0x168] sm:$0xff] %v703
      %809 = vst [vmem:[%s785 + $0x170] sm:$0xff] %v704
      %810 = vst [vmem:[%s785 + $0x188] sm:$0xff] %v705
      %811 = vst [vmem:[%s785 + $0x190] sm:$0xff] %v706
      %812 = vst [vmem:[%s785 + $0x1a8] sm:$0xff] %v707
      %813 = vst [vmem:[%s785 + $0x1b0] sm:$0xff] %v708
      %814 = vst [vmem:[%s785 + $0x1c8] sm:$0xff] %v709
      %815 = vst [vmem:[%s785 + $0x1d0] sm:$0xff] %v710
      %816 = vst [vmem:[%s785 + $0x1e8] sm:$0xff] %v711
      %817 = vst [vmem:[%s785 + $0x1f0] sm:$0xff] %v712
      %v818 = vld [vmem:[%s4] sm:$0xff]
      %v819 = vld [vmem:[%s4 + $0x8] sm:$0x1]
      %v820 = vld [vmem:[#allocation2 + $0x7] sm:$0xff]
      %v821 = vld [vmem:[#allocation2 + $0xf] sm:$0xff]
      %v822 = vld [vmem:[#allocation2 + $0x27] sm:$0xff]
      %v823 = vld [vmem:[#allocation2 + $0x2f] sm:$0xff]
      %v824 = vld [vmem:[#allocation2 + $0x47] sm:$0xff]
      %v825 = vld [vmem:[#allocation2 + $0x4f] sm:$0xff]
      %v826 = vld [vmem:[#allocation2 + $0x67] sm:$0xff]
      %v827 = vld [vmem:[#allocation2 + $0x6f] sm:$0xff]
      %v828 = vld [vmem:[#allocation2 + $0x87] sm:$0xff]
      %v829 = vld [vmem:[#allocation2 + $0x8f] sm:$0xff]
      %v830 = vld [vmem:[#allocation2 + $0xa7] sm:$0xff]
      %v831 = vld [vmem:[#allocation2 + $0xaf] sm:$0xff]
      %v832 = vld [vmem:[#allocation2 + $0xc7] sm:$0xff]
      %v833 = vld [vmem:[#allocation2 + $0xcf] sm:$0xff]
      %v834 = vld [vmem:[#allocation2 + $0xe7] sm:$0xff]
      %v835 = vld [vmem:[#allocation2 + $0xef] sm:$0xff]
      %v836 = vld [vmem:[#allocation2 + $0x107] sm:$0xff]
      %v837 = vld [vmem:[#allocation2 + $0x10f] sm:$0xff]
      %v838 = vld [vmem:[#allocation2 + $0x127] sm:$0xff]
      %v839 = vld [vmem:[#allocation2 + $0x12f] sm:$0xff]
      %v840 = vld [vmem:[#allocation2 + $0x147] sm:$0xff]
      %v841 = vld [vmem:[#allocation2 + $0x14f] sm:$0xff]
      %v842 = vld [vmem:[#allocation2 + $0x167] sm:$0xff]
      %v843 = vld [vmem:[#allocation2 + $0x16f] sm:$0xff]
      %v844 = vld [vmem:[#allocation2 + $0x187] sm:$0xff]
      %v845 = vld [vmem:[#allocation2 + $0x18f] sm:$0xff]
      %v846 = vld [vmem:[#allocation2 + $0x1a7] sm:$0xff]
      %v847 = vld [vmem:[#allocation2 + $0x1af] sm:$0xff]
      %v848 = vld [vmem:[#allocation2 + $0x1c7] sm:$0xff]
      %v849 = vld [vmem:[#allocation2 + $0x1cf] sm:$0xff]
      %v850 = vld [vmem:[#allocation2 + $0x1e7] sm:$0xff]
      %v851 = vld [vmem:[#allocation2 + $0x1ef] sm:$0xff]
      %v852 = vlaneseq
      %v853 = vshrl.u32 %v852, 7
      %v854 = vsub.s32 0, %v853
      %v855 = vrot.slane %v818, %v854
      %v856 = vmul.f32 %v820, %v855
      %v857 = vmul.f32 %v821, %v855
      %v858 = vmul.f32 %v822, %v855
      %v859 = vmul.f32 %v823, %v855
      %v860 = vmul.f32 %v824, %v855
      %v861 = vmul.f32 %v825, %v855
      %v862 = vmul.f32 %v826, %v855
      %v863 = vmul.f32 %v827, %v855
      %v864 = vmul.f32 %v828, %v855
      %v865 = vmul.f32 %v829, %v855
      %v866 = vmul.f32 %v830, %v855
      %v867 = vmul.f32 %v831, %v855
      %v868 = vmul.f32 %v832, %v855
      %v869 = vmul.f32 %v833, %v855
      %v870 = vmul.f32 %v834, %v855
      %v871 = vmul.f32 %v835, %v855
      %v872 = vmul.f32 %v836, %v855
      %v873 = vmul.f32 %v837, %v855
      %v874 = vmul.f32 %v838, %v855
      %v875 = vmul.f32 %v839, %v855
      %v876 = vmul.f32 %v840, %v855
      %v877 = vmul.f32 %v841, %v855
      %v878 = vmul.f32 %v842, %v855
      %v879 = vmul.f32 %v843, %v855
      %v880 = vmul.f32 %v844, %v855
      %v881 = vmul.f32 %v845, %v855
      %v882 = vmul.f32 %v846, %v855
      %v883 = vmul.f32 %v847, %v855
      %v884 = vmul.f32 %v848, %v855
      %v885 = vmul.f32 %v849, %v855
      %v886 = vmul.f32 %v850, %v855
      %v887 = vmul.f32 %v851, %v855
      %v888 = vld [vmem:[#allocation2 + $0x8] sm:$0xff]
      %v889 = vld [vmem:[#allocation2 + $0x10] sm:$0xff]
      %v890 = vld [vmem:[#allocation2 + $0x28] sm:$0xff]
      %v891 = vld [vmem:[#allocation2 + $0x30] sm:$0xff]
      %v892 = vld [vmem:[#allocation2 + $0x48] sm:$0xff]
      %v893 = vld [vmem:[#allocation2 + $0x50] sm:$0xff]
      %v894 = vld [vmem:[#allocation2 + $0x68] sm:$0xff]
      %v895 = vld [vmem:[#allocation2 + $0x70] sm:$0xff]
      %v896 = vld [vmem:[#allocation2 + $0x88] sm:$0xff]
      %v897 = vld [vmem:[#allocation2 + $0x90] sm:$0xff]
      %v898 = vld [vmem:[#allocation2 + $0xa8] sm:$0xff]
      %v899 = vld [vmem:[#allocation2 + $0xb0] sm:$0xff]
      %v900 = vld [vmem:[#allocation2 + $0xc8] sm:$0xff]
      %v901 = vld [vmem:[#allocation2 + $0xd0] sm:$0xff]
      %v902 = vld [vmem:[#allocation2 + $0xe8] sm:$0xff]
      %v903 = vld [vmem:[#allocation2 + $0xf0] sm:$0xff]
      %v904 = vld [vmem:[#allocation2 + $0x108] sm:$0xff]
      %v905 = vld [vmem:[#allocation2 + $0x110] sm:$0xff]
      %v906 = vld [vmem:[#allocation2 + $0x128] sm:$0xff]
      %v907 = vld [vmem:[#allocation2 + $0x130] sm:$0xff]
      %v908 = vld [vmem:[#allocation2 + $0x148] sm:$0xff]
      %v909 = vld [vmem:[#allocation2 + $0x150] sm:$0xff]
      %v910 = vld [vmem:[#allocation2 + $0x168] sm:$0xff]
      %v911 = vld [vmem:[#allocation2 + $0x170] sm:$0xff]
      %v912 = vld [vmem:[#allocation2 + $0x188] sm:$0xff]
      %v913 = vld [vmem:[#allocation2 + $0x190] sm:$0xff]
      %v914 = vld [vmem:[#allocation2 + $0x1a8] sm:$0xff]
      %v915 = vld [vmem:[#allocation2 + $0x1b0] sm:$0xff]
      %v916 = vld [vmem:[#allocation2 + $0x1c8] sm:$0xff]
      %v917 = vld [vmem:[#allocation2 + $0x1d0] sm:$0xff]
      %v918 = vld [vmem:[#allocation2 + $0x1e8] sm:$0xff]
      %v919 = vld [vmem:[#allocation2 + $0x1f0] sm:$0xff]
      %v920 = vlaneseq
      %v921 = vshrl.u32 %v920, 7
      %v922 = vsub.s32 1, %v921
      %v923 = vrot.slane %v818, %v922
      %v924 = vmul.f32 %v888, %v923
      %v925 = vmul.f32 %v889, %v923
      %v926 = vmul.f32 %v890, %v923
      %v927 = vmul.f32 %v891, %v923
      %v928 = vmul.f32 %v892, %v923
      %v929 = vmul.f32 %v893, %v923
      %v930 = vmul.f32 %v894, %v923
      %v931 = vmul.f32 %v895, %v923
      %v932 = vmul.f32 %v896, %v923
      %v933 = vmul.f32 %v897, %v923
      %v934 = vmul.f32 %v898, %v923
      %v935 = vmul.f32 %v899, %v923
      %v936 = vmul.f32 %v900, %v923
      %v937 = vmul.f32 %v901, %v923
      %v938 = vmul.f32 %v902, %v923
      %v939 = vmul.f32 %v903, %v923
      %v940 = vmul.f32 %v904, %v923
      %v941 = vmul.f32 %v905, %v923
      %v942 = vmul.f32 %v906, %v923
      %v943 = vmul.f32 %v907, %v923
      %v944 = vmul.f32 %v908, %v923
      %v945 = vmul.f32 %v909, %v923
      %v946 = vmul.f32 %v910, %v923
      %v947 = vmul.f32 %v911, %v923
      %v948 = vmul.f32 %v912, %v923
      %v949 = vmul.f32 %v913, %v923
      %v950 = vmul.f32 %v914, %v923
      %v951 = vmul.f32 %v915, %v923
      %v952 = vmul.f32 %v916, %v923
      %v953 = vmul.f32 %v917, %v923
      %v954 = vmul.f32 %v918, %v923
      %v955 = vmul.f32 %v919, %v923
      %v956 = vadd.f32 %v856, %v924
      %v957 = vadd.f32 %v857, %v925
      %v958 = vadd.f32 %v858, %v926
      %v959 = vadd.f32 %v859, %v927
      %v960 = vadd.f32 %v860, %v928
      %v961 = vadd.f32 %v861, %v929
      %v962 = vadd.f32 %v862, %v930
      %v963 = vadd.f32 %v863, %v931
      %v964 = vadd.f32 %v864, %v932
      %v965 = vadd.f32 %v865, %v933
      %v966 = vadd.f32 %v866, %v934
      %v967 = vadd.f32 %v867, %v935
      %v968 = vadd.f32 %v868, %v936
      %v969 = vadd.f32 %v869, %v937
      %v970 = vadd.f32 %v870, %v938
      %v971 = vadd.f32 %v871, %v939
      %v972 = vadd.f32 %v872, %v940
      %v973 = vadd.f32 %v873, %v941
      %v974 = vadd.f32 %v874, %v942
      %v975 = vadd.f32 %v875, %v943
      %v976 = vadd.f32 %v876, %v944
      %v977 = vadd.f32 %v877, %v945
      %v978 = vadd.f32 %v878, %v946
      %v979 = vadd.f32 %v879, %v947
      %v980 = vadd.f32 %v880, %v948
      %v981 = vadd.f32 %v881, %v949
      %v982 = vadd.f32 %v882, %v950
      %v983 = vadd.f32 %v883, %v951
      %v984 = vadd.f32 %v884, %v952
      %v985 = vadd.f32 %v885, %v953
      %v986 = vadd.f32 %v886, %v954
      %v987 = vadd.f32 %v887, %v955
      %v988 = vld [vmem:[#allocation2 + $0x9] sm:$0xff]
      %v989 = vld [vmem:[#allocation2 + $0x11] sm:$0xff]
      %v990 = vld [vmem:[#allocation2 + $0x29] sm:$0xff]
      %v991 = vld [vmem:[#allocation2 + $0x31] sm:$0xff]
      %v992 = vld [vmem:[#allocation2 + $0x49] sm:$0xff]
      %v993 = vld [vmem:[#allocation2 + $0x51] sm:$0xff]
      %v994 = vld [vmem:[#allocation2 + $0x69] sm:$0xff]
      %v995 = vld [vmem:[#allocation2 + $0x71] sm:$0xff]
      %v996 = vld [vmem:[#allocation2 + $0x89] sm:$0xff]
      %v997 = vld [vmem:[#allocation2 + $0x91] sm:$0xff]
      %v998 = vld [vmem:[#allocation2 + $0xa9] sm:$0xff]
      %v999 = vld [vmem:[#allocation2 + $0xb1] sm:$0xff]
      %v1000 = vld [vmem:[#allocation2 + $0xc9] sm:$0xff]
      %v1001 = vld [vmem:[#allocation2 + $0xd1] sm:$0xff]
      %v1002 = vld [vmem:[#allocation2 + $0xe9] sm:$0xff]
      %v1003 = vld [vmem:[#allocation2 + $0xf1] sm:$0xff]
      %v1004 = vld [vmem:[#allocation2 + $0x109] sm:$0xff]
      %v1005 = vld [vmem:[#allocation2 + $0x111] sm:$0xff]
      %v1006 = vld [vmem:[#allocation2 + $0x129] sm:$0xff]
      %v1007 = vld [vmem:[#allocation2 + $0x131] sm:$0xff]
      %v1008 = vld [vmem:[#allocation2 + $0x149] sm:$0xff]
      %v1009 = vld [vmem:[#allocation2 + $0x151] sm:$0xff]
      %v1010 = vld [vmem:[#allocation2 + $0x169] sm:$0xff]
      %v1011 = vld [vmem:[#allocation2 + $0x171] sm:$0xff]
      %v1012 = vld [vmem:[#allocation2 + $0x189] sm:$0xff]
      %v1013 = vld [vmem:[#allocation2 + $0x191] sm:$0xff]
      %v1014 = vld [vmem:[#allocation2 + $0x1a9] sm:$0xff]
      %v1015 = vld [vmem:[#allocation2 + $0x1b1] sm:$0xff]
      %v1016 = vld [vmem:[#allocation2 + $0x1c9] sm:$0xff]
      %v1017 = vld [vmem:[#allocation2 + $0x1d1] sm:$0xff]
      %v1018 = vld [vmem:[#allocation2 + $0x1e9] sm:$0xff]
      %v1019 = vld [vmem:[#allocation2 + $0x1f1] sm:$0xff]
      %v1020 = vlaneseq
      %v1021 = vshrl.u32 %v1020, 7
      %v1022 = vsub.s32 2, %v1021
      %v1023 = vrot.slane %v818, %v1022
      %v1024 = vmul.f32 %v988, %v1023
      %v1025 = vmul.f32 %v989, %v1023
      %v1026 = vmul.f32 %v990, %v1023
      %v1027 = vmul.f32 %v991, %v1023
      %v1028 = vmul.f32 %v992, %v1023
      %v1029 = vmul.f32 %v993, %v1023
      %v1030 = vmul.f32 %v994, %v1023
      %v1031 = vmul.f32 %v995, %v1023
      %v1032 = vmul.f32 %v996, %v1023
      %v1033 = vmul.f32 %v997, %v1023
      %v1034 = vmul.f32 %v998, %v1023
      %v1035 = vmul.f32 %v999, %v1023
      %v1036 = vmul.f32 %v1000, %v1023
      %v1037 = vmul.f32 %v1001, %v1023
      %v1038 = vmul.f32 %v1002, %v1023
      %v1039 = vmul.f32 %v1003, %v1023
      %v1040 = vmul.f32 %v1004, %v1023
      %v1041 = vmul.f32 %v1005, %v1023
      %v1042 = vmul.f32 %v1006, %v1023
      %v1043 = vmul.f32 %v1007, %v1023
      %v1044 = vmul.f32 %v1008, %v1023
      %v1045 = vmul.f32 %v1009, %v1023
      %v1046 = vmul.f32 %v1010, %v1023
      %v1047 = vmul.f32 %v1011, %v1023
      %v1048 = vmul.f32 %v1012, %v1023
      %v1049 = vmul.f32 %v1013, %v1023
      %v1050 = vmul.f32 %v1014, %v1023
      %v1051 = vmul.f32 %v1015, %v1023
      %v1052 = vmul.f32 %v1016, %v1023
      %v1053 = vmul.f32 %v1017, %v1023
      %v1054 = vmul.f32 %v1018, %v1023
      %v1055 = vmul.f32 %v1019, %v1023
      %v1056 = vadd.f32 %v956, %v1024
      %v1057 = vadd.f32 %v957, %v1025
      %v1058 = vadd.f32 %v958, %v1026
      %v1059 = vadd.f32 %v959, %v1027
      %v1060 = vadd.f32 %v960, %v1028
      %v1061 = vadd.f32 %v961, %v1029
      %v1062 = vadd.f32 %v962, %v1030
      %v1063 = vadd.f32 %v963, %v1031
      %v1064 = vadd.f32 %v964, %v1032
      %v1065 = vadd.f32 %v965, %v1033
      %v1066 = vadd.f32 %v966, %v1034
      %v1067 = vadd.f32 %v967, %v1035
      %v1068 = vadd.f32 %v968, %v1036
      %v1069 = vadd.f32 %v969, %v1037
      %v1070 = vadd.f32 %v970, %v1038
      %v1071 = vadd.f32 %v971, %v1039
      %v1072 = vadd.f32 %v972, %v1040
      %v1073 = vadd.f32 %v973, %v1041
      %v1074 = vadd.f32 %v974, %v1042
      %v1075 = vadd.f32 %v975, %v1043
      %v1076 = vadd.f32 %v976, %v1044
      %v1077 = vadd.f32 %v977, %v1045
      %v1078 = vadd.f32 %v978, %v1046
      %v1079 = vadd.f32 %v979, %v1047
      %v1080 = vadd.f32 %v980, %v1048
      %v1081 = vadd.f32 %v981, %v1049
      %v1082 = vadd.f32 %v982, %v1050
      %v1083 = vadd.f32 %v983, %v1051
      %v1084 = vadd.f32 %v984, %v1052
      %v1085 = vadd.f32 %v985, %v1053
      %v1086 = vadd.f32 %v986, %v1054
      %v1087 = vadd.f32 %v987, %v1055
      %v1088 = vld [vmem:[%s785 + $0x7] sm:$0xff]
      %v1089 = vld [vmem:[%s785 + $0xf] sm:$0xff]
      %v1090 = vld [vmem:[%s785 + $0x27] sm:$0xff]
      %v1091 = vld [vmem:[%s785 + $0x2f] sm:$0xff]
      %v1092 = vld [vmem:[%s785 + $0x47] sm:$0xff]
      %v1093 = vld [vmem:[%s785 + $0x4f] sm:$0xff]
      %v1094 = vld [vmem:[%s785 + $0x67] sm:$0xff]
      %v1095 = vld [vmem:[%s785 + $0x6f] sm:$0xff]
      %v1096 = vld [vmem:[%s785 + $0x87] sm:$0xff]
      %v1097 = vld [vmem:[%s785 + $0x8f] sm:$0xff]
      %v1098 = vld [vmem:[%s785 + $0xa7] sm:$0xff]
      %v1099 = vld [vmem:[%s785 + $0xaf] sm:$0xff]
      %v1100 = vld [vmem:[%s785 + $0xc7] sm:$0xff]
      %v1101 = vld [vmem:[%s785 + $0xcf] sm:$0xff]
      %v1102 = vld [vmem:[%s785 + $0xe7] sm:$0xff]
      %v1103 = vld [vmem:[%s785 + $0xef] sm:$0xff]
      %v1104 = vld [vmem:[%s785 + $0x107] sm:$0xff]
      %v1105 = vld [vmem:[%s785 + $0x10f] sm:$0xff]
      %v1106 = vld [vmem:[%s785 + $0x127] sm:$0xff]
      %v1107 = vld [vmem:[%s785 + $0x12f] sm:$0xff]
      %v1108 = vld [vmem:[%s785 + $0x147] sm:$0xff]
      %v1109 = vld [vmem:[%s785 + $0x14f] sm:$0xff]
      %v1110 = vld [vmem:[%s785 + $0x167] sm:$0xff]
      %v1111 = vld [vmem:[%s785 + $0x16f] sm:$0xff]
      %v1112 = vld [vmem:[%s785 + $0x187] sm:$0xff]
      %v1113 = vld [vmem:[%s785 + $0x18f] sm:$0xff]
      %v1114 = vld [vmem:[%s785 + $0x1a7] sm:$0xff]
      %v1115 = vld [vmem:[%s785 + $0x1af] sm:$0xff]
      %v1116 = vld [vmem:[%s785 + $0x1c7] sm:$0xff]
      %v1117 = vld [vmem:[%s785 + $0x1cf] sm:$0xff]
      %v1118 = vld [vmem:[%s785 + $0x1e7] sm:$0xff]
      %v1119 = vld [vmem:[%s785 + $0x1ef] sm:$0xff]
      %v1120 = vlaneseq
      %v1121 = vshrl.u32 %v1120, 7
      %v1122 = vsub.s32 3, %v1121
      %v1123 = vrot.slane %v818, %v1122
      %v1124 = vmul.f32 %v1088, %v1123
      %v1125 = vmul.f32 %v1089, %v1123
      %v1126 = vmul.f32 %v1090, %v1123
      %v1127 = vmul.f32 %v1091, %v1123
      %v1128 = vmul.f32 %v1092, %v1123
      %v1129 = vmul.f32 %v1093, %v1123
      %v1130 = vmul.f32 %v1094, %v1123
      %v1131 = vmul.f32 %v1095, %v1123
      %v1132 = vmul.f32 %v1096, %v1123
      %v1133 = vmul.f32 %v1097, %v1123
      %v1134 = vmul.f32 %v1098, %v1123
      %v1135 = vmul.f32 %v1099, %v1123
      %v1136 = vmul.f32 %v1100, %v1123
      %v1137 = vmul.f32 %v1101, %v1123
      %v1138 = vmul.f32 %v1102, %v1123
      %v1139 = vmul.f32 %v1103, %v1123
      %v1140 = vmul.f32 %v1104, %v1123
      %v1141 = vmul.f32 %v1105, %v1123
      %v1142 = vmul.f32 %v1106, %v1123
      %v1143 = vmul.f32 %v1107, %v1123
      %v1144 = vmul.f32 %v1108, %v1123
      %v1145 = vmul.f32 %v1109, %v1123
      %v1146 = vmul.f32 %v1110, %v1123
      %v1147 = vmul.f32 %v1111, %v1123
      %v1148 = vmul.f32 %v1112, %v1123
      %v1149 = vmul.f32 %v1113, %v1123
      %v1150 = vmul.f32 %v1114, %v1123
      %v1151 = vmul.f32 %v1115, %v1123
      %v1152 = vmul.f32 %v1116, %v1123
      %v1153 = vmul.f32 %v1117, %v1123
      %v1154 = vmul.f32 %v1118, %v1123
      %v1155 = vmul.f32 %v1119, %v1123
      %v1156 = vadd.f32 %v1056, %v1124
      %v1157 = vadd.f32 %v1057, %v1125
      %v1158 = vadd.f32 %v1058, %v1126
      %v1159 = vadd.f32 %v1059, %v1127
      %v1160 = vadd.f32 %v1060, %v1128
      %v1161 = vadd.f32 %v1061, %v1129
      %v1162 = vadd.f32 %v1062, %v1130
      %v1163 = vadd.f32 %v1063, %v1131
      %v1164 = vadd.f32 %v1064, %v1132
      %v1165 = vadd.f32 %v1065, %v1133
      %v1166 = vadd.f32 %v1066, %v1134
      %v1167 = vadd.f32 %v1067, %v1135
      %v1168 = vadd.f32 %v1068, %v1136
      %v1169 = vadd.f32 %v1069, %v1137
      %v1170 = vadd.f32 %v1070, %v1138
      %v1171 = vadd.f32 %v1071, %v1139
      %v1172 = vadd.f32 %v1072, %v1140
      %v1173 = vadd.f32 %v1073, %v1141
      %v1174 = vadd.f32 %v1074, %v1142
      %v1175 = vadd.f32 %v1075, %v1143
      %v1176 = vadd.f32 %v1076, %v1144
      %v1177 = vadd.f32 %v1077, %v1145
      %v1178 = vadd.f32 %v1078, %v1146
      %v1179 = vadd.f32 %v1079, %v1147
      %v1180 = vadd.f32 %v1080, %v1148
      %v1181 = vadd.f32 %v1081, %v1149
      %v1182 = vadd.f32 %v1082, %v1150
      %v1183 = vadd.f32 %v1083, %v1151
      %v1184 = vadd.f32 %v1084, %v1152
      %v1185 = vadd.f32 %v1085, %v1153
      %v1186 = vadd.f32 %v1086, %v1154
      %v1187 = vadd.f32 %v1087, %v1155
      %v1188 = vld [vmem:[%s785 + $0x8] sm:$0xff]
      %v1189 = vld [vmem:[%s785 + $0x10] sm:$0xff]
      %v1190 = vld [vmem:[%s785 + $0x28] sm:$0xff]
      %v1191 = vld [vmem:[%s785 + $0x30] sm:$0xff]
      %v1192 = vld [vmem:[%s785 + $0x48] sm:$0xff]
      %v1193 = vld [vmem:[%s785 + $0x50] sm:$0xff]
      %v1194 = vld [vmem:[%s785 + $0x68] sm:$0xff]
      %v1195 = vld [vmem:[%s785 + $0x70] sm:$0xff]
      %v1196 = vld [vmem:[%s785 + $0x88] sm:$0xff]
      %v1197 = vld [vmem:[%s785 + $0x90] sm:$0xff]
      %v1198 = vld [vmem:[%s785 + $0xa8] sm:$0xff]
      %v1199 = vld [vmem:[%s785 + $0xb0] sm:$0xff]
      %v1200 = vld [vmem:[%s785 + $0xc8] sm:$0xff]
      %v1201 = vld [vmem:[%s785 + $0xd0] sm:$0xff]
      %v1202 = vld [vmem:[%s785 + $0xe8] sm:$0xff]
      %v1203 = vld [vmem:[%s785 + $0xf0] sm:$0xff]
      %v1204 = vld [vmem:[%s785 + $0x108] sm:$0xff]
      %v1205 = vld [vmem:[%s785 + $0x110] sm:$0xff]
      %v1206 = vld [vmem:[%s785 + $0x128] sm:$0xff]
      %v1207 = vld [vmem:[%s785 + $0x130] sm:$0xff]
      %v1208 = vld [vmem:[%s785 + $0x148] sm:$0xff]
      %v1209 = vld [vmem:[%s785 + $0x150] sm:$0xff]
      %v1210 = vld [vmem:[%s785 + $0x168] sm:$0xff]
      %v1211 = vld [vmem:[%s785 + $0x170] sm:$0xff]
      %v1212 = vld [vmem:[%s785 + $0x188] sm:$0xff]
      %v1213 = vld [vmem:[%s785 + $0x190] sm:$0xff]
      %v1214 = vld [vmem:[%s785 + $0x1a8] sm:$0xff]
      %v1215 = vld [vmem:[%s785 + $0x1b0] sm:$0xff]
      %v1216 = vld [vmem:[%s785 + $0x1c8] sm:$0xff]
      %v1217 = vld [vmem:[%s785 + $0x1d0] sm:$0xff]
      %v1218 = vld [vmem:[%s785 + $0x1e8] sm:$0xff]
      %v1219 = vld [vmem:[%s785 + $0x1f0] sm:$0xff]
      %v1220 = vlaneseq
      %v1221 = vshrl.u32 %v1220, 7
      %v1222 = vsub.s32 4, %v1221
      %v1223 = vrot.slane %v818, %v1222
      %v1224 = vmul.f32 %v1188, %v1223
      %v1225 = vmul.f32 %v1189, %v1223
      %v1226 = vmul.f32 %v1190, %v1223
      %v1227 = vmul.f32 %v1191, %v1223
      %v1228 = vmul.f32 %v1192, %v1223
      %v1229 = vmul.f32 %v1193, %v1223
      %v1230 = vmul.f32 %v1194, %v1223
      %v1231 = vmul.f32 %v1195, %v1223
      %v1232 = vmul.f32 %v1196, %v1223
      %v1233 = vmul.f32 %v1197, %v1223
      %v1234 = vmul.f32 %v1198, %v1223
      %v1235 = vmul.f32 %v1199, %v1223
      %v1236 = vmul.f32 %v1200, %v1223
      %v1237 = vmul.f32 %v1201, %v1223
      %v1238 = vmul.f32 %v1202, %v1223
      %v1239 = vmul.f32 %v1203, %v1223
      %v1240 = vmul.f32 %v1204, %v1223
      %v1241 = vmul.f32 %v1205, %v1223
      %v1242 = vmul.f32 %v1206, %v1223
      %v1243 = vmul.f32 %v1207, %v1223
      %v1244 = vmul.f32 %v1208, %v1223
      %v1245 = vmul.f32 %v1209, %v1223
      %v1246 = vmul.f32 %v1210, %v1223
      %v1247 = vmul.f32 %v1211, %v1223
      %v1248 = vmul.f32 %v1212, %v1223
      %v1249 = vmul.f32 %v1213, %v1223
      %v1250 = vmul.f32 %v1214, %v1223
      %v1251 = vmul.f32 %v1215, %v1223
      %v1252 = vmul.f32 %v1216, %v1223
      %v1253 = vmul.f32 %v1217, %v1223
      %v1254 = vmul.f32 %v1218, %v1223
      %v1255 = vmul.f32 %v1219, %v1223
      %v1256 = vadd.f32 %v1156, %v1224
      %v1257 = vadd.f32 %v1157, %v1225
      %v1258 = vadd.f32 %v1158, %v1226
      %v1259 = vadd.f32 %v1159, %v1227
      %v1260 = vadd.f32 %v1160, %v1228
      %v1261 = vadd.f32 %v1161, %v1229
      %v1262 = vadd.f32 %v1162, %v1230
      %v1263 = vadd.f32 %v1163, %v1231
      %v1264 = vadd.f32 %v1164, %v1232
      %v1265 = vadd.f32 %v1165, %v1233
      %v1266 = vadd.f32 %v1166, %v1234
      %v1267 = vadd.f32 %v1167, %v1235
      %v1268 = vadd.f32 %v1168, %v1236
      %v1269 = vadd.f32 %v1169, %v1237
      %v1270 = vadd.f32 %v1170, %v1238
      %v1271 = vadd.f32 %v1171, %v1239
      %v1272 = vadd.f32 %v1172, %v1240
      %v1273 = vadd.f32 %v1173, %v1241
      %v1274 = vadd.f32 %v1174, %v1242
      %v1275 = vadd.f32 %v1175, %v1243
      %v1276 = vadd.f32 %v1176, %v1244
      %v1277 = vadd.f32 %v1177, %v1245
      %v1278 = vadd.f32 %v1178, %v1246
      %v1279 = vadd.f32 %v1179, %v1247
      %v1280 = vadd.f32 %v1180, %v1248
      %v1281 = vadd.f32 %v1181, %v1249
      %v1282 = vadd.f32 %v1182, %v1250
      %v1283 = vadd.f32 %v1183, %v1251
      %v1284 = vadd.f32 %v1184, %v1252
      %v1285 = vadd.f32 %v1185, %v1253
      %v1286 = vadd.f32 %v1186, %v1254
      %v1287 = vadd.f32 %v1187, %v1255
      %v1288 = vld [vmem:[%s785 + $0x9] sm:$0xff]
      %v1289 = vld [vmem:[%s785 + $0x11] sm:$0xff]
      %v1290 = vld [vmem:[%s785 + $0x29] sm:$0xff]
      %v1291 = vld [vmem:[%s785 + $0x31] sm:$0xff]
      %v1292 = vld [vmem:[%s785 + $0x49] sm:$0xff]
      %v1293 = vld [vmem:[%s785 + $0x51] sm:$0xff]
      %v1294 = vld [vmem:[%s785 + $0x69] sm:$0xff]
      %v1295 = vld [vmem:[%s785 + $0x71] sm:$0xff]
      %v1296 = vld [vmem:[%s785 + $0x89] sm:$0xff]
      %v1297 = vld [vmem:[%s785 + $0x91] sm:$0xff]
      %v1298 = vld [vmem:[%s785 + $0xa9] sm:$0xff]
      %v1299 = vld [vmem:[%s785 + $0xb1] sm:$0xff]
      %v1300 = vld [vmem:[%s785 + $0xc9] sm:$0xff]
      %v1301 = vld [vmem:[%s785 + $0xd1] sm:$0xff]
      %v1302 = vld [vmem:[%s785 + $0xe9] sm:$0xff]
      %v1303 = vld [vmem:[%s785 + $0xf1] sm:$0xff]
      %v1304 = vld [vmem:[%s785 + $0x109] sm:$0xff]
      %v1305 = vld [vmem:[%s785 + $0x111] sm:$0xff]
      %v1306 = vld [vmem:[%s785 + $0x129] sm:$0xff]
      %v1307 = vld [vmem:[%s785 + $0x131] sm:$0xff]
      %v1308 = vld [vmem:[%s785 + $0x149] sm:$0xff]
      %v1309 = vld [vmem:[%s785 + $0x151] sm:$0xff]
      %v1310 = vld [vmem:[%s785 + $0x169] sm:$0xff]
      %v1311 = vld [vmem:[%s785 + $0x171] sm:$0xff]
      %v1312 = vld [vmem:[%s785 + $0x189] sm:$0xff]
      %v1313 = vld [vmem:[%s785 + $0x191] sm:$0xff]
      %v1314 = vld [vmem:[%s785 + $0x1a9] sm:$0xff]
      %v1315 = vld [vmem:[%s785 + $0x1b1] sm:$0xff]
      %v1316 = vld [vmem:[%s785 + $0x1c9] sm:$0xff]
      %v1317 = vld [vmem:[%s785 + $0x1d1] sm:$0xff]
      %v1318 = vld [vmem:[%s785 + $0x1e9] sm:$0xff]
      %v1319 = vld [vmem:[%s785 + $0x1f1] sm:$0xff]
      %v1320 = vlaneseq
      %v1321 = vshrl.u32 %v1320, 7
      %v1322 = vsub.s32 5, %v1321
      %v1323 = vrot.slane %v818, %v1322
      %v1324 = vmul.f32 %v1288, %v1323
      %v1325 = vmul.f32 %v1289, %v1323
      %v1326 = vmul.f32 %v1290, %v1323
      %v1327 = vmul.f32 %v1291, %v1323
      %v1328 = vmul.f32 %v1292, %v1323
      %v1329 = vmul.f32 %v1293, %v1323
      %v1330 = vmul.f32 %v1294, %v1323
      %v1331 = vmul.f32 %v1295, %v1323
      %v1332 = vmul.f32 %v1296, %v1323
      %v1333 = vmul.f32 %v1297, %v1323
      %v1334 = vmul.f32 %v1298, %v1323
      %v1335 = vmul.f32 %v1299, %v1323
      %v1336 = vmul.f32 %v1300, %v1323
      %v1337 = vmul.f32 %v1301, %v1323
      %v1338 = vmul.f32 %v1302, %v1323
      %v1339 = vmul.f32 %v1303, %v1323
      %v1340 = vmul.f32 %v1304, %v1323
      %v1341 = vmul.f32 %v1305, %v1323
      %v1342 = vmul.f32 %v1306, %v1323
      %v1343 = vmul.f32 %v1307, %v1323
      %v1344 = vmul.f32 %v1308, %v1323
      %v1345 = vmul.f32 %v1309, %v1323
      %v1346 = vmul.f32 %v1310, %v1323
      %v1347 = vmul.f32 %v1311, %v1323
      %v1348 = vmul.f32 %v1312, %v1323
      %v1349 = vmul.f32 %v1313, %v1323
      %v1350 = vmul.f32 %v1314, %v1323
      %v1351 = vmul.f32 %v1315, %v1323
      %v1352 = vmul.f32 %v1316, %v1323
      %v1353 = vmul.f32 %v1317, %v1323
      %v1354 = vmul.f32 %v1318, %v1323
      %v1355 = vmul.f32 %v1319, %v1323
      %v1356 = vadd.f32 %v1256, %v1324
      %v1357 = vadd.f32 %v1257, %v1325
      %v1358 = vadd.f32 %v1258, %v1326
      %v1359 = vadd.f32 %v1259, %v1327
      %v1360 = vadd.f32 %v1260, %v1328
      %v1361 = vadd.f32 %v1261, %v1329
      %v1362 = vadd.f32 %v1262, %v1330
      %v1363 = vadd.f32 %v1263, %v1331
      %v1364 = vadd.f32 %v1264, %v1332
      %v1365 = vadd.f32 %v1265, %v1333
      %v1366 = vadd.f32 %v1266, %v1334
      %v1367 = vadd.f32 %v1267, %v1335
      %v1368 = vadd.f32 %v1268, %v1336
      %v1369 = vadd.f32 %v1269, %v1337
      %v1370 = vadd.f32 %v1270, %v1338
      %v1371 = vadd.f32 %v1271, %v1339
      %v1372 = vadd.f32 %v1272, %v1340
      %v1373 = vadd.f32 %v1273, %v1341
      %v1374 = vadd.f32 %v1274, %v1342
      %v1375 = vadd.f32 %v1275, %v1343
      %v1376 = vadd.f32 %v1276, %v1344
      %v1377 = vadd.f32 %v1277, %v1345
      %v1378 = vadd.f32 %v1278, %v1346
      %v1379 = vadd.f32 %v1279, %v1347
      %v1380 = vadd.f32 %v1280, %v1348
      %v1381 = vadd.f32 %v1281, %v1349
      %v1382 = vadd.f32 %v1282, %v1350
      %v1383 = vadd.f32 %v1283, %v1351
      %v1384 = vadd.f32 %v1284, %v1352
      %v1385 = vadd.f32 %v1285, %v1353
      %v1386 = vadd.f32 %v1286, %v1354
      %v1387 = vadd.f32 %v1287, %v1355
      %s1388 = scalar_lea.vmem [#allocation2], 64
      %v1389 = vld [vmem:[%s1388 + $0x7] sm:$0xff]
      %v1390 = vld [vmem:[%s1388 + $0xf] sm:$0xff]
      %v1391 = vld [vmem:[%s1388 + $0x27] sm:$0xff]
      %v1392 = vld [vmem:[%s1388 + $0x2f] sm:$0xff]
      %v1393 = vld [vmem:[%s1388 + $0x47] sm:$0xff]
      %v1394 = vld [vmem:[%s1388 + $0x4f] sm:$0xff]
      %v1395 = vld [vmem:[%s1388 + $0x67] sm:$0xff]
      %v1396 = vld [vmem:[%s1388 + $0x6f] sm:$0xff]
      %v1397 = vld [vmem:[%s1388 + $0x87] sm:$0xff]
      %v1398 = vld [vmem:[%s1388 + $0x8f] sm:$0xff]
      %v1399 = vld [vmem:[%s1388 + $0xa7] sm:$0xff]
      %v1400 = vld [vmem:[%s1388 + $0xaf] sm:$0xff]
      %v1401 = vld [vmem:[%s1388 + $0xc7] sm:$0xff]
      %v1402 = vld [vmem:[%s1388 + $0xcf] sm:$0xff]
      %v1403 = vld [vmem:[%s1388 + $0xe7] sm:$0xff]
      %v1404 = vld [vmem:[%s1388 + $0xef] sm:$0xff]
      %v1405 = vld [vmem:[%s1388 + $0x107] sm:$0xff]
      %v1406 = vld [vmem:[%s1388 + $0x10f] sm:$0xff]
      %v1407 = vld [vmem:[%s1388 + $0x127] sm:$0xff]
      %v1408 = vld [vmem:[%s1388 + $0x12f] sm:$0xff]
      %v1409 = vld [vmem:[%s1388 + $0x147] sm:$0xff]
      %v1410 = vld [vmem:[%s1388 + $0x14f] sm:$0xff]
      %v1411 = vld [vmem:[%s1388 + $0x167] sm:$0xff]
      %v1412 = vld [vmem:[%s1388 + $0x16f] sm:$0xff]
      %v1413 = vld [vmem:[%s1388 + $0x187] sm:$0xff]
      %v1414 = vld [vmem:[%s1388 + $0x18f] sm:$0xff]
      %v1415 = vld [vmem:[%s1388 + $0x1a7] sm:$0xff]
      %v1416 = vld [vmem:[%s1388 + $0x1af] sm:$0xff]
      %v1417 = vld [vmem:[%s1388 + $0x1c7] sm:$0xff]
      %v1418 = vld [vmem:[%s1388 + $0x1cf] sm:$0xff]
      %v1419 = vld [vmem:[%s1388 + $0x1e7] sm:$0xff]
      %v1420 = vld [vmem:[%s1388 + $0x1ef] sm:$0xff]
      %v1421 = vlaneseq
      %v1422 = vshrl.u32 %v1421, 7
      %v1423 = vsub.s32 6, %v1422
      %v1424 = vrot.slane %v818, %v1423
      %v1425 = vmul.f32 %v1389, %v1424
      %v1426 = vmul.f32 %v1390, %v1424
      %v1427 = vmul.f32 %v1391, %v1424
      %v1428 = vmul.f32 %v1392, %v1424
      %v1429 = vmul.f32 %v1393, %v1424
      %v1430 = vmul.f32 %v1394, %v1424
      %v1431 = vmul.f32 %v1395, %v1424
      %v1432 = vmul.f32 %v1396, %v1424
      %v1433 = vmul.f32 %v1397, %v1424
      %v1434 = vmul.f32 %v1398, %v1424
      %v1435 = vmul.f32 %v1399, %v1424
      %v1436 = vmul.f32 %v1400, %v1424
      %v1437 = vmul.f32 %v1401, %v1424
      %v1438 = vmul.f32 %v1402, %v1424
      %v1439 = vmul.f32 %v1403, %v1424
      %v1440 = vmul.f32 %v1404, %v1424
      %v1441 = vmul.f32 %v1405, %v1424
      %v1442 = vmul.f32 %v1406, %v1424
      %v1443 = vmul.f32 %v1407, %v1424
      %v1444 = vmul.f32 %v1408, %v1424
      %v1445 = vmul.f32 %v1409, %v1424
      %v1446 = vmul.f32 %v1410, %v1424
      %v1447 = vmul.f32 %v1411, %v1424
      %v1448 = vmul.f32 %v1412, %v1424
      %v1449 = vmul.f32 %v1413, %v1424
      %v1450 = vmul.f32 %v1414, %v1424
      %v1451 = vmul.f32 %v1415, %v1424
      %v1452 = vmul.f32 %v1416, %v1424
      %v1453 = vmul.f32 %v1417, %v1424
      %v1454 = vmul.f32 %v1418, %v1424
      %v1455 = vmul.f32 %v1419, %v1424
      %v1456 = vmul.f32 %v1420, %v1424
      %v1457 = vadd.f32 %v1356, %v1425
      %v1458 = vadd.f32 %v1357, %v1426
      %v1459 = vadd.f32 %v1358, %v1427
      %v1460 = vadd.f32 %v1359, %v1428
      %v1461 = vadd.f32 %v1360, %v1429
      %v1462 = vadd.f32 %v1361, %v1430
      %v1463 = vadd.f32 %v1362, %v1431
      %v1464 = vadd.f32 %v1363, %v1432
      %v1465 = vadd.f32 %v1364, %v1433
      %v1466 = vadd.f32 %v1365, %v1434
      %v1467 = vadd.f32 %v1366, %v1435
      %v1468 = vadd.f32 %v1367, %v1436
      %v1469 = vadd.f32 %v1368, %v1437
      %v1470 = vadd.f32 %v1369, %v1438
      %v1471 = vadd.f32 %v1370, %v1439
      %v1472 = vadd.f32 %v1371, %v1440
      %v1473 = vadd.f32 %v1372, %v1441
      %v1474 = vadd.f32 %v1373, %v1442
      %v1475 = vadd.f32 %v1374, %v1443
      %v1476 = vadd.f32 %v1375, %v1444
      %v1477 = vadd.f32 %v1376, %v1445
      %v1478 = vadd.f32 %v1377, %v1446
      %v1479 = vadd.f32 %v1378, %v1447
      %v1480 = vadd.f32 %v1379, %v1448
      %v1481 = vadd.f32 %v1380, %v1449
      %v1482 = vadd.f32 %v1381, %v1450
      %v1483 = vadd.f32 %v1382, %v1451
      %v1484 = vadd.f32 %v1383, %v1452
      %v1485 = vadd.f32 %v1384, %v1453
      %v1486 = vadd.f32 %v1385, %v1454
      %v1487 = vadd.f32 %v1386, %v1455
      %v1488 = vadd.f32 %v1387, %v1456
      %v1489 = vld [vmem:[%s1388 + $0x8] sm:$0xff]
      %v1490 = vld [vmem:[%s1388 + $0x10] sm:$0xff]
      %v1491 = vld [vmem:[%s1388 + $0x28] sm:$0xff]
      %v1492 = vld [vmem:[%s1388 + $0x30] sm:$0xff]
      %v1493 = vld [vmem:[%s1388 + $0x48] sm:$0xff]
      %v1494 = vld [vmem:[%s1388 + $0x50] sm:$0xff]
      %v1495 = vld [vmem:[%s1388 + $0x68] sm:$0xff]
      %v1496 = vld [vmem:[%s1388 + $0x70] sm:$0xff]
      %v1497 = vld [vmem:[%s1388 + $0x88] sm:$0xff]
      %v1498 = vld [vmem:[%s1388 + $0x90] sm:$0xff]
      %v1499 = vld [vmem:[%s1388 + $0xa8] sm:$0xff]
      %v1500 = vld [vmem:[%s1388 + $0xb0] sm:$0xff]
      %v1501 = vld [vmem:[%s1388 + $0xc8] sm:$0xff]
      %v1502 = vld [vmem:[%s1388 + $0xd0] sm:$0xff]
      %v1503 = vld [vmem:[%s1388 + $0xe8] sm:$0xff]
      %v1504 = vld [vmem:[%s1388 + $0xf0] sm:$0xff]
      %v1505 = vld [vmem:[%s1388 + $0x108] sm:$0xff]
      %v1506 = vld [vmem:[%s1388 + $0x110] sm:$0xff]
      %v1507 = vld [vmem:[%s1388 + $0x128] sm:$0xff]
      %v1508 = vld [vmem:[%s1388 + $0x130] sm:$0xff]
      %v1509 = vld [vmem:[%s1388 + $0x148] sm:$0xff]
      %v1510 = vld [vmem:[%s1388 + $0x150] sm:$0xff]
      %v1511 = vld [vmem:[%s1388 + $0x168] sm:$0xff]
      %v1512 = vld [vmem:[%s1388 + $0x170] sm:$0xff]
      %v1513 = vld [vmem:[%s1388 + $0x188] sm:$0xff]
      %v1514 = vld [vmem:[%s1388 + $0x190] sm:$0xff]
      %v1515 = vld [vmem:[%s1388 + $0x1a8] sm:$0xff]
      %v1516 = vld [vmem:[%s1388 + $0x1b0] sm:$0xff]
      %v1517 = vld [vmem:[%s1388 + $0x1c8] sm:$0xff]
      %v1518 = vld [vmem:[%s1388 + $0x1d0] sm:$0xff]
      %v1519 = vld [vmem:[%s1388 + $0x1e8] sm:$0xff]
      %v1520 = vld [vmem:[%s1388 + $0x1f0] sm:$0xff]
      %v1521 = vlaneseq
      %v1522 = vshrl.u32 %v1521, 7
      %v1523 = vsub.s32 7, %v1522
      %v1524 = vrot.slane %v818, %v1523
      %v1525 = vmul.f32 %v1489, %v1524
      %v1526 = vmul.f32 %v1490, %v1524
      %v1527 = vmul.f32 %v1491, %v1524
      %v1528 = vmul.f32 %v1492, %v1524
      %v1529 = vmul.f32 %v1493, %v1524
      %v1530 = vmul.f32 %v1494, %v1524
      %v1531 = vmul.f32 %v1495, %v1524
      %v1532 = vmul.f32 %v1496, %v1524
      %v1533 = vmul.f32 %v1497, %v1524
      %v1534 = vmul.f32 %v1498, %v1524
      %v1535 = vmul.f32 %v1499, %v1524
      %v1536 = vmul.f32 %v1500, %v1524
      %v1537 = vmul.f32 %v1501, %v1524
      %v1538 = vmul.f32 %v1502, %v1524
      %v1539 = vmul.f32 %v1503, %v1524
      %v1540 = vmul.f32 %v1504, %v1524
      %v1541 = vmul.f32 %v1505, %v1524
      %v1542 = vmul.f32 %v1506, %v1524
      %v1543 = vmul.f32 %v1507, %v1524
      %v1544 = vmul.f32 %v1508, %v1524
      %v1545 = vmul.f32 %v1509, %v1524
      %v1546 = vmul.f32 %v1510, %v1524
      %v1547 = vmul.f32 %v1511, %v1524
      %v1548 = vmul.f32 %v1512, %v1524
      %v1549 = vmul.f32 %v1513, %v1524
      %v1550 = vmul.f32 %v1514, %v1524
      %v1551 = vmul.f32 %v1515, %v1524
      %v1552 = vmul.f32 %v1516, %v1524
      %v1553 = vmul.f32 %v1517, %v1524
      %v1554 = vmul.f32 %v1518, %v1524
      %v1555 = vmul.f32 %v1519, %v1524
      %v1556 = vmul.f32 %v1520, %v1524
      %v1557 = vadd.f32 %v1457, %v1525
      %v1558 = vadd.f32 %v1458, %v1526
      %v1559 = vadd.f32 %v1459, %v1527
      %v1560 = vadd.f32 %v1460, %v1528
      %v1561 = vadd.f32 %v1461, %v1529
      %v1562 = vadd.f32 %v1462, %v1530
      %v1563 = vadd.f32 %v1463, %v1531
      %v1564 = vadd.f32 %v1464, %v1532
      %v1565 = vadd.f32 %v1465, %v1533
      %v1566 = vadd.f32 %v1466, %v1534
      %v1567 = vadd.f32 %v1467, %v1535
      %v1568 = vadd.f32 %v1468, %v1536
      %v1569 = vadd.f32 %v1469, %v1537
      %v1570 = vadd.f32 %v1470, %v1538
      %v1571 = vadd.f32 %v1471, %v1539
      %v1572 = vadd.f32 %v1472, %v1540
      %v1573 = vadd.f32 %v1473, %v1541
      %v1574 = vadd.f32 %v1474, %v1542
      %v1575 = vadd.f32 %v1475, %v1543
      %v1576 = vadd.f32 %v1476, %v1544
      %v1577 = vadd.f32 %v1477, %v1545
      %v1578 = vadd.f32 %v1478, %v1546
      %v1579 = vadd.f32 %v1479, %v1547
      %v1580 = vadd.f32 %v1480, %v1548
      %v1581 = vadd.f32 %v1481, %v1549
      %v1582 = vadd.f32 %v1482, %v1550
      %v1583 = vadd.f32 %v1483, %v1551
      %v1584 = vadd.f32 %v1484, %v1552
      %v1585 = vadd.f32 %v1485, %v1553
      %v1586 = vadd.f32 %v1486, %v1554
      %v1587 = vadd.f32 %v1487, %v1555
      %v1588 = vadd.f32 %v1488, %v1556
      %v1589 = vld [vmem:[%s1388 + $0x9] sm:$0xff]
      %v1590 = vld [vmem:[%s1388 + $0x11] sm:$0xff]
      %v1591 = vld [vmem:[%s1388 + $0x29] sm:$0xff]
      %v1592 = vld [vmem:[%s1388 + $0x31] sm:$0xff]
      %v1593 = vld [vmem:[%s1388 + $0x49] sm:$0xff]
      %v1594 = vld [vmem:[%s1388 + $0x51] sm:$0xff]
      %v1595 = vld [vmem:[%s1388 + $0x69] sm:$0xff]
      %v1596 = vld [vmem:[%s1388 + $0x71] sm:$0xff]
      %v1597 = vld [vmem:[%s1388 + $0x89] sm:$0xff]
      %v1598 = vld [vmem:[%s1388 + $0x91] sm:$0xff]
      %v1599 = vld [vmem:[%s1388 + $0xa9] sm:$0xff]
      %v1600 = vld [vmem:[%s1388 + $0xb1] sm:$0xff]
      %v1601 = vld [vmem:[%s1388 + $0xc9] sm:$0xff]
      %v1602 = vld [vmem:[%s1388 + $0xd1] sm:$0xff]
      %v1603 = vld [vmem:[%s1388 + $0xe9] sm:$0xff]
      %v1604 = vld [vmem:[%s1388 + $0xf1] sm:$0xff]
      %v1605 = vld [vmem:[%s1388 + $0x109] sm:$0xff]
      %v1606 = vld [vmem:[%s1388 + $0x111] sm:$0xff]
      %v1607 = vld [vmem:[%s1388 + $0x129] sm:$0xff]
      %v1608 = vld [vmem:[%s1388 + $0x131] sm:$0xff]
      %v1609 = vld [vmem:[%s1388 + $0x149] sm:$0xff]
      %v1610 = vld [vmem:[%s1388 + $0x151] sm:$0xff]
      %v1611 = vld [vmem:[%s1388 + $0x169] sm:$0xff]
      %v1612 = vld [vmem:[%s1388 + $0x171] sm:$0xff]
      %v1613 = vld [vmem:[%s1388 + $0x189] sm:$0xff]
      %v1614 = vld [vmem:[%s1388 + $0x191] sm:$0xff]
      %v1615 = vld [vmem:[%s1388 + $0x1a9] sm:$0xff]
      %v1616 = vld [vmem:[%s1388 + $0x1b1] sm:$0xff]
      %v1617 = vld [vmem:[%s1388 + $0x1c9] sm:$0xff]
      %v1618 = vld [vmem:[%s1388 + $0x1d1] sm:$0xff]
      %v1619 = vld [vmem:[%s1388 + $0x1e9] sm:$0xff]
      %v1620 = vld [vmem:[%s1388 + $0x1f1] sm:$0xff]
      %v1621 = vlaneseq
      %v1622 = vshrl.u32 %v1621, 7
      %v1623 = vsub.s32 0, %v1622
      %v1624 = vrot.slane %v819, %v1623
      %v1625 = vmul.f32 %v1589, %v1624
      %v1626 = vmul.f32 %v1590, %v1624
      %v1627 = vmul.f32 %v1591, %v1624
      %v1628 = vmul.f32 %v1592, %v1624
      %v1629 = vmul.f32 %v1593, %v1624
      %v1630 = vmul.f32 %v1594, %v1624
      %v1631 = vmul.f32 %v1595, %v1624
      %v1632 = vmul.f32 %v1596, %v1624
      %v1633 = vmul.f32 %v1597, %v1624
      %v1634 = vmul.f32 %v1598, %v1624
      %v1635 = vmul.f32 %v1599, %v1624
      %v1636 = vmul.f32 %v1600, %v1624
      %v1637 = vmul.f32 %v1601, %v1624
      %v1638 = vmul.f32 %v1602, %v1624
      %v1639 = vmul.f32 %v1603, %v1624
      %v1640 = vmul.f32 %v1604, %v1624
      %v1641 = vmul.f32 %v1605, %v1624
      %v1642 = vmul.f32 %v1606, %v1624
      %v1643 = vmul.f32 %v1607, %v1624
      %v1644 = vmul.f32 %v1608, %v1624
      %v1645 = vmul.f32 %v1609, %v1624
      %v1646 = vmul.f32 %v1610, %v1624
      %v1647 = vmul.f32 %v1611, %v1624
      %v1648 = vmul.f32 %v1612, %v1624
      %v1649 = vmul.f32 %v1613, %v1624
      %v1650 = vmul.f32 %v1614, %v1624
      %v1651 = vmul.f32 %v1615, %v1624
      %v1652 = vmul.f32 %v1616, %v1624
      %v1653 = vmul.f32 %v1617, %v1624
      %v1654 = vmul.f32 %v1618, %v1624
      %v1655 = vmul.f32 %v1619, %v1624
      %v1656 = vmul.f32 %v1620, %v1624
      %v1657 = vadd.f32 %v1557, %v1625
      %v1658 = vadd.f32 %v1558, %v1626
      %v1659 = vadd.f32 %v1559, %v1627
      %v1660 = vadd.f32 %v1560, %v1628
      %v1661 = vadd.f32 %v1561, %v1629
      %v1662 = vadd.f32 %v1562, %v1630
      %v1663 = vadd.f32 %v1563, %v1631
      %v1664 = vadd.f32 %v1564, %v1632
      %v1665 = vadd.f32 %v1565, %v1633
      %v1666 = vadd.f32 %v1566, %v1634
      %v1667 = vadd.f32 %v1567, %v1635
      %v1668 = vadd.f32 %v1568, %v1636
      %v1669 = vadd.f32 %v1569, %v1637
      %v1670 = vadd.f32 %v1570, %v1638
      %v1671 = vadd.f32 %v1571, %v1639
      %v1672 = vadd.f32 %v1572, %v1640
      %v1673 = vadd.f32 %v1573, %v1641
      %v1674 = vadd.f32 %v1574, %v1642
      %v1675 = vadd.f32 %v1575, %v1643
      %v1676 = vadd.f32 %v1576, %v1644
      %v1677 = vadd.f32 %v1577, %v1645
      %v1678 = vadd.f32 %v1578, %v1646
      %v1679 = vadd.f32 %v1579, %v1647
      %v1680 = vadd.f32 %v1580, %v1648
      %v1681 = vadd.f32 %v1581, %v1649
      %v1682 = vadd.f32 %v1582, %v1650
      %v1683 = vadd.f32 %v1583, %v1651
      %v1684 = vadd.f32 %v1584, %v1652
      %v1685 = vadd.f32 %v1585, %v1653
      %v1686 = vadd.f32 %v1586, %v1654
      %v1687 = vadd.f32 %v1587, %v1655
      %v1688 = vadd.f32 %v1588, %v1656
      %1689 = vst [vmem:[%s291] sm:$0xff] %v1657
      %1690 = vst [vmem:[%s291 + $0x8] sm:$0xff] %v1658
      %1691 = vst [vmem:[%s291 + $0x10] sm:$0xff] %v1659
      %1692 = vst [vmem:[%s291 + $0x18] sm:$0xff] %v1660
      %1693 = vst [vmem:[%s291 + $0x20] sm:$0xff] %v1661
      %1694 = vst [vmem:[%s291 + $0x28] sm:$0xff] %v1662
      %1695 = vst [vmem:[%s291 + $0x30] sm:$0xff] %v1663
      %1696 = vst [vmem:[%s291 + $0x38] sm:$0xff] %v1664
      %1697 = vst [vmem:[%s291 + $0x40] sm:$0xff] %v1665
      %1698 = vst [vmem:[%s291 + $0x48] sm:$0xff] %v1666
      %1699 = vst [vmem:[%s291 + $0x50] sm:$0xff] %v1667
      %1700 = vst [vmem:[%s291 + $0x58] sm:$0xff] %v1668
      %1701 = vst [vmem:[%s291 + $0x60] sm:$0xff] %v1669
      %1702 = vst [vmem:[%s291 + $0x68] sm:$0xff] %v1670
      %1703 = vst [vmem:[%s291 + $0x70] sm:$0xff] %v1671
      %1704 = vst [vmem:[%s291 + $0x78] sm:$0xff] %v1672
      %1705 = vst [vmem:[%s291 + $0x80] sm:$0xff] %v1673
      %1706 = vst [vmem:[%s291 + $0x88] sm:$0xff] %v1674
      %1707 = vst [vmem:[%s291 + $0x90] sm:$0xff] %v1675
      %1708 = vst [vmem:[%s291 + $0x98] sm:$0xff] %v1676
      %1709 = vst [vmem:[%s291 + $0xa0] sm:$0xff] %v1677
      %1710 = vst [vmem:[%s291 + $0xa8] sm:$0xff] %v1678
      %1711 = vst [vmem:[%s291 + $0xb0] sm:$0xff] %v1679
      %1712 = vst [vmem:[%s291 + $0xb8] sm:$0xff] %v1680
      %1713 = vst [vmem:[%s291 + $0xc0] sm:$0xff] %v1681
      %1714 = vst [vmem:[%s291 + $0xc8] sm:$0xff] %v1682
      %1715 = vst [vmem:[%s291 + $0xd0] sm:$0xff] %v1683
      %1716 = vst [vmem:[%s291 + $0xd8] sm:$0xff] %v1684
      %1717 = vst [vmem:[%s291 + $0xe0] sm:$0xff] %v1685
      %1718 = vst [vmem:[%s291 + $0xe8] sm:$0xff] %v1686
      %1719 = vst [vmem:[%s291 + $0xf0] sm:$0xff] %v1687
      %1720 = vst [vmem:[%s291 + $0xf8] sm:$0xff] %v1688
      %v1721 = vadd.f32 %v1657, %v1658
      %v1722 = vadd.f32 %v1721, %v1659
      %v1723 = vadd.f32 %v1722, %v1660
      %v1724 = vadd.f32 %v1723, %v1661
      %v1725 = vadd.f32 %v1724, %v1662
      %v1726 = vadd.f32 %v1725, %v1663
      %v1727 = vadd.f32 %v1726, %v1664
      %v1728 = vadd.f32 %v1727, %v1665
      %v1729 = vadd.f32 %v1728, %v1666
      %v1730 = vadd.f32 %v1729, %v1667
      %v1731 = vadd.f32 %v1730, %v1668
      %v1732 = vadd.f32 %v1731, %v1669
      %v1733 = vadd.f32 %v1732, %v1670
      %v1734 = vadd.f32 %v1733, %v1671
      %v1735 = vadd.f32 %v1734, %v1672
      %v1736 = vadd.f32 %v1735, %v1673
      %v1737 = vadd.f32 %v1736, %v1674
      %v1738 = vadd.f32 %v1737, %v1675
      %v1739 = vadd.f32 %v1738, %v1676
      %v1740 = vadd.f32 %v1739, %v1677
      %v1741 = vadd.f32 %v1740, %v1678
      %v1742 = vadd.f32 %v1741, %v1679
      %v1743 = vadd.f32 %v1742, %v1680
      %v1744 = vadd.f32 %v1743, %v1681
      %v1745 = vadd.f32 %v1744, %v1682
      %v1746 = vadd.f32 %v1745, %v1683
      %v1747 = vadd.f32 %v1746, %v1684
      %v1748 = vadd.f32 %v1747, %v1685
      %v1749 = vadd.f32 %v1748, %v1686
      %v1750 = vadd.f32 %v1749, %v1687
      %v1751 = vadd.f32 %v1750, %v1688
      %v1752 = vrot.slane %v1751, 4
      %v1753 = vadd.f32 %v1751, %v1752
      %v1754 = vrot.slane %v1753, 2
      %v1755 = vadd.f32 %v1753, %v1754
      %v1756 = vrot.slane %v1755, 1
      %v1757 = vadd.f32 %v1755, %v1756
      %1758 = vst [vmem:[%s294] sm:$0x1] %v1757
      %v1759 = vmul.f32 %v1657, %v1657
      %v1760 = vmul.f32 %v1658, %v1658
      %v1761 = vmul.f32 %v1659, %v1659
      %v1762 = vmul.f32 %v1660, %v1660
      %v1763 = vmul.f32 %v1661, %v1661
      %v1764 = vmul.f32 %v1662, %v1662
      %v1765 = vmul.f32 %v1663, %v1663
      %v1766 = vmul.f32 %v1664, %v1664
      %v1767 = vmul.f32 %v1665, %v1665
      %v1768 = vmul.f32 %v1666, %v1666
      %v1769 = vmul.f32 %v1667, %v1667
      %v1770 = vmul.f32 %v1668, %v1668
      %v1771 = vmul.f32 %v1669, %v1669
      %v1772 = vmul.f32 %v1670, %v1670
      %v1773 = vmul.f32 %v1671, %v1671
      %v1774 = vmul.f32 %v1672, %v1672
      %v1775 = vmul.f32 %v1673, %v1673
      %v1776 = vmul.f32 %v1674, %v1674
      %v1777 = vmul.f32 %v1675, %v1675
      %v1778 = vmul.f32 %v1676, %v1676
      %v1779 = vmul.f32 %v1677, %v1677
      %v1780 = vmul.f32 %v1678, %v1678
      %v1781 = vmul.f32 %v1679, %v1679
      %v1782 = vmul.f32 %v1680, %v1680
      %v1783 = vmul.f32 %v1681, %v1681
      %v1784 = vmul.f32 %v1682, %v1682
      %v1785 = vmul.f32 %v1683, %v1683
      %v1786 = vmul.f32 %v1684, %v1684
      %v1787 = vmul.f32 %v1685, %v1685
      %v1788 = vmul.f32 %v1686, %v1686
      %v1789 = vmul.f32 %v1687, %v1687
      %v1790 = vmul.f32 %v1688, %v1688
      %v1791 = vadd.f32 %v1759, %v1760
      %v1792 = vadd.f32 %v1791, %v1761
      %v1793 = vadd.f32 %v1792, %v1762
      %v1794 = vadd.f32 %v1793, %v1763
      %v1795 = vadd.f32 %v1794, %v1764
      %v1796 = vadd.f32 %v1795, %v1765
      %v1797 = vadd.f32 %v1796, %v1766
      %v1798 = vadd.f32 %v1797, %v1767
      %v1799 = vadd.f32 %v1798, %v1768
      %v1800 = vadd.f32 %v1799, %v1769
      %v1801 = vadd.f32 %v1800, %v1770
      %v1802 = vadd.f32 %v1801, %v1771
      %v1803 = vadd.f32 %v1802, %v1772
      %v1804 = vadd.f32 %v1803, %v1773
      %v1805 = vadd.f32 %v1804, %v1774
      %v1806 = vadd.f32 %v1805, %v1775
      %v1807 = vadd.f32 %v1806, %v1776
      %v1808 = vadd.f32 %v1807, %v1777
      %v1809 = vadd.f32 %v1808, %v1778
      %v1810 = vadd.f32 %v1809, %v1779
      %v1811 = vadd.f32 %v1810, %v1780
      %v1812 = vadd.f32 %v1811, %v1781
      %v1813 = vadd.f32 %v1812, %v1782
      %v1814 = vadd.f32 %v1813, %v1783
      %v1815 = vadd.f32 %v1814, %v1784
      %v1816 = vadd.f32 %v1815, %v1785
      %v1817 = vadd.f32 %v1816, %v1786
      %v1818 = vadd.f32 %v1817, %v1787
      %v1819 = vadd.f32 %v1818, %v1788
      %v1820 = vadd.f32 %v1819, %v1789
      %v1821 = vadd.f32 %v1820, %v1790
      %v1822 = vrot.slane %v1821, 4
      %v1823 = vadd.f32 %v1821, %v1822
      %v1824 = vrot.slane %v1823, 2
      %v1825 = vadd.f32 %v1823, %v1824
      %v1826 = vrot.slane %v1825, 1
      %v1827 = vadd.f32 %v1825, %v1826
      %1828 = vst [vmem:[%s297] sm:$0x1] %v1827
      %p1829 = scmp.lt.s32.totalorder %s19, 1
      %s1830 = scalar_select %p1829, %s19, 1
      %s1831 = smul.addr %s1830, 32
      %s1832 = smul.addr %s1831, 8
      %s1833 = scalar_lea.vmem %s5, %s1832
      %p1834 = scmp.lt.s32.totalorder %s19, 1
      %s1835 = scalar_select %p1834, %s19, 1
      %s1836 = scalar_lea.vmem %s6, %s1835
      %p1837 = scmp.lt.s32.totalorder %s19, 1
      %s1838 = scalar_select %p1837, %s19, 1
      %s1839 = scalar_lea.vmem %s7, %s1838
      // Predicated region
      $region41: #{linear_bottleneck_forward.5} parent=39 // pred_check
        %p1840 = pneg %p147
      $region42: #{linear_bottleneck_forward.5} parent=39 // pred_check_branch
        %1842 = sbr.rel (%p1840) target = $region44
      $region43: #{linear_bottleneck_forward.5} parent=39 // pred_region
        _
      $region44: #{linear_bottleneck_forward.5} parent=39 // pred_fallthru
        _
      // Predicated region
      $region45: #{linear_bottleneck_forward.5} parent=39 // pred_check
        %p1843 = pneg %p173
      $region46: #{linear_bottleneck_forward.5} parent=39 // pred_check_branch
        %1845 = sbr.rel (%p1843) target = $region48
      $region47: #{linear_bottleneck_forward.5} parent=39 // pred_region
        _
      $region48: #{linear_bottleneck_forward.5} parent=39 // pred_fallthru
        _
      // Predicated region
      $region49: #{linear_bottleneck_forward.5} parent=39 // pred_check
        %p1846 = pneg %p199
      $region50: #{linear_bottleneck_forward.5} parent=39 // pred_check_branch
        %1848 = sbr.rel (%p1846) target = $region52
      $region51: #{linear_bottleneck_forward.5} parent=39 // pred_region
        _
      $region52: #{linear_bottleneck_forward.5} parent=39 // pred_fallthru
        _
    $region40: #{linear_bottleneck_forward.5} parent=5 // pred_fallthru
      _
    %p1849 = scmp.le.s32.totalorder 2, %s14
    // Predicated region
    $region53: #{linear_bottleneck_forward.5} parent=5 // pred_check
      %p1850 = pneg %p1849
    $region54: #{linear_bottleneck_forward.5} parent=5 // pred_check_branch
      %1852 = sbr.rel (%p1850) target = $region56
    $region55: #{linear_bottleneck_forward.5} parent=5 // pred_region
      %s1853 = ssub.s32 %s14, 2
      // Predicated region
      $region57: #{linear_bottleneck_forward.5} parent=55 // pred_check
        %p1854 = pneg %p153
      $region58: #{linear_bottleneck_forward.5} parent=55 // pred_check_branch
        %1856 = sbr.rel (%p1854) target = $region60
      $region59: #{linear_bottleneck_forward.5} parent=55 // pred_region
        %p1857 = scmp.lt.s32.totalorder %s20, 1
        %s1858 = scalar_select %p1857, %s20, 1
        %s1859 = smul.addr %s1858, 32
        %s1860 = smul.addr %s1859, 8
        %s1861 = scalar_lea.vmem %s5, %s1860
      $region60: #{linear_bottleneck_forward.5} parent=55 // pred_fallthru
        _
      // Predicated region
      $region61: #{linear_bottleneck_forward.5} parent=55 // pred_check
        %p1862 = pneg %p179
      $region62: #{linear_bottleneck_forward.5} parent=55 // pred_check_branch
        %1864 = sbr.rel (%p1862) target = $region64
      $region63: #{linear_bottleneck_forward.5} parent=55 // pred_region
        %p1865 = scmp.lt.s32.totalorder %s20, 1
        %s1866 = scalar_select %p1865, %s20, 1
        %s1867 = scalar_lea.vmem %s6, %s1866
      $region64: #{linear_bottleneck_forward.5} parent=55 // pred_fallthru
        _
      // Predicated region
      $region65: #{linear_bottleneck_forward.5} parent=55 // pred_check
        %p1868 = pneg %p205
      $region66: #{linear_bottleneck_forward.5} parent=55 // pred_check_branch
        %1870 = sbr.rel (%p1868) target = $region68
      $region67: #{linear_bottleneck_forward.5} parent=55 // pred_region
        %p1871 = scmp.lt.s32.totalorder %s20, 1
        %s1872 = scalar_select %p1871, %s20, 1
        %s1873 = scalar_lea.vmem %s7, %s1872
      $region68: #{linear_bottleneck_forward.5} parent=55 // pred_fallthru
        _
    $region56: #{linear_bottleneck_forward.5} parent=5 // pred_fallthru
      _
  $region6: #{linear_bottleneck_forward.5} parent=0 // loop_footer
    %s18 = sadd.s32 1, %s14
  $region7: #{linear_bottleneck_forward.5} parent=0 // loop_footer_branch
    %13 = sbr.rel target = $region3
  $region8: #{linear_bottleneck_forward.5} parent=0 // loop_exit
    _

</llo_original>
